<compile_context>
chip_gen: v7x
topology: tpu7x:2x2x1
jax: 0.10.0
libtpu: 0.0.40
codegen_flags: <defaults>
</compile_context>

<pallas_src>
import jax
import jax.numpy as jnp
import numpy as np
from jax.experimental import pallas as pl
from jax.experimental.pallas import tpu as pltpu

# ---------------------------------------------------------------- config ----
B = 2                     # batch size (protein/drug pairs)
L = 32                    # protein sequence length
CHAR_SET_LEN = 26         # 25 + 1
ONEHOT_W = 32             # token one-hot width, padded to a nice lane count
EMB_DIM = 128             # nn.Embedding(char_set_len, 128)
PROTEIN_DIM = 96          # CNNblcok conv3 out_channels
DRUG_DIM = 64             # GNN output dim
HIDDEN_DIM = 32
ATTN_DIM = 32             # divisible by num_heads = 4
NODES_PER_GRAPH = 6
N_NODES = B * NODES_PER_GRAPH
N_EDGES = 2 * (NODES_PER_GRAPH - 1) * B
NODE_FEAT = 4             # GNNEncoder input_dim
EDGE_FEAT = 3             # GNNEncoder edge_dim
CROSS_DIM = max(PROTEIN_DIM, DRUG_DIM) * 3          # 288
OUT_DIM = PROTEIN_DIM + DRUG_DIM + 1 + ATTN_DIM     # 193
CONV_KS = (4, 8, 12)
CONV_CS = (32, 64, PROTEIN_DIM)
RF = 1 + sum(k - 1 for k in CONV_KS)                # conv-stack receptive field = 22
L3 = L - (RF - 1)                                   # 11 valid positions / sequence

# Static guards for the batch-folded im2col: the per-sequence temporal max reads
# rows [b*L, b*L + L3) of the conv3 output, which must all be within-sequence
# windows and within the (B*L - (RF-1)) rows that exist.
assert L3 > 0, "protein length shorter than conv receptive field"
assert (B - 1) * L + L3 <= B * L - (RF - 1), \
    "temporal max would read cross-boundary im2col rows"


def _round8(n):
    return (n + 7) // 8 * 8


# ----------------------------------------------- packed parameter layout ----
# Everything (weights AND biases) lives in one (PACK_ROWS, 128) f32 buffer; each
# item starts at an 8-aligned row. Stored (rows, cols) are the shapes the kernel
# reads; zero padding (channels to 128, lane-aligned concat blocks) is baked in
# at pack time.
PACK_SPEC = [
    ("embed",  (32, 128)),                    # 26 valid rows
    ("c1_w",   (CONV_KS[0] * 128, 128)),      # im2col taps, in/out chans padded to 128
    ("c2_w",   (CONV_KS[1] * 128, 128)),
    ("c3_w",   (CONV_KS[2] * 128, 128)),
    ("g1_elw", (EDGE_FEAT, NODE_FEAT)),
    ("g1_w1",  (NODE_FEAT, HIDDEN_DIM)),
    ("g1_w2",  (HIDDEN_DIM, HIDDEN_DIM)),
    ("g2_elw", (EDGE_FEAT, HIDDEN_DIM)),
    ("g2_w1",  (HIDDEN_DIM, HIDDEN_DIM)),
    ("g2_w2",  (HIDDEN_DIM, 128)),            # drug dim padded 64 -> 128
    ("cr_w1",  (3 * 128, HIDDEN_DIM)),        # lane-aligned [prot|drug|prod] blocks
    ("cr_w2",  (HIDDEN_DIM, HIDDEN_DIM)),
    ("cr_w3",  (HIDDEN_DIM, 128)),            # out padded 1 -> 128 (col 0 valid)
    ("ad_w",   (128, ATTN_DIM)),              # drug rows padded 64 -> 128
    ("wv",     (ATTN_DIM, ATTN_DIM)),
    ("wo",     (ATTN_DIM, 128)),              # out padded 32 -> 128
    ("f1_w",   (4 * 128, OUT_DIM // 2)),      # lane-aligned [prot|drug|cross|attn]
    ("f2_w",   (OUT_DIM // 2, OUT_DIM // 4)),
    ("f3_w",   (OUT_DIM // 4, 128)),          # out padded 1 -> 128 (col 0 valid)
    # biases: one row each, 8-aligned; padded lanes are zero so ReLU keeps pads at 0
    ("c1_b", (1, 128)), ("c2_b", (1, 128)), ("c3_b", (1, 128)),
    ("g1_elb", (1, NODE_FEAT)), ("g1_b1", (1, HIDDEN_DIM)), ("g1_b2", (1, HIDDEN_DIM)),
    ("g2_elb", (1, HIDDEN_DIM)), ("g2_b1", (1, HIDDEN_DIM)), ("g2_b2", (1, 128)),
    ("cr_b1", (1, HIDDEN_DIM)), ("cr_b2", (1, HIDDEN_DIM)), ("cr_b3", (1, 128)),
    ("ad_b", (1, ATTN_DIM)), ("bv", (1, ATTN_DIM)), ("bo", (1, 128)),
    ("f1_b", (1, OUT_DIM // 2)), ("f2_b", (1, OUT_DIM // 4)), ("f3_b", (1, 128)),
]
PACK_OFFS, _row = {}, 0
for _name, (_r, _c) in PACK_SPEC:
    PACK_OFFS[_name] = (_row, (_r, _c))
    _row += _round8(_r)
PACK_ROWS = _row

# All per-call data packed into one (DATA_ROWS, 128) f32 buffer, 8-row aligned.
DATA_SPEC = [
    ("onehot",    (B * L, ONEHOT_W)),     # token one-hot (embedding gather on MXU)
    ("node_x",    (N_NODES, NODE_FEAT)),
    ("edge_attr", (N_EDGES, EDGE_FEAT)),
    ("gsrc",      (N_EDGES, N_NODES)),    # one-hot of edge_index[0]  (x_j gather)
    ("scat",      (N_NODES, N_EDGES)),    # one-hot^T of edge_index[1] (sum scatter)
    ("pool",      (B, N_NODES)),          # global mean pool matrix
]
DATA_OFFS, _row = {}, 0
for _name, (_r, _c) in DATA_SPEC:
    DATA_OFFS[_name] = (_row, (_r, _c))
    _row += _round8(_r)
DATA_ROWS = _row


def pack_params(p):
    """One-time host-side packing of all weights/biases (outside jit)."""
    w = np.zeros((PACK_ROWS, 128), np.float32)

    def put(name, arr, row_off=0):
        arr = np.asarray(arr, np.float32)
        if arr.ndim == 1:
            arr = arr.reshape(1, -1)
        r0 = PACK_OFFS[name][0]
        w[r0 + row_off:r0 + row_off + arr.shape[0], :arr.shape[1]] = arr

    put("embed", p["embed"])
    put("c1_w", p["c1_w"])                                    # (4*128, 32) -> cols 0..31
    for i in range(CONV_KS[1]):                               # conv2 taps: 32-row chunks
        put("c2_w", p["c2_w"][i * CONV_CS[0]:(i + 1) * CONV_CS[0]], row_off=i * 128)
    for i in range(CONV_KS[2]):                               # conv3 taps: 64-row chunks
        put("c3_w", p["c3_w"][i * CONV_CS[1]:(i + 1) * CONV_CS[1]], row_off=i * 128)
    for n in ("g1_elw", "g1_w1", "g1_w2", "g2_elw", "g2_w1", "g2_w2",
              "cr_w2", "cr_w3", "ad_w", "wv", "wo", "f2_w", "f3_w"):
        put(n, p[n])
    for i in range(3):                     # cross_in blocks [prot | drug | prot*drug]
        put("cr_w1", p["cr_w1"][i * PROTEIN_DIM:(i + 1) * PROTEIN_DIM], row_off=i * 128)
    # comb blocks [prot | drug | cross | attn] at 128-lane-aligned row offsets
    put("f1_w", p["f1_w"][:PROTEIN_DIM], row_off=0)
    put("f1_w", p["f1_w"][PROTEIN_DIM:PROTEIN_DIM + DRUG_DIM], row_off=128)
    put("f1_w", p["f1_w"][PROTEIN_DIM + DRUG_DIM:PROTEIN_DIM + DRUG_DIM + 1], row_off=256)
    put("f1_w", p["f1_w"][PROTEIN_DIM + DRUG_DIM + 1:OUT_DIM], row_off=384)
    for n in ("c1_b", "c2_b", "c3_b", "g1_elb", "g1_b1", "g1_b2",
              "g2_elb", "g2_b1", "g2_b2", "cr_b1", "cr_b2", "cr_b3",
              "ad_b", "bv", "bo", "f1_b", "f2_b", "f3_b"):
        put(n, p[n])
    return jnp.asarray(w)


# ---------------------------------------------------------- fused kernel ----
def _fused_kernel(dpack_ref, wpack_ref, o_ref):
    f32 = jnp.float32

    def P(name):
        r0, (r, c) = PACK_OFFS[name]
        return wpack_ref[r0:r0 + r, :c]

    def D(name):
        r0, (r, c) = DATA_OFFS[name]
        return dpack_ref[r0:r0 + r, :c]

    def mm(a, b):
        return jnp.dot(a, b, preferred_element_type=jnp.float32)

    # ---- protein CNN encoder: embedding gather as one-hot matmul ----
    x = mm(D("onehot"), P("embed"))                          # (B*L, 128)

    # Conv1d (valid padding) via im2col, batch folded into the M dim. Channels
    # are zero-padded to 128 so every tap chunk is one full lane tile (no XLU
    # lane shifts). Cross-boundary rows are garbage but are never read by any
    # valid row nor by the per-sequence temporal max (static asserts above).
    def conv_relu(h, k, w_name, b_name):
        m = h.shape[0] - (k - 1)
        u = jnp.concatenate([h[i:i + m, :] for i in range(k)], axis=1)
        # TODO(synk): on v7x, per-tap MXU accumulation (MRB in-place) would skip
        # the (m, k*128) slab entirely; lane-aligned concat is better on v5e/v6e.
        return jnp.maximum(mm(u, P(w_name)) + P(b_name), 0.0)

    h = conv_relu(x, CONV_KS[0], "c1_w", "c1_b")             # (B*L-3,  128)
    h = conv_relu(h, CONV_KS[1], "c2_w", "c2_b")             # (B*L-10, 128)
    h = conv_relu(h, CONV_KS[2], "c3_w", "c3_b")             # (B*L-21, 128)
    # torch.max(v, -1): max over the L3 valid positions of each sequence
    prot = jnp.concatenate(
        [jnp.max(h[b * L:b * L + L3, :], axis=0, keepdims=True) for b in range(B)],
        axis=0)                                              # (B, 128); cols 96.. == 0

    # ---- drug GNN encoder: two GINEConv layers (eps=0) + global mean pool ----
    nx, ea = D("node_x"), D("edge_attr")
    gsrc, scat = D("gsrc"), D("scat")

    def gine(hin, elw, elb, w1, b1, w2, b2):
        eproj = mm(ea, P(elw)) + P(elb)
        msg = jnp.maximum(mm(gsrc, hin) + eproj, 0.0)        # ReLU(x_j + lin(e))
        z = hin + mm(scat, msg)                              # (1+eps)*x_i + sum, eps=0
        z = jnp.maximum(mm(z, P(w1)) + P(b1), 0.0)           # nn: Lin, ReLU, Lin
        return mm(z, P(w2)) + P(b2)

    g = jnp.maximum(gine(nx, "g1_elw", "g1_elb", "g1_w1", "g1_b1",
                         "g1_w2", "g1_b2"), 0.0)
    g = jnp.maximum(gine(g, "g2_elw", "g2_elb", "g2_w1", "g2_b1",
                         "g2_w2", "g2_b2"), 0.0)             # (N, 128); cols 64.. == 0
    drug = mm(D("pool"), g)                                  # (B, 128); cols 64.. == 0

    # ---- CrossLayer: drug zero-padded (cols 64.. already 0); lane-aligned concat;
    # padded rows of cr_w1 are zero, so the result matches the 288-wide reference.
    cross_in = jnp.concatenate([prot, drug, prot * drug], axis=1)       # (B, 384)
    cx = jnp.maximum(mm(cross_in, P("cr_w1")) + P("cr_b1"), 0.0)
    cx = jnp.maximum(mm(cx, P("cr_w2")) + P("cr_b2"), 0.0)
    cross_blk = mm(cx, P("cr_w3")) + P("cr_b3")              # (B, 128); col 0 = cross

    # ---- CrossAttentionLayer: attention(query=protein_proj, key=value=drug_proj)
    # with length-1 key/value sequences => softmax == 1, so
    # attn_out = out_proj(v_proj(drug_proj)); q/k/protein_proj cannot affect it.
    dp = mm(drug, P("ad_w")) + P("ad_b")                     # drug_proj (B, 32)
    v = mm(dp, P("wv")) + P("bv")                            # value proj (B, 32)
    attn_blk = mm(v, P("wo")) + P("bo")                      # (B, 128); cols 0..31

    # ---- final MLP (dropouts are eval-mode identities); lane-aligned comb ----
    comb = jnp.concatenate([prot, drug, cross_blk, attn_blk], axis=1)   # (B, 512)
    z = jnp.maximum(mm(comb, P("f1_w")) + P("f1_b"), 0.0)
    z = jnp.maximum(mm(z, P("f2_w")) + P("f2_b"), 0.0)
    res = mm(z, P("f3_w")) + P("f3_b")                       # (B, 128); col 0 = output
    o_ref[...] = jnp.concatenate(
        [res, jnp.zeros((8 - B, 128), f32)], axis=0)         # lane-dense (8,128) store


# --------------------------------------------------------------- wrapper ----
def build_dpack(protein_seq, node_x, edge_attr, gsrc, scat, pool):
    onehot = jax.nn.one_hot(protein_seq.reshape(-1), ONEHOT_W, dtype=jnp.float32)
    vals = {"onehot": onehot, "node_x": node_x, "edge_attr": edge_attr,
            "gsrc": gsrc, "scat": scat, "pool": pool}
    d = jnp.zeros((DATA_ROWS, 128), jnp.float32)
    for name, (r0, (r, c)) in DATA_OFFS.items():
        d = d.at[r0:r0 + r, :c].set(vals[name])
    return d


def affinity_forward(wpack, protein_seq, node_x, edge_attr, gsrc, scat, pool):
    dpack = build_dpack(protein_seq, node_x, edge_attr, gsrc, scat, pool)
    out = pl.pallas_call(
        _fused_kernel,
        out_shape=jax.ShapeDtypeStruct((8, 128), jnp.float32),
        in_specs=[pl.BlockSpec(memory_space=pltpu.MemorySpace.VMEM)] * 2,
        out_specs=pl.BlockSpec(memory_space=pltpu.MemorySpace.VMEM),
    )(dpack, wpack)
    # TODO(synk): for real throughput, batch many pairs per call and add a
    # ("parallel",) grid over the batch axis (weights pinned with constant
    # index_maps); at B=2 launch/DMA overhead dominates so grid=() stays best.
    return jnp.squeeze(out[:B, 0])                           # matches torch .squeeze()


# ------------------------------------------------------------ parameters ----
def make_params(key):
    keys = iter(jax.random.split(key, 48))

    def init(shape, scale=0.1):
        return scale * jax.random.normal(next(keys), shape, dtype=jnp.float32)

    p = {}
    p["embed"] = init((CHAR_SET_LEN, EMB_DIM))
    # CNNblcok — conv weights pre-flattened for im2col: (K*C_in, C_out)
    p["c1_w"] = init((CONV_KS[0] * EMB_DIM, CONV_CS[0]));    p["c1_b"] = init((CONV_CS[0],))
    p["c2_w"] = init((CONV_KS[1] * CONV_CS[0], CONV_CS[1])); p["c2_b"] = init((CONV_CS[1],))
    p["c3_w"] = init((CONV_KS[2] * CONV_CS[1], CONV_CS[2])); p["c3_b"] = init((CONV_CS[2],))
    # GNNEncoder conv1: GINEConv edge lin(3->4); nn: 4->hid->hid
    p["g1_elw"] = init((EDGE_FEAT, NODE_FEAT));   p["g1_elb"] = init((NODE_FEAT,))
    p["g1_w1"] = init((NODE_FEAT, HIDDEN_DIM));   p["g1_b1"] = init((HIDDEN_DIM,))
    p["g1_w2"] = init((HIDDEN_DIM, HIDDEN_DIM));  p["g1_b2"] = init((HIDDEN_DIM,))
    # GNNEncoder conv2: edge lin(3->hid); nn: hid->hid->drug_dim
    p["g2_elw"] = init((EDGE_FEAT, HIDDEN_DIM));  p["g2_elb"] = init((HIDDEN_DIM,))
    p["g2_w1"] = init((HIDDEN_DIM, HIDDEN_DIM));  p["g2_b1"] = init((HIDDEN_DIM,))
    p["g2_w2"] = init((HIDDEN_DIM, DRUG_DIM));    p["g2_b2"] = init((DRUG_DIM,))
    # CrossLayer
    p["cr_w1"] = init((CROSS_DIM, HIDDEN_DIM));   p["cr_b1"] = init((HIDDEN_DIM,))
    p["cr_w2"] = init((HIDDEN_DIM, HIDDEN_DIM));  p["cr_b2"] = init((HIDDEN_DIM,))
    p["cr_w3"] = init((HIDDEN_DIM, 1));           p["cr_b3"] = init((1,))
    # CrossAttentionLayer — only drug_proj, v-proj and out_proj affect the output
    # (length-1 key/value axis => softmax == 1); protein_proj / q / k are omitted.
    p["ad_w"] = init((DRUG_DIM, ATTN_DIM));       p["ad_b"] = init((ATTN_DIM,))
    p["wv"] = init((ATTN_DIM, ATTN_DIM));         p["bv"] = init((ATTN_DIM,))
    p["wo"] = init((ATTN_DIM, ATTN_DIM));         p["bo"] = init((ATTN_DIM,))
    # final MLP
    p["f1_w"] = init((OUT_DIM, OUT_DIM // 2));        p["f1_b"] = init((OUT_DIM // 2,))
    p["f2_w"] = init((OUT_DIM // 2, OUT_DIM // 4));   p["f2_b"] = init((OUT_DIM // 4,))
    p["f3_w"] = init((OUT_DIM // 4, 1));              p["f3_b"] = init((1,))
    return p


# ----------------------------------------------------------------- main -----
if __name__ == "__main__":
    key = jax.random.PRNGKey(0)
    k_param, k_seq, k_node, k_edge = jax.random.split(key, 4)
    params = make_params(k_param)
    wpack = pack_params(params)               # one-time packing, outside jit

    # protein token sequence (B, L) in [0, char_set_len)
    protein_seq = jax.random.randint(k_seq, (B, L), 0, CHAR_SET_LEN, dtype=jnp.int32)

    # synthetic drug graph: B disjoint bidirectional chains of NODES_PER_GRAPH nodes
    src, dst = [], []
    for g in range(B):
        base = g * NODES_PER_GRAPH
        for i in range(NODES_PER_GRAPH - 1):
            src += [base + i, base + i + 1]
            dst += [base + i + 1, base + i]
    edge_index = jnp.array([src, dst], dtype=jnp.int32)            # (2, E)
    assert edge_index.shape[1] == N_EDGES
    node_x = jax.random.normal(k_node, (N_NODES, NODE_FEAT), dtype=jnp.float32)
    edge_attr = jax.random.normal(k_edge, (N_EDGES, EDGE_FEAT), dtype=jnp.float32)
    batch_vec = jnp.repeat(jnp.arange(B, dtype=jnp.int32), NODES_PER_GRAPH)

    # dense one-hot gather/scatter & mean-pool matrices (graph structure, host-built)
    gsrc = jax.nn.one_hot(edge_index[0], N_NODES, dtype=jnp.float32)      # (E, N)
    scat = jax.nn.one_hot(edge_index[1], N_NODES, dtype=jnp.float32).T    # (N, E)
    pool_1h = jax.nn.one_hot(batch_vec, B, dtype=jnp.float32).T           # (B, N)
    pool = pool_1h / jnp.sum(pool_1h, axis=1, keepdims=True)              # mean pool

    fwd = jax.jit(affinity_forward)
    out = fwd(wpack, protein_seq, node_x, edge_attr, gsrc, scat, pool)
    out = jax.block_until_ready(out)
    assert out.shape == (B,), out.shape
    assert jnp.all(jnp.isfinite(out))
    print("KERNEL_OK")
</pallas_src>

<mosaic_0001>
module attributes {stable_mosaic.version = 11 : i64} {
  func.func @_fused_kernel(%arg0: memref<152x128xf32, #tpu.memory_space<vmem>>, %arg1: memref<4664x128xf32, #tpu.memory_space<vmem>>, %arg2: memref<8x128xf32, #tpu.memory_space<vmem>>) attributes {dimension_semantics = [], scalar_prefetch = 0 : i64, scratch_operands = 0 : i64, tpu.core_type = #tpu.core_type<tc>} {
    %c0 = arith.constant 0 : index
    %c0_0 = arith.constant 0 : index
    %0 = vector.load %arg0[%c0, %c0_0] : memref<152x128xf32, #tpu.memory_space<vmem>>, vector<64x32xf32>
    %c0_1 = arith.constant 0 : index
    %c0_2 = arith.constant 0 : index
    %1 = vector.load %arg1[%c0_1, %c0_2] : memref<4664x128xf32, #tpu.memory_space<vmem>>, vector<32x128xf32>
    %cst = arith.constant dense<0.000000e+00> : vector<64x128xf32>
    %2 = tpu.matmul %0, %1, %cst {dimension_numbers = #tpu.dot_dimension_numbers<[1], [0], [0], [1], [0, 0, 1, 1], [], []>} : vector<64x32xf32>, vector<32x128xf32>, vector<64x128xf32> -> vector<64x128xf32>
    %3 = vector.extract_strided_slice %2 {offsets = [0, 0], sizes = [61, 128], strides = [1, 1]} : vector<64x128xf32> to vector<61x128xf32>
    %4 = vector.extract_strided_slice %2 {offsets = [1, 0], sizes = [61, 128], strides = [1, 1]} : vector<64x128xf32> to vector<61x128xf32>
    %5 = vector.extract_strided_slice %2 {offsets = [2, 0], sizes = [61, 128], strides = [1, 1]} : vector<64x128xf32> to vector<61x128xf32>
    %6 = vector.extract_strided_slice %2 {offsets = [3, 0], sizes = [61, 128], strides = [1, 1]} : vector<64x128xf32> to vector<61x128xf32>
    %7 = tpu.concatenate %3, %4, %5, %6 in 1 : vector<61x128xf32>, vector<61x128xf32>, vector<61x128xf32>, vector<61x128xf32> -> vector<61x512xf32>
    %c32 = arith.constant 32 : index
    %c0_3 = arith.constant 0 : index
    %8 = vector.load %arg1[%c32, %c0_3] : memref<4664x128xf32, #tpu.memory_space<vmem>>, vector<512x128xf32>
    %cst_4 = arith.constant dense<0.000000e+00> : vector<61x128xf32>
    %9 = tpu.matmul %7, %8, %cst_4 {dimension_numbers = #tpu.dot_dimension_numbers<[1], [0], [0], [1], [0, 0, 1, 1], [], []>} : vector<61x512xf32>, vector<512x128xf32>, vector<61x128xf32> -> vector<61x128xf32>
    %c4520 = arith.constant 4520 : index
    %c0_5 = arith.constant 0 : index
    %10 = vector.load %arg1[%c4520, %c0_5] : memref<4664x128xf32, #tpu.memory_space<vmem>>, vector<1x128xf32>
    %11 = vector.broadcast %10 : vector<1x128xf32> to vector<61x128xf32>
    %12 = arith.addf %9, %11 : vector<61x128xf32>
    %cst_6 = arith.constant 0.000000e+00 : f32
    %13 = vector.broadcast %cst_6 : f32 to vector<61x128xf32>
    %14 = arith.maximumf %12, %13 : vector<61x128xf32>
    %15 = vector.extract_strided_slice %14 {offsets = [0, 0], sizes = [54, 128], strides = [1, 1]} : vector<61x128xf32> to vector<54x128xf32>
    %16 = vector.extract_strided_slice %14 {offsets = [1, 0], sizes = [54, 128], strides = [1, 1]} : vector<61x128xf32> to vector<54x128xf32>
    %17 = vector.extract_strided_slice %14 {offsets = [2, 0], sizes = [54, 128], strides = [1, 1]} : vector<61x128xf32> to vector<54x128xf32>
    %18 = vector.extract_strided_slice %14 {offsets = [3, 0], sizes = [54, 128], strides = [1, 1]} : vector<61x128xf32> to vector<54x128xf32>
    %19 = vector.extract_strided_slice %14 {offsets = [4, 0], sizes = [54, 128], strides = [1, 1]} : vector<61x128xf32> to vector<54x128xf32>
    %20 = vector.extract_strided_slice %14 {offsets = [5, 0], sizes = [54, 128], strides = [1, 1]} : vector<61x128xf32> to vector<54x128xf32>
    %21 = vector.extract_strided_slice %14 {offsets = [6, 0], sizes = [54, 128], strides = [1, 1]} : vector<61x128xf32> to vector<54x128xf32>
    %22 = vector.extract_strided_slice %14 {offsets = [7, 0], sizes = [54, 128], strides = [1, 1]} : vector<61x128xf32> to vector<54x128xf32>
    %23 = tpu.concatenate %15, %16, %17, %18, %19, %20, %21, %22 in 1 : vector<54x128xf32>, vector<54x128xf32>, vector<54x128xf32>, vector<54x128xf32>, vector<54x128xf32>, vector<54x128xf32>, vector<54x128xf32>, vector<54x128xf32> -> vector<54x1024xf32>
    %c544 = arith.constant 544 : index
    %c0_7 = arith.constant 0 : index
    %24 = vector.load %arg1[%c544, %c0_7] : memref<4664x128xf32, #tpu.memory_space<vmem>>, vector<1024x128xf32>
    %cst_8 = arith.constant dense<0.000000e+00> : vector<54x128xf32>
    %25 = tpu.matmul %23, %24, %cst_8 {dimension_numbers = #tpu.dot_dimension_numbers<[1], [0], [0], [1], [0, 0, 1, 1], [], []>} : vector<54x1024xf32>, vector<1024x128xf32>, vector<54x128xf32> -> vector<54x128xf32>
    %c4528 = arith.constant 4528 : index
    %c0_9 = arith.constant 0 : index
    %26 = vector.load %arg1[%c4528, %c0_9] : memref<4664x128xf32, #tpu.memory_space<vmem>>, vector<1x128xf32>
    %27 = vector.broadcast %26 : vector<1x128xf32> to vector<54x128xf32>
    %28 = arith.addf %25, %27 : vector<54x128xf32>
    %cst_10 = arith.constant 0.000000e+00 : f32
    %29 = vector.broadcast %cst_10 : f32 to vector<54x128xf32>
    %30 = arith.maximumf %28, %29 : vector<54x128xf32>
    %31 = vector.extract_strided_slice %30 {offsets = [0, 0], sizes = [43, 128], strides = [1, 1]} : vector<54x128xf32> to vector<43x128xf32>
    %32 = vector.extract_strided_slice %30 {offsets = [1, 0], sizes = [43, 128], strides = [1, 1]} : vector<54x128xf32> to vector<43x128xf32>
    %33 = vector.extract_strided_slice %30 {offsets = [2, 0], sizes = [43, 128], strides = [1, 1]} : vector<54x128xf32> to vector<43x128xf32>
    %34 = vector.extract_strided_slice %30 {offsets = [3, 0], sizes = [43, 128], strides = [1, 1]} : vector<54x128xf32> to vector<43x128xf32>
    %35 = vector.extract_strided_slice %30 {offsets = [4, 0], sizes = [43, 128], strides = [1, 1]} : vector<54x128xf32> to vector<43x128xf32>
    %36 = vector.extract_strided_slice %30 {offsets = [5, 0], sizes = [43, 128], strides = [1, 1]} : vector<54x128xf32> to vector<43x128xf32>
    %37 = vector.extract_strided_slice %30 {offsets = [6, 0], sizes = [43, 128], strides = [1, 1]} : vector<54x128xf32> to vector<43x128xf32>
    %38 = vector.extract_strided_slice %30 {offsets = [7, 0], sizes = [43, 128], strides = [1, 1]} : vector<54x128xf32> to vector<43x128xf32>
    %39 = vector.extract_strided_slice %30 {offsets = [8, 0], sizes = [43, 128], strides = [1, 1]} : vector<54x128xf32> to vector<43x128xf32>
    %40 = vector.extract_strided_slice %30 {offsets = [9, 0], sizes = [43, 128], strides = [1, 1]} : vector<54x128xf32> to vector<43x128xf32>
    %41 = vector.extract_strided_slice %30 {offsets = [10, 0], sizes = [43, 128], strides = [1, 1]} : vector<54x128xf32> to vector<43x128xf32>
    %42 = vector.extract_strided_slice %30 {offsets = [11, 0], sizes = [43, 128], strides = [1, 1]} : vector<54x128xf32> to vector<43x128xf32>
    %43 = tpu.concatenate %31, %32, %33, %34, %35, %36, %37, %38, %39, %40, %41, %42 in 1 : vector<43x128xf32>, vector<43x128xf32>, vector<43x128xf32>, vector<43x128xf32>, vector<43x128xf32>, vector<43x128xf32>, vector<43x128xf32>, vector<43x128xf32>, vector<43x128xf32>, vector<43x128xf32>, vector<43x128xf32>, vector<43x128xf32> -> vector<43x1536xf32>
    %c1568 = arith.constant 1568 : index
    %c0_11 = arith.constant 0 : index
    %44 = vector.load %arg1[%c1568, %c0_11] : memref<4664x128xf32, #tpu.memory_space<vmem>>, vector<1536x128xf32>
    %cst_12 = arith.constant dense<0.000000e+00> : vector<43x128xf32>
    %45 = tpu.matmul %43, %44, %cst_12 {dimension_numbers = #tpu.dot_dimension_numbers<[1], [0], [0], [1], [0, 0, 1, 1], [], []>} : vector<43x1536xf32>, vector<1536x128xf32>, vector<43x128xf32> -> vector<43x128xf32>
    %c4536 = arith.constant 4536 : index
    %c0_13 = arith.constant 0 : index
    %46 = vector.load %arg1[%c4536, %c0_13] : memref<4664x128xf32, #tpu.memory_space<vmem>>, vector<1x128xf32>
    %47 = vector.broadcast %46 : vector<1x128xf32> to vector<43x128xf32>
    %48 = arith.addf %45, %47 : vector<43x128xf32>
    %cst_14 = arith.constant 0.000000e+00 : f32
    %49 = vector.broadcast %cst_14 : f32 to vector<43x128xf32>
    %50 = arith.maximumf %48, %49 : vector<43x128xf32>
    %51 = vector.extract_strided_slice %50 {offsets = [0, 0], sizes = [11, 128], strides = [1, 1]} : vector<43x128xf32> to vector<11x128xf32>
    %cst_15 = arith.constant dense<0xFF800000> : vector<128xf32>
    %52 = vector.multi_reduction <maximumf>, %51, %cst_15 [0] : vector<11x128xf32> to vector<128xf32>
    %53 = vector.shape_cast %52 : vector<128xf32> to vector<1x128xf32>
    %54 = vector.extract_strided_slice %50 {offsets = [32, 0], sizes = [11, 128], strides = [1, 1]} : vector<43x128xf32> to vector<11x128xf32>
    %cst_16 = arith.constant dense<0xFF800000> : vector<128xf32>
    %55 = vector.multi_reduction <maximumf>, %54, %cst_16 [0] : vector<11x128xf32> to vector<128xf32>
    %56 = vector.shape_cast %55 : vector<128xf32> to vector<1x128xf32>
    %57 = tpu.concatenate %53, %56 in 0 : vector<1x128xf32>, vector<1x128xf32> -> vector<2x128xf32>
    %c64 = arith.constant 64 : index
    %c0_17 = arith.constant 0 : index
    %58 = vector.load %arg0[%c64, %c0_17] : memref<152x128xf32, #tpu.memory_space<vmem>>, vector<12x4xf32>
    %c80 = arith.constant 80 : index
    %c0_18 = arith.constant 0 : index
    %59 = vector.load %arg0[%c80, %c0_18] : memref<152x128xf32, #tpu.memory_space<vmem>>, vector<20x3xf32>
    %c104 = arith.constant 104 : index
    %c0_19 = arith.constant 0 : index
    %60 = vector.load %arg0[%c104, %c0_19] : memref<152x128xf32, #tpu.memory_space<vmem>>, vector<20x12xf32>
    %c128 = arith.constant 128 : index
    %c0_20 = arith.constant 0 : index
    %61 = vector.load %arg0[%c128, %c0_20] : memref<152x128xf32, #tpu.memory_space<vmem>>, vector<12x20xf32>
    %c3104 = arith.constant 3104 : index
    %c0_21 = arith.constant 0 : index
    %62 = vector.load %arg1[%c3104, %c0_21] : memref<4664x128xf32, #tpu.memory_space<vmem>>, vector<3x4xf32>
    %cst_22 = arith.constant dense<0.000000e+00> : vector<20x4xf32>
    %63 = tpu.matmul %59, %62, %cst_22 {dimension_numbers = #tpu.dot_dimension_numbers<[1], [0], [0], [1], [0, 0, 1, 1], [], []>} : vector<20x3xf32>, vector<3x4xf32>, vector<20x4xf32> -> vector<20x4xf32>
    %c4544 = arith.constant 4544 : index
    %c0_23 = arith.constant 0 : index
    %64 = vector.load %arg1[%c4544, %c0_23] : memref<4664x128xf32, #tpu.memory_space<vmem>>, vector<1x4xf32>
    %65 = vector.broadcast %64 : vector<1x4xf32> to vector<20x4xf32>
    %66 = arith.addf %63, %65 : vector<20x4xf32>
    %cst_24 = arith.constant dense<0.000000e+00> : vector<20x4xf32>
    %67 = tpu.matmul %60, %58, %cst_24 {dimension_numbers = #tpu.dot_dimension_numbers<[1], [0], [0], [1], [0, 0, 1, 1], [], []>} : vector<20x12xf32>, vector<12x4xf32>, vector<20x4xf32> -> vector<20x4xf32>
    %68 = arith.addf %67, %66 : vector<20x4xf32>
    %cst_25 = arith.constant 0.000000e+00 : f32
    %69 = vector.broadcast %cst_25 : f32 to vector<20x4xf32>
    %70 = arith.maximumf %68, %69 : vector<20x4xf32>
    %cst_26 = arith.constant dense<0.000000e+00> : vector<12x4xf32>
    %71 = tpu.matmul %61, %70, %cst_26 {dimension_numbers = #tpu.dot_dimension_numbers<[1], [0], [0], [1], [0, 0, 1, 1], [], []>} : vector<12x20xf32>, vector<20x4xf32>, vector<12x4xf32> -> vector<12x4xf32>
    %72 = arith.addf %58, %71 : vector<12x4xf32>
    %c3112 = arith.constant 3112 : index
    %c0_27 = arith.constant 0 : index
    %73 = vector.load %arg1[%c3112, %c0_27] : memref<4664x128xf32, #tpu.memory_space<vmem>>, vector<4x32xf32>
    %cst_28 = arith.constant dense<0.000000e+00> : vector<12x32xf32>
    %74 = tpu.matmul %72, %73, %cst_28 {dimension_numbers = #tpu.dot_dimension_numbers<[1], [0], [0], [1], [0, 0, 1, 1], [], []>} : vector<12x4xf32>, vector<4x32xf32>, vector<12x32xf32> -> vector<12x32xf32>
    %c4552 = arith.constant 4552 : index
    %c0_29 = arith.constant 0 : index
    %75 = vector.load %arg1[%c4552, %c0_29] : memref<4664x128xf32, #tpu.memory_space<vmem>>, vector<1x32xf32>
    %76 = vector.broadcast %75 : vector<1x32xf32> to vector<12x32xf32>
    %77 = arith.addf %74, %76 : vector<12x32xf32>
    %cst_30 = arith.constant 0.000000e+00 : f32
    %78 = vector.broadcast %cst_30 : f32 to vector<12x32xf32>
    %79 = arith.maximumf %77, %78 : vector<12x32xf32>
    %c3120 = arith.constant 3120 : index
    %c0_31 = arith.constant 0 : index
    %80 = vector.load %arg1[%c3120, %c0_31] : memref<4664x128xf32, #tpu.memory_space<vmem>>, vector<32x32xf32>
    %cst_32 = arith.constant dense<0.000000e+00> : vector<12x32xf32>
    %81 = tpu.matmul %79, %80, %cst_32 {dimension_numbers = #tpu.dot_dimension_numbers<[1], [0], [0], [1], [0, 0, 1, 1], [], []>} : vector<12x32xf32>, vector<32x32xf32>, vector<12x32xf32> -> vector<12x32xf32>
    %c4560 = arith.constant 4560 : index
    %c0_33 = arith.constant 0 : index
    %82 = vector.load %arg1[%c4560, %c0_33] : memref<4664x128xf32, #tpu.memory_space<vmem>>, vector<1x32xf32>
    %83 = vector.broadcast %82 : vector<1x32xf32> to vector<12x32xf32>
    %84 = arith.addf %81, %83 : vector<12x32xf32>
    %cst_34 = arith.constant 0.000000e+00 : f32
    %85 = vector.broadcast %cst_34 : f32 to vector<12x32xf32>
    %86 = arith.maximumf %84, %85 : vector<12x32xf32>
    %c3152 = arith.constant 3152 : index
    %c0_35 = arith.constant 0 : index
    %87 = vector.load %arg1[%c3152, %c0_35] : memref<4664x128xf32, #tpu.memory_space<vmem>>, vector<3x32xf32>
    %cst_36 = arith.constant dense<0.000000e+00> : vector<20x32xf32>
    %88 = tpu.matmul %59, %87, %cst_36 {dimension_numbers = #tpu.dot_dimension_numbers<[1], [0], [0], [1], [0, 0, 1, 1], [], []>} : vector<20x3xf32>, vector<3x32xf32>, vector<20x32xf32> -> vector<20x32xf32>
    %c4568 = arith.constant 4568 : index
    %c0_37 = arith.constant 0 : index
    %89 = vector.load %arg1[%c4568, %c0_37] : memref<4664x128xf32, #tpu.memory_space<vmem>>, vector<1x32xf32>
    %90 = vector.broadcast %89 : vector<1x32xf32> to vector<20x32xf32>
    %91 = arith.addf %88, %90 : vector<20x32xf32>
    %cst_38 = arith.constant dense<0.000000e+00> : vector<20x32xf32>
    %92 = tpu.matmul %60, %86, %cst_38 {dimension_numbers = #tpu.dot_dimension_numbers<[1], [0], [0], [1], [0, 0, 1, 1], [], []>} : vector<20x12xf32>, vector<12x32xf32>, vector<20x32xf32> -> vector<20x32xf32>
    %93 = arith.addf %92, %91 : vector<20x32xf32>
    %cst_39 = arith.constant 0.000000e+00 : f32
    %94 = vector.broadcast %cst_39 : f32 to vector<20x32xf32>
    %95 = arith.maximumf %93, %94 : vector<20x32xf32>
    %cst_40 = arith.constant dense<0.000000e+00> : vector<12x32xf32>
    %96 = tpu.matmul %61, %95, %cst_40 {dimension_numbers = #tpu.dot_dimension_numbers<[1], [0], [0], [1], [0, 0, 1, 1], [], []>} : vector<12x20xf32>, vector<20x32xf32>, vector<12x32xf32> -> vector<12x32xf32>
    %97 = arith.addf %86, %96 : vector<12x32xf32>
    %c3160 = arith.constant 3160 : index
    %c0_41 = arith.constant 0 : index
    %98 = vector.load %arg1[%c3160, %c0_41] : memref<4664x128xf32, #tpu.memory_space<vmem>>, vector<32x32xf32>
    %cst_42 = arith.constant dense<0.000000e+00> : vector<12x32xf32>
    %99 = tpu.matmul %97, %98, %cst_42 {dimension_numbers = #tpu.dot_dimension_numbers<[1], [0], [0], [1], [0, 0, 1, 1], [], []>} : vector<12x32xf32>, vector<32x32xf32>, vector<12x32xf32> -> vector<12x32xf32>
    %c4576 = arith.constant 4576 : index
    %c0_43 = arith.constant 0 : index
    %100 = vector.load %arg1[%c4576, %c0_43] : memref<4664x128xf32, #tpu.memory_space<vmem>>, vector<1x32xf32>
    %101 = vector.broadcast %100 : vector<1x32xf32> to vector<12x32xf32>
    %102 = arith.addf %99, %101 : vector<12x32xf32>
    %cst_44 = arith.constant 0.000000e+00 : f32
    %103 = vector.broadcast %cst_44 : f32 to vector<12x32xf32>
    %104 = arith.maximumf %102, %103 : vector<12x32xf32>
    %c3192 = arith.constant 3192 : index
    %c0_45 = arith.constant 0 : index
    %105 = vector.load %arg1[%c3192, %c0_45] : memref<4664x128xf32, #tpu.memory_space<vmem>>, vector<32x128xf32>
    %cst_46 = arith.constant dense<0.000000e+00> : vector<12x128xf32>
    %106 = tpu.matmul %104, %105, %cst_46 {dimension_numbers = #tpu.dot_dimension_numbers<[1], [0], [0], [1], [0, 0, 1, 1], [], []>} : vector<12x32xf32>, vector<32x128xf32>, vector<12x128xf32> -> vector<12x128xf32>
    %c4584 = arith.constant 4584 : index
    %c0_47 = arith.constant 0 : index
    %107 = vector.load %arg1[%c4584, %c0_47] : memref<4664x128xf32, #tpu.memory_space<vmem>>, vector<1x128xf32>
    %108 = vector.broadcast %107 : vector<1x128xf32> to vector<12x128xf32>
    %109 = arith.addf %106, %108 : vector<12x128xf32>
    %cst_48 = arith.constant 0.000000e+00 : f32
    %110 = vector.broadcast %cst_48 : f32 to vector<12x128xf32>
    %111 = arith.maximumf %109, %110 : vector<12x128xf32>
    %c144 = arith.constant 144 : index
    %c0_49 = arith.constant 0 : index
    %112 = vector.load %arg0[%c144, %c0_49] : memref<152x128xf32, #tpu.memory_space<vmem>>, vector<2x12xf32>
    %cst_50 = arith.constant dense<0.000000e+00> : vector<2x128xf32>
    %113 = tpu.matmul %112, %111, %cst_50 {dimension_numbers = #tpu.dot_dimension_numbers<[1], [0], [0], [1], [0, 0, 1, 1], [], []>} : vector<2x12xf32>, vector<12x128xf32>, vector<2x128xf32> -> vector<2x128xf32>
    %114 = arith.mulf %57, %113 : vector<2x128xf32>
    %115 = tpu.concatenate %57, %113, %114 in 1 : vector<2x128xf32>, vector<2x128xf32>, vector<2x128xf32> -> vector<2x384xf32>
    %c3224 = arith.constant 3224 : index
    %c0_51 = arith.constant 0 : index
    %116 = vector.load %arg1[%c3224, %c0_51] : memref<4664x128xf32, #tpu.memory_space<vmem>>, vector<384x32xf32>
    %cst_52 = arith.constant dense<0.000000e+00> : vector<2x32xf32>
    %117 = tpu.matmul %115, %116, %cst_52 {dimension_numbers = #tpu.dot_dimension_numbers<[1], [0], [0], [1], [0, 0, 1, 1], [], []>} : vector<2x384xf32>, vector<384x32xf32>, vector<2x32xf32> -> vector<2x32xf32>
    %c4592 = arith.constant 4592 : index
    %c0_53 = arith.constant 0 : index
    %118 = vector.load %arg1[%c4592, %c0_53] : memref<4664x128xf32, #tpu.memory_space<vmem>>, vector<1x32xf32>
    %119 = vector.broadcast %118 : vector<1x32xf32> to vector<2x32xf32>
    %120 = arith.addf %117, %119 : vector<2x32xf32>
    %cst_54 = arith.constant 0.000000e+00 : f32
    %121 = vector.broadcast %cst_54 : f32 to vector<2x32xf32>
    %122 = arith.maximumf %120, %121 : vector<2x32xf32>
    %c3608 = arith.constant 3608 : index
    %c0_55 = arith.constant 0 : index
    %123 = vector.load %arg1[%c3608, %c0_55] : memref<4664x128xf32, #tpu.memory_space<vmem>>, vector<32x32xf32>
    %cst_56 = arith.constant dense<0.000000e+00> : vector<2x32xf32>
    %124 = tpu.matmul %122, %123, %cst_56 {dimension_numbers = #tpu.dot_dimension_numbers<[1], [0], [0], [1], [0, 0, 1, 1], [], []>} : vector<2x32xf32>, vector<32x32xf32>, vector<2x32xf32> -> vector<2x32xf32>
    %c4600 = arith.constant 4600 : index
    %c0_57 = arith.constant 0 : index
    %125 = vector.load %arg1[%c4600, %c0_57] : memref<4664x128xf32, #tpu.memory_space<vmem>>, vector<1x32xf32>
    %126 = vector.broadcast %125 : vector<1x32xf32> to vector<2x32xf32>
    %127 = arith.addf %124, %126 : vector<2x32xf32>
    %cst_58 = arith.constant 0.000000e+00 : f32
    %128 = vector.broadcast %cst_58 : f32 to vector<2x32xf32>
    %129 = arith.maximumf %127, %128 : vector<2x32xf32>
    %c3640 = arith.constant 3640 : index
    %c0_59 = arith.constant 0 : index
    %130 = vector.load %arg1[%c3640, %c0_59] : memref<4664x128xf32, #tpu.memory_space<vmem>>, vector<32x128xf32>
    %cst_60 = arith.constant dense<0.000000e+00> : vector<2x128xf32>
    %131 = tpu.matmul %129, %130, %cst_60 {dimension_numbers = #tpu.dot_dimension_numbers<[1], [0], [0], [1], [0, 0, 1, 1], [], []>} : vector<2x32xf32>, vector<32x128xf32>, vector<2x128xf32> -> vector<2x128xf32>
    %c4608 = arith.constant 4608 : index
    %c0_61 = arith.constant 0 : index
    %132 = vector.load %arg1[%c4608, %c0_61] : memref<4664x128xf32, #tpu.memory_space<vmem>>, vector<1x128xf32>
    %133 = vector.broadcast %132 : vector<1x128xf32> to vector<2x128xf32>
    %134 = arith.addf %131, %133 : vector<2x128xf32>
    %c3672 = arith.constant 3672 : index
    %c0_62 = arith.constant 0 : index
    %135 = vector.load %arg1[%c3672, %c0_62] : memref<4664x128xf32, #tpu.memory_space<vmem>>, vector<128x32xf32>
    %cst_63 = arith.constant dense<0.000000e+00> : vector<2x32xf32>
    %136 = tpu.matmul %113, %135, %cst_63 {dimension_numbers = #tpu.dot_dimension_numbers<[1], [0], [0], [1], [0, 0, 1, 1], [], []>} : vector<2x128xf32>, vector<128x32xf32>, vector<2x32xf32> -> vector<2x32xf32>
    %c4616 = arith.constant 4616 : index
    %c0_64 = arith.constant 0 : index
    %137 = vector.load %arg1[%c4616, %c0_64] : memref<4664x128xf32, #tpu.memory_space<vmem>>, vector<1x32xf32>
    %138 = vector.broadcast %137 : vector<1x32xf32> to vector<2x32xf32>
    %139 = arith.addf %136, %138 : vector<2x32xf32>
    %c3800 = arith.constant 3800 : index
    %c0_65 = arith.constant 0 : index
    %140 = vector.load %arg1[%c3800, %c0_65] : memref<4664x128xf32, #tpu.memory_space<vmem>>, vector<32x32xf32>
    %cst_66 = arith.constant dense<0.000000e+00> : vector<2x32xf32>
    %141 = tpu.matmul %139, %140, %cst_66 {dimension_numbers = #tpu.dot_dimension_numbers<[1], [0], [0], [1], [0, 0, 1, 1], [], []>} : vector<2x32xf32>, vector<32x32xf32>, vector<2x32xf32> -> vector<2x32xf32>
    %c4624 = arith.constant 4624 : index
    %c0_67 = arith.constant 0 : index
    %142 = vector.load %arg1[%c4624, %c0_67] : memref<4664x128xf32, #tpu.memory_space<vmem>>, vector<1x32xf32>
    %143 = vector.broadcast %142 : vector<1x32xf32> to vector<2x32xf32>
    %144 = arith.addf %141, %143 : vector<2x32xf32>
    %c3832 = arith.constant 3832 : index
    %c0_68 = arith.constant 0 : index
    %145 = vector.load %arg1[%c3832, %c0_68] : memref<4664x128xf32, #tpu.memory_space<vmem>>, vector<32x128xf32>
    %cst_69 = arith.constant dense<0.000000e+00> : vector<2x128xf32>
    %146 = tpu.matmul %144, %145, %cst_69 {dimension_numbers = #tpu.dot_dimension_numbers<[1], [0], [0], [1], [0, 0, 1, 1], [], []>} : vector<2x32xf32>, vector<32x128xf32>, vector<2x128xf32> -> vector<2x128xf32>
    %c4632 = arith.constant 4632 : index
    %c0_70 = arith.constant 0 : index
    %147 = vector.load %arg1[%c4632, %c0_70] : memref<4664x128xf32, #tpu.memory_space<vmem>>, vector<1x128xf32>
    %148 = vector.broadcast %147 : vector<1x128xf32> to vector<2x128xf32>
    %149 = arith.addf %146, %148 : vector<2x128xf32>
    %150 = tpu.concatenate %57, %113, %134, %149 in 1 : vector<2x128xf32>, vector<2x128xf32>, vector<2x128xf32>, vector<2x128xf32> -> vector<2x512xf32>
    %c3864 = arith.constant 3864 : index
    %c0_71 = arith.constant 0 : index
    %151 = vector.load %arg1[%c3864, %c0_71] : memref<4664x128xf32, #tpu.memory_space<vmem>>, vector<512x96xf32>
    %cst_72 = arith.constant dense<0.000000e+00> : vector<2x96xf32>
    %152 = tpu.matmul %150, %151, %cst_72 {dimension_numbers = #tpu.dot_dimension_numbers<[1], [0], [0], [1], [0, 0, 1, 1], [], []>} : vector<2x512xf32>, vector<512x96xf32>, vector<2x96xf32> -> vector<2x96xf32>
    %c4640 = arith.constant 4640 : index
    %c0_73 = arith.constant 0 : index
    %153 = vector.load %arg1[%c4640, %c0_73] : memref<4664x128xf32, #tpu.memory_space<vmem>>, vector<1x96xf32>
    %154 = vector.broadcast %153 : vector<1x96xf32> to vector<2x96xf32>
    %155 = arith.addf %152, %154 : vector<2x96xf32>
    %cst_74 = arith.constant 0.000000e+00 : f32
    %156 = vector.broadcast %cst_74 : f32 to vector<2x96xf32>
    %157 = arith.maximumf %155, %156 : vector<2x96xf32>
    %c4376 = arith.constant 4376 : index
    %c0_75 = arith.constant 0 : index
    %158 = vector.load %arg1[%c4376, %c0_75] : memref<4664x128xf32, #tpu.memory_space<vmem>>, vector<96x48xf32>
    %cst_76 = arith.constant dense<0.000000e+00> : vector<2x48xf32>
    %159 = tpu.matmul %157, %158, %cst_76 {dimension_numbers = #tpu.dot_dimension_numbers<[1], [0], [0], [1], [0, 0, 1, 1], [], []>} : vector<2x96xf32>, vector<96x48xf32>, vector<2x48xf32> -> vector<2x48xf32>
    %c4648 = arith.constant 4648 : index
    %c0_77 = arith.constant 0 : index
    %160 = vector.load %arg1[%c4648, %c0_77] : memref<4664x128xf32, #tpu.memory_space<vmem>>, vector<1x48xf32>
    %161 = vector.broadcast %160 : vector<1x48xf32> to vector<2x48xf32>
    %162 = arith.addf %159, %161 : vector<2x48xf32>
    %cst_78 = arith.constant 0.000000e+00 : f32
    %163 = vector.broadcast %cst_78 : f32 to vector<2x48xf32>
    %164 = arith.maximumf %162, %163 : vector<2x48xf32>
    %c4472 = arith.constant 4472 : index
    %c0_79 = arith.constant 0 : index
    %165 = vector.load %arg1[%c4472, %c0_79] : memref<4664x128xf32, #tpu.memory_space<vmem>>, vector<48x128xf32>
    %cst_80 = arith.constant dense<0.000000e+00> : vector<2x128xf32>
    %166 = tpu.matmul %164, %165, %cst_80 {dimension_numbers = #tpu.dot_dimension_numbers<[1], [0], [0], [1], [0, 0, 1, 1], [], []>} : vector<2x48xf32>, vector<48x128xf32>, vector<2x128xf32> -> vector<2x128xf32>
    %c4656 = arith.constant 4656 : index
    %c0_81 = arith.constant 0 : index
    %167 = vector.load %arg1[%c4656, %c0_81] : memref<4664x128xf32, #tpu.memory_space<vmem>>, vector<1x128xf32>
    %168 = vector.broadcast %167 : vector<1x128xf32> to vector<2x128xf32>
    %169 = arith.addf %166, %168 : vector<2x128xf32>
    %cst_82 = arith.constant 0.000000e+00 : f32
    %170 = vector.broadcast %cst_82 : f32 to vector<6x128xf32>
    %171 = tpu.concatenate %169, %170 in 0 : vector<2x128xf32>, vector<6x128xf32> -> vector<8x128xf32>
    %c0_83 = arith.constant 0 : index
    %c0_84 = arith.constant 0 : index
    %172 = vector.load %arg2[%c0_83, %c0_84] : memref<8x128xf32, #tpu.memory_space<vmem>>, vector<8x128xf32>
    tpu.vector_store %arg2[%c0_83, %c0_84], %171 {strides = array<i32>} : memref<8x128xf32, #tpu.memory_space<vmem>>, vector<8x128xf32>,
    return
  }
}

</mosaic_0001>

<llo_original>
// kernel: eq.1
$region0: #{eq.1}
  %s0 = inlined_call_operand.hbm [shape: s32[2,32], index: 0, kind: input, shape index: {}]
  %s1 = inlined_call_operand.vmem [shape: s32[64], index: 1, kind: output, shape index: {}]
  $region1: #{eq.1} parent=0
    #allocation0 [shape = 'u8[1024]{0}', space=vmem, size = 0x400, scoped, tag = 'operand span for operand 0']
    #allocation1 [shape = 's32[1]{0}', space=sflag, size = 0x4, scoped, tag = 'scoped memory for eq.1']
    #allocation2 [shape = 'u8[4096]{0}', space=vmem, size = 0x1000, scoped, tag = 'scoped mem for output reshape']
    #allocation3 [shape = 'u8[4096]{0}', space=vmem, size = 0x1000, scoped, tag = 'scoped mem for input reshape']
    %2 = vsyncpa [#allocation1], 0
    %s4 = ssub.s32 32, 32
    %5 = vsyncadd [#allocation1], %s4
    %s7 = sshll.u32 [#allocation0], 4
    %s8 = int_to_ptr.vmem [resolvable:$true] %s7
    %10 = dma.hbm_to_vmem [thread:$0]  %s0, 32, %s8, [#allocation1]
    %11 = dma.done [#allocation1], 32
    %s13 = sshllo.u32 0, 2
    %v14 = vld [vmem:[#allocation0] sm:%s13]
    %15 = vst [vmem:[#allocation3] sm:%s13] %v14
    %v16 = vld [vmem:[#allocation3] sm:$0x1]
    %vm17 = vcmask 261120
    %18 = vst.msk [vmem:[#allocation2] sm:$0x1] %vm17, %v16
    %s19 = scalar_lea.vmem [#allocation3], 1
    %v20 = vld [vmem:[%s19] sm:$0x1]
    %21 = vrot.lane.b32.xlu0 %v20, 32
    %v22 = vpop.permute.xlu0 %21
    %vm23 = vcmask 523520
    %24 = vst.msk [vmem:[#allocation2] sm:$0x1] %vm23, %v22
    %s26 = sshllo.u32 0, 1
    %v28 = vld [vmem:[#allocation2] sm:%s26]
    %s29 = sshllo.u32 0, 1
    %30 = vst [vmem:[%s1] sm:%s29] %v28
    %31 = vsyncpa [#allocation1], 1

// kernel: affinity_forward.1
$region0: #{affinity_forward.1}
  #allocation0 [shape = 'u32[]', space=smem, size = 0x4, offset = 0x4, fixed_abs, tag = 'smem constant byte address 0x4 - core index']
  #allocation1 [shape = 'u32[144,128]{1,0:T(1,128)}', space=vmem, size = 0x12000, scoped, tag = 'internal scratch']
  %s0 = inlined_call_operand.vmem [shape: f32[152,128], index: 0, kind: input, shape index: {}]
  %s1 = inlined_call_operand.hbm [shape: f32[4664,128], index: 1, kind: input, shape index: {}]
  %s2 = inlined_call_operand.vmem [shape: f32[8,128], index: 2, kind: output, shape index: {}]
  %s3 = sld [smem:[#allocation0]]
  $region22: #{affinity_forward.1} parent=0
    _
  %s5 = ssub.s32 1, %s3
  %s6 = scalar_select 0, %s5, %s3
  $region1: #{affinity_forward.1} parent=0
    #allocation2 [shape = 'u8[2387968]{0}', space=vmem, size = 0x247000, scoped, tag = 'input window, operand 1, single buffered']
    #allocation3 [shape = 's32[1]{0}', space=sflag, size = 0x4, scoped, tag = 'scoped memory for affinity_forward.1']
    %7 = vsyncpa [#allocation3], 0
    // Predicated region
    $region2: #{affinity_forward.1} parent=1 // pred_check
      _
    $region3: #{affinity_forward.1} parent=1 // pred_check_branch
      %9 = sbr.rel (0) target = $region5
    $region4: #{affinity_forward.1} parent=1 // pred_region
      _
    $region5: #{affinity_forward.1} parent=1 // pred_fallthru
      _
    // Predicated region
    $region6: #{affinity_forward.1} parent=1 // pred_check
      _
    $region7: #{affinity_forward.1} parent=1 // pred_check_branch
      %11 = sbr.rel (0) target = $region9
    $region8: #{affinity_forward.1} parent=1 // pred_region
      %s13 = ssub.s32 74624, 74624
      %14 = vsyncadd [#allocation3], %s13
      %s15 = sshll.u32 [#allocation2], 4
      %s16 = int_to_ptr.vmem [resolvable:$true] %s15
      %21 = dma.hbm_to_vmem [thread:$0]  %s1, 74624, %s16, [#allocation3], 128, 128, 8
    $region9: #{affinity_forward.1} parent=1 // pred_fallthru
      _
    // Predicated region
    $region10: #{affinity_forward.1} parent=1 // pred_check
      _
    $region11: #{affinity_forward.1} parent=1 // pred_check_branch
      %23 = sbr.rel (0) target = $region13
    $region12: #{affinity_forward.1} parent=1 // pred_region
      %24 = dma.done [#allocation3], 74624
    $region13: #{affinity_forward.1} parent=1 // pred_fallthru
      _
    %v25 = vld [vmem:[%s0] sm:$0xff]
    %v26 = vld [vmem:[%s0 + $0x8] sm:$0xff]
    %v27 = vld [vmem:[%s0 + $0x10] sm:$0xff]
    %v28 = vld [vmem:[%s0 + $0x18] sm:$0xff]
    %v29 = vld [vmem:[%s0 + $0x20] sm:$0xff]
    %v30 = vld [vmem:[%s0 + $0x28] sm:$0xff]
    %v31 = vld [vmem:[%s0 + $0x30] sm:$0xff]
    %v32 = vld [vmem:[%s0 + $0x38] sm:$0xff]
    %v33 = vld [vmem:[#allocation2] sm:$0xff]
    %v34 = vld [vmem:[#allocation2 + $0x8] sm:$0xff]
    %v35 = vld [vmem:[#allocation2 + $0x10] sm:$0xff]
    %v36 = vld [vmem:[#allocation2 + $0x18] sm:$0xff]
    %vm37 = vcmask 261120
    %v39 = vsel %vm37, %v25, 0
    %v42 = vsel %vm37, %v26, 0
    %v45 = vsel %vm37, %v27, 0
    %v48 = vsel %vm37, %v28, 0
    %v51 = vsel %vm37, %v29, 0
    %v54 = vsel %vm37, %v30, 0
    %v57 = vsel %vm37, %v31, 0
    %v60 = vsel %vm37, %v32, 0
    %62 = vmatprep.subr.mxu0 0.0
    %63 = vmatpush1.msra.mxu0 %v33
    %64 = vmatprep.subr.mxu0 0.0
    %65 = vmatpush1.msra.mxu0 %v34
    %66 = vmatprep.subr.mxu0 0.0
    %67 = vmatpush1.msra.mxu0 %v35
    %68 = vmatprep.subr.mxu0 0.0
    %69 = vmatpush1.msra.mxu0 %v36
    %70 = vmatprep.subr.mxu0 0.0
    %71 = vmatpush1.msra.mxu0 0.0
    %72 = vmatprep.subr.mxu0 0.0
    %73 = vmatpush1.msra.mxu0 0.0
    %74 = vmatprep.subr.mxu0 0.0
    %75 = vmatpush1.msra.mxu0 0.0
    %76 = vmatprep.subr.mxu0 0.0
    %77 = vmatpush1.msra.mxu0 0.0
    %78 = vmatprep.subr.mxu0 0.0
    %79 = vmatpush1.msra.mxu0 0.0
    %80 = vmatprep.subr.mxu0 0.0
    %81 = vmatpush1.msra.mxu0 0.0
    %82 = vmatprep.subr.mxu0 0.0
    %83 = vmatpush1.msra.mxu0 0.0
    %84 = vmatprep.subr.mxu0 0.0
    %85 = vmatpush1.msra.mxu0 0.0
    %86 = vmatprep.subr.mxu0 0.0
    %87 = vmatpush1.msra.mxu0 0.0
    %88 = vmatprep.subr.mxu0 0.0
    %89 = vmatpush1.msra.mxu0 0.0
    %90 = vmatprep.subr.mxu0 0.0
    %91 = vmatpush1.msra.mxu0 0.0
    %92 = vmatprep.subr.mxu0 0.0
    %93 = vmatpush1.msra.mxu0 0.0
    %94 = vmatprep.subr.mxu0 0.0
    %95 = vmatpush1.msra.mxu0 0.0
    %96 = vmatprep.subr.mxu0 0.0
    %97 = vmatpush1.msra.mxu0 0.0
    %98 = vmatprep.subr.mxu0 0.0
    %99 = vmatpush1.msra.mxu0 0.0
    %100 = vmatprep.subr.mxu0 0.0
    %101 = vmatpush1.msra.mxu0 0.0
    %102 = vmatprep.subr.mxu0 0.0
    %103 = vmatpush1.msra.mxu0 0.0
    %104 = vmatprep.subr.mxu0 0.0
    %105 = vmatpush1.msra.mxu0 0.0
    %106 = vmatprep.subr.mxu0 0.0
    %107 = vmatpush1.msra.mxu0 0.0
    %108 = vmatprep.subr.mxu0 0.0
    %109 = vmatpush1.msra.mxu0 0.0
    %110 = vmatprep.subr.mxu0 0.0
    %111 = vmatpush1.msra.mxu0 0.0
    %112 = vmatprep.subr.mxu0 0.0
    %113 = vmatpush1.msra.mxu0 0.0
    %114 = vmatprep.subr.mxu0 0.0
    %115 = vmatpush1.msra.mxu0 0.0
    %116 = vmatprep.subr.mxu0 0.0
    %117 = vmatpush1.msra.mxu0 0.0
    %118 = vmatprep.subr.mxu0 0.0
    %119 = vmatpush1.msra.mxu0 0.0
    %120 = vmatprep.subr.mxu0 0.0
    %121 = vmatpush1.msra.mxu0 0.0
    %122 = vmatprep.subr.mxu0 0.0
    %123 = vmatpush1.msra.mxu0 0.0
    %124 = vmatprep.subr.mxu0 0.0
    %125 = vmatpush1.msra.mxu0 0.0
    %126 = vmatprep.mubr.f32.mxu0 0.0
    %127 = vmatmul.mubr.f32.gmra.mrb[0].mxu0 %v39
    %v128 = vpop.f32.mrb[0].mxu0
    %v129 = vadd.f32 0.0, %v128
    %v130 = vpop.f32.mrb[0].mxu0
    %131 = vmatprep.mubr.f32.mxu0 0.0
    %132 = vmatmul.mubr.f32.gmra.mrb[0].mxu0 %v42
    %v133 = vpop.f32.mrb[0].mxu0
    %v134 = vadd.f32 0.0, %v133
    %v135 = vpop.f32.mrb[0].mxu0
    %136 = vmatprep.mubr.f32.mxu0 0.0
    %137 = vmatmul.mubr.f32.gmra.mrb[0].mxu0 %v45
    %v138 = vpop.f32.mrb[0].mxu0
    %v139 = vadd.f32 0.0, %v138
    %v140 = vpop.f32.mrb[0].mxu0
    %141 = vmatprep.mubr.f32.mxu0 0.0
    %142 = vmatmul.mubr.f32.gmra.mrb[0].mxu0 %v48
    %v143 = vpop.f32.mrb[0].mxu0
    %v144 = vadd.f32 0.0, %v143
    %v145 = vpop.f32.mrb[0].mxu0
    %146 = vmatprep.mubr.f32.mxu0 0.0
    %147 = vmatmul.mubr.f32.gmra.mrb[0].mxu0 %v51
    %v148 = vpop.f32.mrb[0].mxu0
    %v149 = vadd.f32 0.0, %v148
    %v150 = vpop.f32.mrb[0].mxu0
    %151 = vmatprep.mubr.f32.mxu0 0.0
    %152 = vmatmul.mubr.f32.gmra.mrb[0].mxu0 %v54
    %v153 = vpop.f32.mrb[0].mxu0
    %v154 = vadd.f32 0.0, %v153
    %v155 = vpop.f32.mrb[0].mxu0
    %156 = vmatprep.mubr.f32.mxu0 0.0
    %157 = vmatmul.mubr.f32.gmra.mrb[0].mxu0 %v57
    %v158 = vpop.f32.mrb[0].mxu0
    %v159 = vadd.f32 0.0, %v158
    %v160 = vpop.f32.mrb[0].mxu0
    %161 = vmatprep.mubr.f32.mxu0 0.0
    %162 = vmatmul.mubr.f32.gmra.mrb[0].mxu0 %v60
    %v163 = vpop.f32.mrb[0].mxu0
    %v164 = vadd.f32 0.0, %v163
    %v165 = vpop.f32.mrb[0].mxu0
    %166 = vdwg.mxu0
    %vm175 = vcmask 1046528
    %v176 = vrot.slane %v129, 1
    %v177 = vrot.slane %v134, 1
    %v178 = vsel %vm175, %v176, %v177
    %v179 = vrot.slane %v139, 1
    %v180 = vsel %vm175, %v177, %v179
    %v181 = vrot.slane %v144, 1
    %v182 = vsel %vm175, %v179, %v181
    %v183 = vrot.slane %v149, 1
    %v184 = vsel %vm175, %v181, %v183
    %v185 = vrot.slane %v154, 1
    %v186 = vsel %vm175, %v183, %v185
    %v187 = vrot.slane %v159, 1
    %v188 = vsel %vm175, %v185, %v187
    %v189 = vrot.slane %v164, 1
    %v190 = vsel %vm175, %v187, %v189
    %vm199 = vcmask 1045504
    %v200 = vrot.slane %v129, 2
    %v201 = vrot.slane %v134, 2
    %v202 = vsel %vm199, %v200, %v201
    %v203 = vrot.slane %v139, 2
    %v204 = vsel %vm199, %v201, %v203
    %v205 = vrot.slane %v144, 2
    %v206 = vsel %vm199, %v203, %v205
    %v207 = vrot.slane %v149, 2
    %v208 = vsel %vm199, %v205, %v207
    %v209 = vrot.slane %v154, 2
    %v210 = vsel %vm199, %v207, %v209
    %v211 = vrot.slane %v159, 2
    %v212 = vsel %vm199, %v209, %v211
    %v213 = vrot.slane %v164, 2
    %v214 = vsel %vm199, %v211, %v213
    %vm223 = vcmask 1044480
    %v224 = vrot.slane %v129, 3
    %v225 = vrot.slane %v134, 3
    %v226 = vsel %vm223, %v224, %v225
    %v227 = vrot.slane %v139, 3
    %v228 = vsel %vm223, %v225, %v227
    %v229 = vrot.slane %v144, 3
    %v230 = vsel %vm223, %v227, %v229
    %v231 = vrot.slane %v149, 3
    %v232 = vsel %vm223, %v229, %v231
    %v233 = vrot.slane %v154, 3
    %v234 = vsel %vm223, %v231, %v233
    %v235 = vrot.slane %v159, 3
    %v236 = vsel %vm223, %v233, %v235
    %v237 = vrot.slane %v164, 3
    %v238 = vsel %vm223, %v235, %v237
    %v247 = vld [vmem:[#allocation2 + $0x20] sm:$0xff]
    %v248 = vld [vmem:[#allocation2 + $0x28] sm:$0xff]
    %v249 = vld [vmem:[#allocation2 + $0x30] sm:$0xff]
    %v250 = vld [vmem:[#allocation2 + $0x38] sm:$0xff]
    %v251 = vld [vmem:[#allocation2 + $0x40] sm:$0xff]
    %v252 = vld [vmem:[#allocation2 + $0x48] sm:$0xff]
    %v253 = vld [vmem:[#allocation2 + $0x50] sm:$0xff]
    %v254 = vld [vmem:[#allocation2 + $0x58] sm:$0xff]
    %v255 = vld [vmem:[#allocation2 + $0x60] sm:$0xff]
    %v256 = vld [vmem:[#allocation2 + $0x68] sm:$0xff]
    %v257 = vld [vmem:[#allocation2 + $0x70] sm:$0xff]
    %v258 = vld [vmem:[#allocation2 + $0x78] sm:$0xff]
    %v259 = vld [vmem:[#allocation2 + $0x80] sm:$0xff]
    %v260 = vld [vmem:[#allocation2 + $0x88] sm:$0xff]
    %v261 = vld [vmem:[#allocation2 + $0x90] sm:$0xff]
    %v262 = vld [vmem:[#allocation2 + $0x98] sm:$0xff]
    %v263 = vld [vmem:[#allocation2 + $0xa0] sm:$0xff]
    %v264 = vld [vmem:[#allocation2 + $0xa8] sm:$0xff]
    %v265 = vld [vmem:[#allocation2 + $0xb0] sm:$0xff]
    %v266 = vld [vmem:[#allocation2 + $0xb8] sm:$0xff]
    %v267 = vld [vmem:[#allocation2 + $0xc0] sm:$0xff]
    %v268 = vld [vmem:[#allocation2 + $0xc8] sm:$0xff]
    %v269 = vld [vmem:[#allocation2 + $0xd0] sm:$0xff]
    %v270 = vld [vmem:[#allocation2 + $0xd8] sm:$0xff]
    %v271 = vld [vmem:[#allocation2 + $0xe0] sm:$0xff]
    %v272 = vld [vmem:[#allocation2 + $0xe8] sm:$0xff]
    %v273 = vld [vmem:[#allocation2 + $0xf0] sm:$0xff]
    %v274 = vld [vmem:[#allocation2 + $0xf8] sm:$0xff]
    %v275 = vld [vmem:[#allocation2 + $0x100] sm:$0xff]
    %v276 = vld [vmem:[#allocation2 + $0x108] sm:$0xff]
    %v277 = vld [vmem:[#allocation2 + $0x110] sm:$0xff]
    %v278 = vld [vmem:[#allocation2 + $0x118] sm:$0xff]
    %v279 = vld [vmem:[#allocation2 + $0x120] sm:$0xff]
    %v280 = vld [vmem:[#allocation2 + $0x128] sm:$0xff]
    %v281 = vld [vmem:[#allocation2 + $0x130] sm:$0xff]
    %v282 = vld [vmem:[#allocation2 + $0x138] sm:$0xff]
    %v283 = vld [vmem:[#allocation2 + $0x140] sm:$0xff]
    %v284 = vld [vmem:[#allocation2 + $0x148] sm:$0xff]
    %v285 = vld [vmem:[#allocation2 + $0x150] sm:$0xff]
    %v286 = vld [vmem:[#allocation2 + $0x158] sm:$0xff]
    %v287 = vld [vmem:[#allocation2 + $0x160] sm:$0xff]
    %v288 = vld [vmem:[#allocation2 + $0x168] sm:$0xff]
    %v289 = vld [vmem:[#allocation2 + $0x170] sm:$0xff]
    %v290 = vld [vmem:[#allocation2 + $0x178] sm:$0xff]
    %v291 = vld [vmem:[#allocation2 + $0x180] sm:$0xff]
    %v292 = vld [vmem:[#allocation2 + $0x188] sm:$0xff]
    %v293 = vld [vmem:[#allocation2 + $0x190] sm:$0xff]
    %v294 = vld [vmem:[#allocation2 + $0x198] sm:$0xff]
    %v295 = vld [vmem:[#allocation2 + $0x1a0] sm:$0xff]
    %v296 = vld [vmem:[#allocation2 + $0x1a8] sm:$0xff]
    %v297 = vld [vmem:[#allocation2 + $0x1b0] sm:$0xff]
    %v298 = vld [vmem:[#allocation2 + $0x1b8] sm:$0xff]
    %v299 = vld [vmem:[#allocation2 + $0x1c0] sm:$0xff]
    %v300 = vld [vmem:[#allocation2 + $0x1c8] sm:$0xff]
    %v301 = vld [vmem:[#allocation2 + $0x1d0] sm:$0xff]
    %v302 = vld [vmem:[#allocation2 + $0x1d8] sm:$0xff]
    %v303 = vld [vmem:[#allocation2 + $0x1e0] sm:$0xff]
    %v304 = vld [vmem:[#allocation2 + $0x1e8] sm:$0xff]
    %v305 = vld [vmem:[#allocation2 + $0x1f0] sm:$0xff]
    %v306 = vld [vmem:[#allocation2 + $0x1f8] sm:$0xff]
    %v307 = vld [vmem:[#allocation2 + $0x200] sm:$0xff]
    %v308 = vld [vmem:[#allocation2 + $0x208] sm:$0xff]
    %v309 = vld [vmem:[#allocation2 + $0x210] sm:$0xff]
    %v310 = vld [vmem:[#allocation2 + $0x218] sm:$0xff]
    %v311 = vld [vmem:[#allocation2 + $0x11a8] sm:$0x1]
    %v312 = vlaneseq
    %v313 = vshrl.u32 %v312, 7
    %v314 = vsub.s32 0, %v313
    %v315 = vrot.slane %v311, %v314
    %316 = vmatprep.subr.mxu0 0.0
    %317 = vmatpush1.msra.mxu0 %v247
    %318 = vmatprep.subr.mxu0 0.0
    %319 = vmatpush1.msra.mxu0 %v248
    %320 = vmatprep.subr.mxu0 0.0
    %321 = vmatpush1.msra.mxu0 %v249
    %322 = vmatprep.subr.mxu0 0.0
    %323 = vmatpush1.msra.mxu0 %v250
    %324 = vmatprep.subr.mxu0 0.0
    %325 = vmatpush1.msra.mxu0 %v251
    %326 = vmatprep.subr.mxu0 0.0
    %327 = vmatpush1.msra.mxu0 %v252
    %328 = vmatprep.subr.mxu0 0.0
    %329 = vmatpush1.msra.mxu0 %v253
    %330 = vmatprep.subr.mxu0 0.0
    %331 = vmatpush1.msra.mxu0 %v254
    %332 = vmatprep.subr.mxu0 0.0
    %333 = vmatpush1.msra.mxu0 %v255
    %334 = vmatprep.subr.mxu0 0.0
    %335 = vmatpush1.msra.mxu0 %v256
    %336 = vmatprep.subr.mxu0 0.0
    %337 = vmatpush1.msra.mxu0 %v257
    %338 = vmatprep.subr.mxu0 0.0
    %339 = vmatpush1.msra.mxu0 %v258
    %340 = vmatprep.subr.mxu0 0.0
    %341 = vmatpush1.msra.mxu0 %v259
    %342 = vmatprep.subr.mxu0 0.0
    %343 = vmatpush1.msra.mxu0 %v260
    %344 = vmatprep.subr.mxu0 0.0
    %345 = vmatpush1.msra.mxu0 %v261
    %346 = vmatprep.subr.mxu0 0.0
    %347 = vmatpush1.msra.mxu0 %v262
    %348 = vmatprep.subr.mxu0 0.0
    %349 = vmatpush1.msra.mxu0 %v263
    %350 = vmatprep.subr.mxu0 0.0
    %351 = vmatpush1.msra.mxu0 %v264
    %352 = vmatprep.subr.mxu0 0.0
    %353 = vmatpush1.msra.mxu0 %v265
    %354 = vmatprep.subr.mxu0 0.0
    %355 = vmatpush1.msra.mxu0 %v266
    %356 = vmatprep.subr.mxu0 0.0
    %357 = vmatpush1.msra.mxu0 %v267
    %358 = vmatprep.subr.mxu0 0.0
    %359 = vmatpush1.msra.mxu0 %v268
    %360 = vmatprep.subr.mxu0 0.0
    %361 = vmatpush1.msra.mxu0 %v269
    %362 = vmatprep.subr.mxu0 0.0
    %363 = vmatpush1.msra.mxu0 %v270
    %364 = vmatprep.subr.mxu0 0.0
    %365 = vmatpush1.msra.mxu0 %v271
    %366 = vmatprep.subr.mxu0 0.0
    %367 = vmatpush1.msra.mxu0 %v272
    %368 = vmatprep.subr.mxu0 0.0
    %369 = vmatpush1.msra.mxu0 %v273
    %370 = vmatprep.subr.mxu0 0.0
    %371 = vmatpush1.msra.mxu0 %v274
    %372 = vmatprep.subr.mxu0 0.0
    %373 = vmatpush1.msra.mxu0 %v275
    %374 = vmatprep.subr.mxu0 0.0
    %375 = vmatpush1.msra.mxu0 %v276
    %376 = vmatprep.subr.mxu0 0.0
    %377 = vmatpush1.msra.mxu0 %v277
    %378 = vmatprep.subr.mxu0 0.0
    %379 = vmatpush1.msra.mxu0 %v278
    %380 = vmatprep.mubr.f32.mxu0 %v178
    %381 = vmatmul.mubr.f32.gmra.mrb[0].mxu0 %v129
    %v382 = vpop.f32.mrb[0].mxu0
    %v383 = vadd.f32 %v315, %v382
    %v384 = vpop.f32.mrb[0].mxu0
    %385 = vmatprep.mubr.f32.mxu0 %v180
    %386 = vmatmul.mubr.f32.gmra.mrb[0].mxu0 %v134
    %v387 = vpop.f32.mrb[0].mxu0
    %v388 = vadd.f32 %v315, %v387
    %v389 = vpop.f32.mrb[0].mxu0
    %390 = vmatprep.mubr.f32.mxu0 %v182
    %391 = vmatmul.mubr.f32.gmra.mrb[0].mxu0 %v139
    %v392 = vpop.f32.mrb[0].mxu0
    %v393 = vadd.f32 %v315, %v392
    %v394 = vpop.f32.mrb[0].mxu0
    %395 = vmatprep.mubr.f32.mxu0 %v184
    %396 = vmatmul.mubr.f32.gmra.mrb[0].mxu0 %v144
    %v397 = vpop.f32.mrb[0].mxu0
    %v398 = vadd.f32 %v315, %v397
    %v399 = vpop.f32.mrb[0].mxu0
    %400 = vmatprep.mubr.f32.mxu0 %v186
    %401 = vmatmul.mubr.f32.gmra.mrb[0].mxu0 %v149
    %v402 = vpop.f32.mrb[0].mxu0
    %v403 = vadd.f32 %v315, %v402
    %v404 = vpop.f32.mrb[0].mxu0
    %405 = vmatprep.mubr.f32.mxu0 %v188
    %406 = vmatmul.mubr.f32.gmra.mrb[0].mxu0 %v154
    %v407 = vpop.f32.mrb[0].mxu0
    %v408 = vadd.f32 %v315, %v407
    %v409 = vpop.f32.mrb[0].mxu0
    %410 = vmatprep.mubr.f32.mxu0 %v190
    %411 = vmatmul.mubr.f32.gmra.mrb[0].mxu0 %v159
    %v412 = vpop.f32.mrb[0].mxu0
    %v413 = vadd.f32 %v315, %v412
    %v414 = vpop.f32.mrb[0].mxu0
    %415 = vmatprep.mubr.f32.mxu0 %v189
    %416 = vmatmul.mubr.f32.gmra.mrb[0].mxu0 %v164
    %v417 = vpop.f32.mrb[0].mxu0
    %v418 = vadd.f32 %v315, %v417
    %v419 = vpop.f32.mrb[0].mxu0
    %420 = vdwg.mxu0
    %421 = vmatprep.subr.mxu0 0.0
    %422 = vmatpush1.msra.mxu0 %v279
    %423 = vmatprep.subr.mxu0 0.0
    %424 = vmatpush1.msra.mxu0 %v280
    %425 = vmatprep.subr.mxu0 0.0
    %426 = vmatpush1.msra.mxu0 %v281
    %427 = vmatprep.subr.mxu0 0.0
    %428 = vmatpush1.msra.mxu0 %v282
    %429 = vmatprep.subr.mxu0 0.0
    %430 = vmatpush1.msra.mxu0 %v283
    %431 = vmatprep.subr.mxu0 0.0
    %432 = vmatpush1.msra.mxu0 %v284
    %433 = vmatprep.subr.mxu0 0.0
    %434 = vmatpush1.msra.mxu0 %v285
    %435 = vmatprep.subr.mxu0 0.0
    %436 = vmatpush1.msra.mxu0 %v286
    %437 = vmatprep.subr.mxu0 0.0
    %438 = vmatpush1.msra.mxu0 %v287
    %439 = vmatprep.subr.mxu0 0.0
    %440 = vmatpush1.msra.mxu0 %v288
    %441 = vmatprep.subr.mxu0 0.0
    %442 = vmatpush1.msra.mxu0 %v289
    %443 = vmatprep.subr.mxu0 0.0
    %444 = vmatpush1.msra.mxu0 %v290
    %445 = vmatprep.subr.mxu0 0.0
    %446 = vmatpush1.msra.mxu0 %v291
    %447 = vmatprep.subr.mxu0 0.0
    %448 = vmatpush1.msra.mxu0 %v292
    %449 = vmatprep.subr.mxu0 0.0
    %450 = vmatpush1.msra.mxu0 %v293
    %451 = vmatprep.subr.mxu0 0.0
    %452 = vmatpush1.msra.mxu0 %v294
    %453 = vmatprep.subr.mxu0 0.0
    %454 = vmatpush1.msra.mxu0 %v295
    %455 = vmatprep.subr.mxu0 0.0
    %456 = vmatpush1.msra.mxu0 %v296
    %457 = vmatprep.subr.mxu0 0.0
    %458 = vmatpush1.msra.mxu0 %v297
    %459 = vmatprep.subr.mxu0 0.0
    %460 = vmatpush1.msra.mxu0 %v298
    %461 = vmatprep.subr.mxu0 0.0
    %462 = vmatpush1.msra.mxu0 %v299
    %463 = vmatprep.subr.mxu0 0.0
    %464 = vmatpush1.msra.mxu0 %v300
    %465 = vmatprep.subr.mxu0 0.0
    %466 = vmatpush1.msra.mxu0 %v301
    %467 = vmatprep.subr.mxu0 0.0
    %468 = vmatpush1.msra.mxu0 %v302
    %469 = vmatprep.subr.mxu0 0.0
    %470 = vmatpush1.msra.mxu0 %v303
    %471 = vmatprep.subr.mxu0 0.0
    %472 = vmatpush1.msra.mxu0 %v304
    %473 = vmatprep.subr.mxu0 0.0
    %474 = vmatpush1.msra.mxu0 %v305
    %475 = vmatprep.subr.mxu0 0.0
    %476 = vmatpush1.msra.mxu0 %v306
    %477 = vmatprep.subr.mxu0 0.0
    %478 = vmatpush1.msra.mxu0 %v307
    %479 = vmatprep.subr.mxu0 0.0
    %480 = vmatpush1.msra.mxu0 %v308
    %481 = vmatprep.subr.mxu0 0.0
    %482 = vmatpush1.msra.mxu0 %v309
    %483 = vmatprep.subr.mxu0 0.0
    %484 = vmatpush1.msra.mxu0 %v310
    %485 = vmatprep.mubr.f32.mxu0 %v226
    %486 = vmatmul.mubr.f32.gmra.mrb[0].mxu0 %v202
    %v487 = vpop.f32.mrb[0].mxu0
    %v488 = vadd.f32 %v383, %v487
    %v489 = vpop.f32.mrb[0].mxu0
    %490 = vmatprep.mubr.f32.mxu0 %v228
    %491 = vmatmul.mubr.f32.gmra.mrb[0].mxu0 %v204
    %v492 = vpop.f32.mrb[0].mxu0
    %v493 = vadd.f32 %v388, %v492
    %v494 = vpop.f32.mrb[0].mxu0
    %495 = vmatprep.mubr.f32.mxu0 %v230
    %496 = vmatmul.mubr.f32.gmra.mrb[0].mxu0 %v206
    %v497 = vpop.f32.mrb[0].mxu0
    %v498 = vadd.f32 %v393, %v497
    %v499 = vpop.f32.mrb[0].mxu0
    %500 = vmatprep.mubr.f32.mxu0 %v232
    %501 = vmatmul.mubr.f32.gmra.mrb[0].mxu0 %v208
    %v502 = vpop.f32.mrb[0].mxu0
    %v503 = vadd.f32 %v398, %v502
    %v504 = vpop.f32.mrb[0].mxu0
    %505 = vmatprep.mubr.f32.mxu0 %v234
    %506 = vmatmul.mubr.f32.gmra.mrb[0].mxu0 %v210
    %v507 = vpop.f32.mrb[0].mxu0
    %v508 = vadd.f32 %v403, %v507
    %v509 = vpop.f32.mrb[0].mxu0
    %510 = vmatprep.mubr.f32.mxu0 %v236
    %511 = vmatmul.mubr.f32.gmra.mrb[0].mxu0 %v212
    %v512 = vpop.f32.mrb[0].mxu0
    %v513 = vadd.f32 %v408, %v512
    %v514 = vpop.f32.mrb[0].mxu0
    %515 = vmatprep.mubr.f32.mxu0 %v238
    %516 = vmatmul.mubr.f32.gmra.mrb[0].mxu0 %v214
    %v517 = vpop.f32.mrb[0].mxu0
    %v518 = vadd.f32 %v413, %v517
    %v519 = vpop.f32.mrb[0].mxu0
    %520 = vmatprep.mubr.f32.mxu0 %v237
    %521 = vmatmul.mubr.f32.gmra.mrb[0].mxu0 %v213
    %v522 = vpop.f32.mrb[0].mxu0
    %v523 = vadd.f32 %v418, %v522
    %v524 = vpop.f32.mrb[0].mxu0
    %525 = vdwg.mxu0
    %v526 = vmax.f32 %v488, 0.0
    %v527 = vmax.f32 %v493, 0.0
    %v528 = vmax.f32 %v498, 0.0
    %v529 = vmax.f32 %v503, 0.0
    %v530 = vmax.f32 %v508, 0.0
    %v531 = vmax.f32 %v513, 0.0
    %v532 = vmax.f32 %v518, 0.0
    %v533 = vmax.f32 %v523, 0.0
    %v541 = vrot.slane %v526, 1
    %v542 = vrot.slane %v527, 1
    %v543 = vsel %vm175, %v541, %v542
    %v544 = vrot.slane %v528, 1
    %v545 = vsel %vm175, %v542, %v544
    %v546 = vrot.slane %v529, 1
    %v547 = vsel %vm175, %v544, %v546
    %v548 = vrot.slane %v530, 1
    %v549 = vsel %vm175, %v546, %v548
    %v550 = vrot.slane %v531, 1
    %v551 = vsel %vm175, %v548, %v550
    %v552 = vrot.slane %v532, 1
    %v553 = vsel %vm175, %v550, %v552
    %v561 = vrot.slane %v526, 2
    %v562 = vrot.slane %v527, 2
    %v563 = vsel %vm199, %v561, %v562
    %v564 = vrot.slane %v528, 2
    %v565 = vsel %vm199, %v562, %v564
    %v566 = vrot.slane %v529, 2
    %v567 = vsel %vm199, %v564, %v566
    %v568 = vrot.slane %v530, 2
    %v569 = vsel %vm199, %v566, %v568
    %v570 = vrot.slane %v531, 2
    %v571 = vsel %vm199, %v568, %v570
    %v572 = vrot.slane %v532, 2
    %v573 = vsel %vm199, %v570, %v572
    %v582 = vrot.slane %v526, 3
    %v583 = vrot.slane %v527, 3
    %v584 = vsel %vm223, %v582, %v583
    %v585 = vrot.slane %v528, 3
    %v586 = vsel %vm223, %v583, %v585
    %v587 = vrot.slane %v529, 3
    %v588 = vsel %vm223, %v585, %v587
    %v589 = vrot.slane %v530, 3
    %v590 = vsel %vm223, %v587, %v589
    %v591 = vrot.slane %v531, 3
    %v592 = vsel %vm223, %v589, %v591
    %v593 = vrot.slane %v532, 3
    %v594 = vsel %vm223, %v591, %v593
    %v595 = vrot.slane %v533, 3
    %v596 = vsel %vm223, %v593, %v595
    %vm604 = vcmask 1043456
    %v605 = vrot.slane %v526, 4
    %v606 = vrot.slane %v527, 4
    %v607 = vsel %vm604, %v605, %v606
    %v608 = vrot.slane %v528, 4
    %v609 = vsel %vm604, %v606, %v608
    %v610 = vrot.slane %v529, 4
    %v611 = vsel %vm604, %v608, %v610
    %v612 = vrot.slane %v530, 4
    %v613 = vsel %vm604, %v610, %v612
    %v614 = vrot.slane %v531, 4
    %v615 = vsel %vm604, %v612, %v614
    %v616 = vrot.slane %v532, 4
    %v617 = vsel %vm604, %v614, %v616
    %v618 = vrot.slane %v533, 4
    %v619 = vsel %vm604, %v616, %v618
    %vm627 = vcmask 1042432
    %v628 = vrot.slane %v526, 5
    %v629 = vrot.slane %v527, 5
    %v630 = vsel %vm627, %v628, %v629
    %v631 = vrot.slane %v528, 5
    %v632 = vsel %vm627, %v629, %v631
    %v633 = vrot.slane %v529, 5
    %v634 = vsel %vm627, %v631, %v633
    %v635 = vrot.slane %v530, 5
    %v636 = vsel %vm627, %v633, %v635
    %v637 = vrot.slane %v531, 5
    %v638 = vsel %vm627, %v635, %v637
    %v639 = vrot.slane %v532, 5
    %v640 = vsel %vm627, %v637, %v639
    %v641 = vrot.slane %v533, 5
    %v642 = vsel %vm627, %v639, %v641
    %vm650 = vcmask 1041408
    %v651 = vrot.slane %v526, 6
    %v652 = vrot.slane %v527, 6
    %v653 = vsel %vm650, %v651, %v652
    %v654 = vrot.slane %v528, 6
    %v655 = vsel %vm650, %v652, %v654
    %v656 = vrot.slane %v529, 6
    %v657 = vsel %vm650, %v654, %v656
    %v658 = vrot.slane %v530, 6
    %v659 = vsel %vm650, %v656, %v658
    %v660 = vrot.slane %v531, 6
    %v661 = vsel %vm650, %v658, %v660
    %v662 = vrot.slane %v532, 6
    %v663 = vsel %vm650, %v660, %v662
    %v664 = vrot.slane %v533, 6
    %v665 = vsel %vm650, %v662, %v664
    %vm673 = vcmask 1040384
    %v674 = vrot.slane %v526, 7
    %v675 = vrot.slane %v527, 7
    %v676 = vsel %vm673, %v674, %v675
    %v677 = vrot.slane %v528, 7
    %v678 = vsel %vm673, %v675, %v677
    %v679 = vrot.slane %v529, 7
    %v680 = vsel %vm673, %v677, %v679
    %v681 = vrot.slane %v530, 7
    %v682 = vsel %vm673, %v679, %v681
    %v683 = vrot.slane %v531, 7
    %v684 = vsel %vm673, %v681, %v683
    %v685 = vrot.slane %v532, 7
    %v686 = vsel %vm673, %v683, %v685
    %v687 = vrot.slane %v533, 7
    %v688 = vsel %vm673, %v685, %v687
    %v696 = vld [vmem:[#allocation2 + $0x220] sm:$0xff]
    %v697 = vld [vmem:[#allocation2 + $0x228] sm:$0xff]
    %v698 = vld [vmem:[#allocation2 + $0x230] sm:$0xff]
    %v699 = vld [vmem:[#allocation2 + $0x238] sm:$0xff]
    %v700 = vld [vmem:[#allocation2 + $0x240] sm:$0xff]
    %v701 = vld [vmem:[#allocation2 + $0x248] sm:$0xff]
    %v702 = vld [vmem:[#allocation2 + $0x250] sm:$0xff]
    %v703 = vld [vmem:[#allocation2 + $0x258] sm:$0xff]
    %v704 = vld [vmem:[#allocation2 + $0x260] sm:$0xff]
    %v705 = vld [vmem:[#allocation2 + $0x268] sm:$0xff]
    %v706 = vld [vmem:[#allocation2 + $0x270] sm:$0xff]
    %v707 = vld [vmem:[#allocation2 + $0x278] sm:$0xff]
    %v708 = vld [vmem:[#allocation2 + $0x280] sm:$0xff]
    %v709 = vld [vmem:[#allocation2 + $0x288] sm:$0xff]
    %v710 = vld [vmem:[#allocation2 + $0x290] sm:$0xff]
    %v711 = vld [vmem:[#allocation2 + $0x298] sm:$0xff]
    %v712 = vld [vmem:[#allocation2 + $0x2a0] sm:$0xff]
    %v713 = vld [vmem:[#allocation2 + $0x2a8] sm:$0xff]
    %v714 = vld [vmem:[#allocation2 + $0x2b0] sm:$0xff]
    %v715 = vld [vmem:[#allocation2 + $0x2b8] sm:$0xff]
    %v716 = vld [vmem:[#allocation2 + $0x2c0] sm:$0xff]
    %v717 = vld [vmem:[#allocation2 + $0x2c8] sm:$0xff]
    %v718 = vld [vmem:[#allocation2 + $0x2d0] sm:$0xff]
    %v719 = vld [vmem:[#allocation2 + $0x2d8] sm:$0xff]
    %v720 = vld [vmem:[#allocation2 + $0x2e0] sm:$0xff]
    %v721 = vld [vmem:[#allocation2 + $0x2e8] sm:$0xff]
    %v722 = vld [vmem:[#allocation2 + $0x2f0] sm:$0xff]
    %v723 = vld [vmem:[#allocation2 + $0x2f8] sm:$0xff]
    %v724 = vld [vmem:[#allocation2 + $0x300] sm:$0xff]
    %v725 = vld [vmem:[#allocation2 + $0x308] sm:$0xff]
    %v726 = vld [vmem:[#allocation2 + $0x310] sm:$0xff]
    %v727 = vld [vmem:[#allocation2 + $0x318] sm:$0xff]
    %v728 = vld [vmem:[#allocation2 + $0x320] sm:$0xff]
    %v729 = vld [vmem:[#allocation2 + $0x328] sm:$0xff]
    %v730 = vld [vmem:[#allocation2 + $0x330] sm:$0xff]
    %v731 = vld [vmem:[#allocation2 + $0x338] sm:$0xff]
    %v732 = vld [vmem:[#allocation2 + $0x340] sm:$0xff]
    %v733 = vld [vmem:[#allocation2 + $0x348] sm:$0xff]
    %v734 = vld [vmem:[#allocation2 + $0x350] sm:$0xff]
    %v735 = vld [vmem:[#allocation2 + $0x358] sm:$0xff]
    %v736 = vld [vmem:[#allocation2 + $0x360] sm:$0xff]
    %v737 = vld [vmem:[#allocation2 + $0x368] sm:$0xff]
    %v738 = vld [vmem:[#allocation2 + $0x370] sm:$0xff]
    %v739 = vld [vmem:[#allocation2 + $0x378] sm:$0xff]
    %v740 = vld [vmem:[#allocation2 + $0x380] sm:$0xff]
    %v741 = vld [vmem:[#allocation2 + $0x388] sm:$0xff]
    %v742 = vld [vmem:[#allocation2 + $0x390] sm:$0xff]
    %v743 = vld [vmem:[#allocation2 + $0x398] sm:$0xff]
    %v744 = vld [vmem:[#allocation2 + $0x3a0] sm:$0xff]
    %v745 = vld [vmem:[#allocation2 + $0x3a8] sm:$0xff]
    %v746 = vld [vmem:[#allocation2 + $0x3b0] sm:$0xff]
    %v747 = vld [vmem:[#allocation2 + $0x3b8] sm:$0xff]
    %v748 = vld [vmem:[#allocation2 + $0x3c0] sm:$0xff]
    %v749 = vld [vmem:[#allocation2 + $0x3c8] sm:$0xff]
    %v750 = vld [vmem:[#allocation2 + $0x3d0] sm:$0xff]
    %v751 = vld [vmem:[#allocation2 + $0x3d8] sm:$0xff]
    %v752 = vld [vmem:[#allocation2 + $0x3e0] sm:$0xff]
    %v753 = vld [vmem:[#allocation2 + $0x3e8] sm:$0xff]
    %v754 = vld [vmem:[#allocation2 + $0x3f0] sm:$0xff]
    %v755 = vld [vmem:[#allocation2 + $0x3f8] sm:$0xff]
    %v756 = vld [vmem:[#allocation2 + $0x400] sm:$0xff]
    %v757 = vld [vmem:[#allocation2 + $0x408] sm:$0xff]
    %v758 = vld [vmem:[#allocation2 + $0x410] sm:$0xff]
    %v759 = vld [vmem:[#allocation2 + $0x418] sm:$0xff]
    %v760 = vld [vmem:[#allocation2 + $0x420] sm:$0xff]
    %v761 = vld [vmem:[#allocation2 + $0x428] sm:$0xff]
    %v762 = vld [vmem:[#allocation2 + $0x430] sm:$0xff]
    %v763 = vld [vmem:[#allocation2 + $0x438] sm:$0xff]
    %v764 = vld [vmem:[#allocation2 + $0x440] sm:$0xff]
    %v765 = vld [vmem:[#allocation2 + $0x448] sm:$0xff]
    %v766 = vld [vmem:[#allocation2 + $0x450] sm:$0xff]
    %v767 = vld [vmem:[#allocation2 + $0x458] sm:$0xff]
    %v768 = vld [vmem:[#allocation2 + $0x460] sm:$0xff]
    %v769 = vld [vmem:[#allocation2 + $0x468] sm:$0xff]
    %v770 = vld [vmem:[#allocation2 + $0x470] sm:$0xff]
    %v771 = vld [vmem:[#allocation2 + $0x478] sm:$0xff]
    %v772 = vld [vmem:[#allocation2 + $0x480] sm:$0xff]
    %v773 = vld [vmem:[#allocation2 + $0x488] sm:$0xff]
    %v774 = vld [vmem:[#allocation2 + $0x490] sm:$0xff]
    %v775 = vld [vmem:[#allocation2 + $0x498] sm:$0xff]
    %v776 = vld [vmem:[#allocation2 + $0x4a0] sm:$0xff]
    %v777 = vld [vmem:[#allocation2 + $0x4a8] sm:$0xff]
    %v778 = vld [vmem:[#allocation2 + $0x4b0] sm:$0xff]
    %v779 = vld [vmem:[#allocation2 + $0x4b8] sm:$0xff]
    %v780 = vld [vmem:[#allocation2 + $0x4c0] sm:$0xff]
    %v781 = vld [vmem:[#allocation2 + $0x4c8] sm:$0xff]
    %v782 = vld [vmem:[#allocation2 + $0x4d0] sm:$0xff]
    %v783 = vld [vmem:[#allocation2 + $0x4d8] sm:$0xff]
    %v784 = vld [vmem:[#allocation2 + $0x4e0] sm:$0xff]
    %v785 = vld [vmem:[#allocation2 + $0x4e8] sm:$0xff]
    %v786 = vld [vmem:[#allocation2 + $0x4f0] sm:$0xff]
    %v787 = vld [vmem:[#allocation2 + $0x4f8] sm:$0xff]
    %v788 = vld [vmem:[#allocation2 + $0x500] sm:$0xff]
    %v789 = vld [vmem:[#allocation2 + $0x508] sm:$0xff]
    %v790 = vld [vmem:[#allocation2 + $0x510] sm:$0xff]
    %v791 = vld [vmem:[#allocation2 + $0x518] sm:$0xff]
    %v792 = vld [vmem:[#allocation2 + $0x520] sm:$0xff]
    %v793 = vld [vmem:[#allocation2 + $0x528] sm:$0xff]
    %v794 = vld [vmem:[#allocation2 + $0x530] sm:$0xff]
    %v795 = vld [vmem:[#allocation2 + $0x538] sm:$0xff]
    %v796 = vld [vmem:[#allocation2 + $0x540] sm:$0xff]
    %v797 = vld [vmem:[#allocation2 + $0x548] sm:$0xff]
    %v798 = vld [vmem:[#allocation2 + $0x550] sm:$0xff]
    %v799 = vld [vmem:[#allocation2 + $0x558] sm:$0xff]
    %v800 = vld [vmem:[#allocation2 + $0x560] sm:$0xff]
    %v801 = vld [vmem:[#allocation2 + $0x568] sm:$0xff]
    %v802 = vld [vmem:[#allocation2 + $0x570] sm:$0xff]
    %v803 = vld [vmem:[#allocation2 + $0x578] sm:$0xff]
    %v804 = vld [vmem:[#allocation2 + $0x580] sm:$0xff]
    %v805 = vld [vmem:[#allocation2 + $0x588] sm:$0xff]
    %v806 = vld [vmem:[#allocation2 + $0x590] sm:$0xff]
    %v807 = vld [vmem:[#allocation2 + $0x598] sm:$0xff]
    %v808 = vld [vmem:[#allocation2 + $0x5a0] sm:$0xff]
    %v809 = vld [vmem:[#allocation2 + $0x5a8] sm:$0xff]
    %v810 = vld [vmem:[#allocation2 + $0x5b0] sm:$0xff]
    %v811 = vld [vmem:[#allocation2 + $0x5b8] sm:$0xff]
    %v812 = vld [vmem:[#allocation2 + $0x5c0] sm:$0xff]
    %v813 = vld [vmem:[#allocation2 + $0x5c8] sm:$0xff]
    %v814 = vld [vmem:[#allocation2 + $0x5d0] sm:$0xff]
    %v815 = vld [vmem:[#allocation2 + $0x5d8] sm:$0xff]
    %v816 = vld [vmem:[#allocation2 + $0x5e0] sm:$0xff]
    %v817 = vld [vmem:[#allocation2 + $0x5e8] sm:$0xff]
    %v818 = vld [vmem:[#allocation2 + $0x5f0] sm:$0xff]
    %v819 = vld [vmem:[#allocation2 + $0x5f8] sm:$0xff]
    %v820 = vld [vmem:[#allocation2 + $0x600] sm:$0xff]
    %v821 = vld [vmem:[#allocation2 + $0x608] sm:$0xff]
    %v822 = vld [vmem:[#allocation2 + $0x610] sm:$0xff]
    %v823 = vld [vmem:[#allocation2 + $0x618] sm:$0xff]
    %v824 = vld [vmem:[#allocation2 + $0x11b0] sm:$0x1]
    %v825 = vlaneseq
    %v826 = vshrl.u32 %v825, 7
    %v827 = vsub.s32 0, %v826
    %v828 = vrot.slane %v824, %v827
    %829 = vmatprep.subr.mxu0 0.0
    %830 = vmatpush1.msra.mxu0 %v696
    %831 = vmatprep.subr.mxu0 0.0
    %832 = vmatpush1.msra.mxu0 %v697
    %833 = vmatprep.subr.mxu0 0.0
    %834 = vmatpush1.msra.mxu0 %v698
    %835 = vmatprep.subr.mxu0 0.0
    %836 = vmatpush1.msra.mxu0 %v699
    %837 = vmatprep.subr.mxu0 0.0
    %838 = vmatpush1.msra.mxu0 %v700
    %839 = vmatprep.subr.mxu0 0.0
    %840 = vmatpush1.msra.mxu0 %v701
    %841 = vmatprep.subr.mxu0 0.0
    %842 = vmatpush1.msra.mxu0 %v702
    %843 = vmatprep.subr.mxu0 0.0
    %844 = vmatpush1.msra.mxu0 %v703
    %845 = vmatprep.subr.mxu0 0.0
    %846 = vmatpush1.msra.mxu0 %v704
    %847 = vmatprep.subr.mxu0 0.0
    %848 = vmatpush1.msra.mxu0 %v705
    %849 = vmatprep.subr.mxu0 0.0
    %850 = vmatpush1.msra.mxu0 %v706
    %851 = vmatprep.subr.mxu0 0.0
    %852 = vmatpush1.msra.mxu0 %v707
    %853 = vmatprep.subr.mxu0 0.0
    %854 = vmatpush1.msra.mxu0 %v708
    %855 = vmatprep.subr.mxu0 0.0
    %856 = vmatpush1.msra.mxu0 %v709
    %857 = vmatprep.subr.mxu0 0.0
    %858 = vmatpush1.msra.mxu0 %v710
    %859 = vmatprep.subr.mxu0 0.0
    %860 = vmatpush1.msra.mxu0 %v711
    %861 = vmatprep.subr.mxu0 0.0
    %862 = vmatpush1.msra.mxu0 %v712
    %863 = vmatprep.subr.mxu0 0.0
    %864 = vmatpush1.msra.mxu0 %v713
    %865 = vmatprep.subr.mxu0 0.0
    %866 = vmatpush1.msra.mxu0 %v714
    %867 = vmatprep.subr.mxu0 0.0
    %868 = vmatpush1.msra.mxu0 %v715
    %869 = vmatprep.subr.mxu0 0.0
    %870 = vmatpush1.msra.mxu0 %v716
    %871 = vmatprep.subr.mxu0 0.0
    %872 = vmatpush1.msra.mxu0 %v717
    %873 = vmatprep.subr.mxu0 0.0
    %874 = vmatpush1.msra.mxu0 %v718
    %875 = vmatprep.subr.mxu0 0.0
    %876 = vmatpush1.msra.mxu0 %v719
    %877 = vmatprep.subr.mxu0 0.0
    %878 = vmatpush1.msra.mxu0 %v720
    %879 = vmatprep.subr.mxu0 0.0
    %880 = vmatpush1.msra.mxu0 %v721
    %881 = vmatprep.subr.mxu0 0.0
    %882 = vmatpush1.msra.mxu0 %v722
    %883 = vmatprep.subr.mxu0 0.0
    %884 = vmatpush1.msra.mxu0 %v723
    %885 = vmatprep.subr.mxu0 0.0
    %886 = vmatpush1.msra.mxu0 %v724
    %887 = vmatprep.subr.mxu0 0.0
    %888 = vmatpush1.msra.mxu0 %v725
    %889 = vmatprep.subr.mxu0 0.0
    %890 = vmatpush1.msra.mxu0 %v726
    %891 = vmatprep.subr.mxu0 0.0
    %892 = vmatpush1.msra.mxu0 %v727
    %893 = vmatprep.mubr.f32.mxu0 %v543
    %894 = vmatmul.mubr.f32.gmra.mrb[0].mxu0 %v526
    %v895 = vpop.f32.mrb[0].mxu0
    %v896 = vadd.f32 %v828, %v895
    %v897 = vpop.f32.mrb[0].mxu0
    %898 = vmatprep.mubr.f32.mxu0 %v545
    %899 = vmatmul.mubr.f32.gmra.mrb[0].mxu0 %v527
    %v900 = vpop.f32.mrb[0].mxu0
    %v901 = vadd.f32 %v828, %v900
    %v902 = vpop.f32.mrb[0].mxu0
    %903 = vmatprep.mubr.f32.mxu0 %v547
    %904 = vmatmul.mubr.f32.gmra.mrb[0].mxu0 %v528
    %v905 = vpop.f32.mrb[0].mxu0
    %v906 = vadd.f32 %v828, %v905
    %v907 = vpop.f32.mrb[0].mxu0
    %908 = vmatprep.mubr.f32.mxu0 %v549
    %909 = vmatmul.mubr.f32.gmra.mrb[0].mxu0 %v529
    %v910 = vpop.f32.mrb[0].mxu0
    %v911 = vadd.f32 %v828, %v910
    %v912 = vpop.f32.mrb[0].mxu0
    %913 = vmatprep.mubr.f32.mxu0 %v551
    %914 = vmatmul.mubr.f32.gmra.mrb[0].mxu0 %v530
    %v915 = vpop.f32.mrb[0].mxu0
    %v916 = vadd.f32 %v828, %v915
    %v917 = vpop.f32.mrb[0].mxu0
    %918 = vmatprep.mubr.f32.mxu0 %v553
    %919 = vmatmul.mubr.f32.gmra.mrb[0].mxu0 %v531
    %v920 = vpop.f32.mrb[0].mxu0
    %v921 = vadd.f32 %v828, %v920
    %v922 = vpop.f32.mrb[0].mxu0
    %923 = vmatprep.mubr.f32.mxu0 %v552
    %924 = vmatmul.mubr.f32.gmra.mrb[0].mxu0 %v532
    %v925 = vpop.f32.mrb[0].mxu0
    %v926 = vadd.f32 %v828, %v925
    %v927 = vpop.f32.mrb[0].mxu0
    %928 = vdwg.mxu0
    %929 = vmatprep.subr.mxu0 0.0
    %930 = vmatpush1.msra.mxu0 %v728
    %931 = vmatprep.subr.mxu0 0.0
    %932 = vmatpush1.msra.mxu0 %v729
    %933 = vmatprep.subr.mxu0 0.0
    %934 = vmatpush1.msra.mxu0 %v730
    %935 = vmatprep.subr.mxu0 0.0
    %936 = vmatpush1.msra.mxu0 %v731
    %937 = vmatprep.subr.mxu0 0.0
    %938 = vmatpush1.msra.mxu0 %v732
    %939 = vmatprep.subr.mxu0 0.0
    %940 = vmatpush1.msra.mxu0 %v733
    %941 = vmatprep.subr.mxu0 0.0
    %942 = vmatpush1.msra.mxu0 %v734
    %943 = vmatprep.subr.mxu0 0.0
    %944 = vmatpush1.msra.mxu0 %v735
    %945 = vmatprep.subr.mxu0 0.0
    %946 = vmatpush1.msra.mxu0 %v736
    %947 = vmatprep.subr.mxu0 0.0
    %948 = vmatpush1.msra.mxu0 %v737
    %949 = vmatprep.subr.mxu0 0.0
    %950 = vmatpush1.msra.mxu0 %v738
    %951 = vmatprep.subr.mxu0 0.0
    %952 = vmatpush1.msra.mxu0 %v739
    %953 = vmatprep.subr.mxu0 0.0
    %954 = vmatpush1.msra.mxu0 %v740
    %955 = vmatprep.subr.mxu0 0.0
    %956 = vmatpush1.msra.mxu0 %v741
    %957 = vmatprep.subr.mxu0 0.0
    %958 = vmatpush1.msra.mxu0 %v742
    %959 = vmatprep.subr.mxu0 0.0
    %960 = vmatpush1.msra.mxu0 %v743
    %961 = vmatprep.subr.mxu0 0.0
    %962 = vmatpush1.msra.mxu0 %v744
    %963 = vmatprep.subr.mxu0 0.0
    %964 = vmatpush1.msra.mxu0 %v745
    %965 = vmatprep.subr.mxu0 0.0
    %966 = vmatpush1.msra.mxu0 %v746
    %967 = vmatprep.subr.mxu0 0.0
    %968 = vmatpush1.msra.mxu0 %v747
    %969 = vmatprep.subr.mxu0 0.0
    %970 = vmatpush1.msra.mxu0 %v748
    %971 = vmatprep.subr.mxu0 0.0
    %972 = vmatpush1.msra.mxu0 %v749
    %973 = vmatprep.subr.mxu0 0.0
    %974 = vmatpush1.msra.mxu0 %v750
    %975 = vmatprep.subr.mxu0 0.0
    %976 = vmatpush1.msra.mxu0 %v751
    %977 = vmatprep.subr.mxu0 0.0
    %978 = vmatpush1.msra.mxu0 %v752
    %979 = vmatprep.subr.mxu0 0.0
    %980 = vmatpush1.msra.mxu0 %v753
    %981 = vmatprep.subr.mxu0 0.0
    %982 = vmatpush1.msra.mxu0 %v754
    %983 = vmatprep.subr.mxu0 0.0
    %984 = vmatpush1.msra.mxu0 %v755
    %985 = vmatprep.subr.mxu0 0.0
    %986 = vmatpush1.msra.mxu0 %v756
    %987 = vmatprep.subr.mxu0 0.0
    %988 = vmatpush1.msra.mxu0 %v757
    %989 = vmatprep.subr.mxu0 0.0
    %990 = vmatpush1.msra.mxu0 %v758
    %991 = vmatprep.subr.mxu0 0.0
    %992 = vmatpush1.msra.mxu0 %v759
    %993 = vmatprep.mubr.f32.mxu0 %v584
    %994 = vmatmul.mubr.f32.gmra.mrb[0].mxu0 %v563
    %v995 = vpop.f32.mrb[0].mxu0
    %v996 = vadd.f32 %v896, %v995
    %v997 = vpop.f32.mrb[0].mxu0
    %998 = vmatprep.mubr.f32.mxu0 %v586
    %999 = vmatmul.mubr.f32.gmra.mrb[0].mxu0 %v565
    %v1000 = vpop.f32.mrb[0].mxu0
    %v1001 = vadd.f32 %v901, %v1000
    %v1002 = vpop.f32.mrb[0].mxu0
    %1003 = vmatprep.mubr.f32.mxu0 %v588
    %1004 = vmatmul.mubr.f32.gmra.mrb[0].mxu0 %v567
    %v1005 = vpop.f32.mrb[0].mxu0
    %v1006 = vadd.f32 %v906, %v1005
    %v1007 = vpop.f32.mrb[0].mxu0
    %1008 = vmatprep.mubr.f32.mxu0 %v590
    %1009 = vmatmul.mubr.f32.gmra.mrb[0].mxu0 %v569
    %v1010 = vpop.f32.mrb[0].mxu0
    %v1011 = vadd.f32 %v911, %v1010
    %v1012 = vpop.f32.mrb[0].mxu0
    %1013 = vmatprep.mubr.f32.mxu0 %v592
    %1014 = vmatmul.mubr.f32.gmra.mrb[0].mxu0 %v571
    %v1015 = vpop.f32.mrb[0].mxu0
    %v1016 = vadd.f32 %v916, %v1015
    %v1017 = vpop.f32.mrb[0].mxu0
    %1018 = vmatprep.mubr.f32.mxu0 %v594
    %1019 = vmatmul.mubr.f32.gmra.mrb[0].mxu0 %v573
    %v1020 = vpop.f32.mrb[0].mxu0
    %v1021 = vadd.f32 %v921, %v1020
    %v1022 = vpop.f32.mrb[0].mxu0
    %1023 = vmatprep.mubr.f32.mxu0 %v596
    %1024 = vmatmul.mubr.f32.gmra.mrb[0].mxu0 %v572
    %v1025 = vpop.f32.mrb[0].mxu0
    %v1026 = vadd.f32 %v926, %v1025
    %v1027 = vpop.f32.mrb[0].mxu0
    %1028 = vdwg.mxu0
    %1029 = vmatprep.subr.mxu0 0.0
    %1030 = vmatpush1.msra.mxu0 %v760
    %1031 = vmatprep.subr.mxu0 0.0
    %1032 = vmatpush1.msra.mxu0 %v761
    %1033 = vmatprep.subr.mxu0 0.0
    %1034 = vmatpush1.msra.mxu0 %v762
    %1035 = vmatprep.subr.mxu0 0.0
    %1036 = vmatpush1.msra.mxu0 %v763
    %1037 = vmatprep.subr.mxu0 0.0
    %1038 = vmatpush1.msra.mxu0 %v764
    %1039 = vmatprep.subr.mxu0 0.0
    %1040 = vmatpush1.msra.mxu0 %v765
    %1041 = vmatprep.subr.mxu0 0.0
    %1042 = vmatpush1.msra.mxu0 %v766
    %1043 = vmatprep.subr.mxu0 0.0
    %1044 = vmatpush1.msra.mxu0 %v767
    %1045 = vmatprep.subr.mxu0 0.0
    %1046 = vmatpush1.msra.mxu0 %v768
    %1047 = vmatprep.subr.mxu0 0.0
    %1048 = vmatpush1.msra.mxu0 %v769
    %1049 = vmatprep.subr.mxu0 0.0
    %1050 = vmatpush1.msra.mxu0 %v770
    %1051 = vmatprep.subr.mxu0 0.0
    %1052 = vmatpush1.msra.mxu0 %v771
    %1053 = vmatprep.subr.mxu0 0.0
    %1054 = vmatpush1.msra.mxu0 %v772
    %1055 = vmatprep.subr.mxu0 0.0
    %1056 = vmatpush1.msra.mxu0 %v773
    %1057 = vmatprep.subr.mxu0 0.0
    %1058 = vmatpush1.msra.mxu0 %v774
    %1059 = vmatprep.subr.mxu0 0.0
    %1060 = vmatpush1.msra.mxu0 %v775
    %1061 = vmatprep.subr.mxu0 0.0
    %1062 = vmatpush1.msra.mxu0 %v776
    %1063 = vmatprep.subr.mxu0 0.0
    %1064 = vmatpush1.msra.mxu0 %v777
    %1065 = vmatprep.subr.mxu0 0.0
    %1066 = vmatpush1.msra.mxu0 %v778
    %1067 = vmatprep.subr.mxu0 0.0
    %1068 = vmatpush1.msra.mxu0 %v779
    %1069 = vmatprep.subr.mxu0 0.0
    %1070 = vmatpush1.msra.mxu0 %v780
    %1071 = vmatprep.subr.mxu0 0.0
    %1072 = vmatpush1.msra.mxu0 %v781
    %1073 = vmatprep.subr.mxu0 0.0
    %1074 = vmatpush1.msra.mxu0 %v782
    %1075 = vmatprep.subr.mxu0 0.0
    %1076 = vmatpush1.msra.mxu0 %v783
    %1077 = vmatprep.subr.mxu0 0.0
    %1078 = vmatpush1.msra.mxu0 %v784
    %1079 = vmatprep.subr.mxu0 0.0
    %1080 = vmatpush1.msra.mxu0 %v785
    %1081 = vmatprep.subr.mxu0 0.0
    %1082 = vmatpush1.msra.mxu0 %v786
    %1083 = vmatprep.subr.mxu0 0.0
    %1084 = vmatpush1.msra.mxu0 %v787
    %1085 = vmatprep.subr.mxu0 0.0
    %1086 = vmatpush1.msra.mxu0 %v788
    %1087 = vmatprep.subr.mxu0 0.0
    %1088 = vmatpush1.msra.mxu0 %v789
    %1089 = vmatprep.subr.mxu0 0.0
    %1090 = vmatpush1.msra.mxu0 %v790
    %1091 = vmatprep.subr.mxu0 0.0
    %1092 = vmatpush1.msra.mxu0 %v791
    %1093 = vmatprep.mubr.f32.mxu0 %v630
    %1094 = vmatmul.mubr.f32.gmra.mrb[0].mxu0 %v607
    %v1095 = vpop.f32.mrb[0].mxu0
    %v1096 = vadd.f32 %v996, %v1095
    %v1097 = vpop.f32.mrb[0].mxu0
    %1098 = vmatprep.mubr.f32.mxu0 %v632
    %1099 = vmatmul.mubr.f32.gmra.mrb[0].mxu0 %v609
    %v1100 = vpop.f32.mrb[0].mxu0
    %v1101 = vadd.f32 %v1001, %v1100
    %v1102 = vpop.f32.mrb[0].mxu0
    %1103 = vmatprep.mubr.f32.mxu0 %v634
    %1104 = vmatmul.mubr.f32.gmra.mrb[0].mxu0 %v611
    %v1105 = vpop.f32.mrb[0].mxu0
    %v1106 = vadd.f32 %v1006, %v1105
    %v1107 = vpop.f32.mrb[0].mxu0
    %1108 = vmatprep.mubr.f32.mxu0 %v636
    %1109 = vmatmul.mubr.f32.gmra.mrb[0].mxu0 %v613
    %v1110 = vpop.f32.mrb[0].mxu0
    %v1111 = vadd.f32 %v1011, %v1110
    %v1112 = vpop.f32.mrb[0].mxu0
    %1113 = vmatprep.mubr.f32.mxu0 %v638
    %1114 = vmatmul.mubr.f32.gmra.mrb[0].mxu0 %v615
    %v1115 = vpop.f32.mrb[0].mxu0
    %v1116 = vadd.f32 %v1016, %v1115
    %v1117 = vpop.f32.mrb[0].mxu0
    %1118 = vmatprep.mubr.f32.mxu0 %v640
    %1119 = vmatmul.mubr.f32.gmra.mrb[0].mxu0 %v617
    %v1120 = vpop.f32.mrb[0].mxu0
    %v1121 = vadd.f32 %v1021, %v1120
    %v1122 = vpop.f32.mrb[0].mxu0
    %1123 = vmatprep.mubr.f32.mxu0 %v642
    %1124 = vmatmul.mubr.f32.gmra.mrb[0].mxu0 %v619
    %v1125 = vpop.f32.mrb[0].mxu0
    %v1126 = vadd.f32 %v1026, %v1125
    %v1127 = vpop.f32.mrb[0].mxu0
    %1128 = vdwg.mxu0
    %1129 = vmatprep.subr.mxu0 0.0
    %1130 = vmatpush1.msra.mxu0 %v792
    %1131 = vmatprep.subr.mxu0 0.0
    %1132 = vmatpush1.msra.mxu0 %v793
    %1133 = vmatprep.subr.mxu0 0.0
    %1134 = vmatpush1.msra.mxu0 %v794
    %1135 = vmatprep.subr.mxu0 0.0
    %1136 = vmatpush1.msra.mxu0 %v795
    %1137 = vmatprep.subr.mxu0 0.0
    %1138 = vmatpush1.msra.mxu0 %v796
    %1139 = vmatprep.subr.mxu0 0.0
    %1140 = vmatpush1.msra.mxu0 %v797
    %1141 = vmatprep.subr.mxu0 0.0
    %1142 = vmatpush1.msra.mxu0 %v798
    %1143 = vmatprep.subr.mxu0 0.0
    %1144 = vmatpush1.msra.mxu0 %v799
    %1145 = vmatprep.subr.mxu0 0.0
    %1146 = vmatpush1.msra.mxu0 %v800
    %1147 = vmatprep.subr.mxu0 0.0
    %1148 = vmatpush1.msra.mxu0 %v801
    %1149 = vmatprep.subr.mxu0 0.0
    %1150 = vmatpush1.msra.mxu0 %v802
    %1151 = vmatprep.subr.mxu0 0.0
    %1152 = vmatpush1.msra.mxu0 %v803
    %1153 = vmatprep.subr.mxu0 0.0
    %1154 = vmatpush1.msra.mxu0 %v804
    %1155 = vmatprep.subr.mxu0 0.0
    %1156 = vmatpush1.msra.mxu0 %v805
    %1157 = vmatprep.subr.mxu0 0.0
    %1158 = vmatpush1.msra.mxu0 %v806
    %1159 = vmatprep.subr.mxu0 0.0
    %1160 = vmatpush1.msra.mxu0 %v807
    %1161 = vmatprep.subr.mxu0 0.0
    %1162 = vmatpush1.msra.mxu0 %v808
    %1163 = vmatprep.subr.mxu0 0.0
    %1164 = vmatpush1.msra.mxu0 %v809
    %1165 = vmatprep.subr.mxu0 0.0
    %1166 = vmatpush1.msra.mxu0 %v810
    %1167 = vmatprep.subr.mxu0 0.0
    %1168 = vmatpush1.msra.mxu0 %v811
    %1169 = vmatprep.subr.mxu0 0.0
    %1170 = vmatpush1.msra.mxu0 %v812
    %1171 = vmatprep.subr.mxu0 0.0
    %1172 = vmatpush1.msra.mxu0 %v813
    %1173 = vmatprep.subr.mxu0 0.0
    %1174 = vmatpush1.msra.mxu0 %v814
    %1175 = vmatprep.subr.mxu0 0.0
    %1176 = vmatpush1.msra.mxu0 %v815
    %1177 = vmatprep.subr.mxu0 0.0
    %1178 = vmatpush1.msra.mxu0 %v816
    %1179 = vmatprep.subr.mxu0 0.0
    %1180 = vmatpush1.msra.mxu0 %v817
    %1181 = vmatprep.subr.mxu0 0.0
    %1182 = vmatpush1.msra.mxu0 %v818
    %1183 = vmatprep.subr.mxu0 0.0
    %1184 = vmatpush1.msra.mxu0 %v819
    %1185 = vmatprep.subr.mxu0 0.0
    %1186 = vmatpush1.msra.mxu0 %v820
    %1187 = vmatprep.subr.mxu0 0.0
    %1188 = vmatpush1.msra.mxu0 %v821
    %1189 = vmatprep.subr.mxu0 0.0
    %1190 = vmatpush1.msra.mxu0 %v822
    %1191 = vmatprep.subr.mxu0 0.0
    %1192 = vmatpush1.msra.mxu0 %v823
    %1193 = vmatprep.mubr.f32.mxu0 %v676
    %1194 = vmatmul.mubr.f32.gmra.mrb[0].mxu0 %v653
    %v1195 = vpop.f32.mrb[0].mxu0
    %v1196 = vadd.f32 %v1096, %v1195
    %v1197 = vpop.f32.mrb[0].mxu0
    %1198 = vmatprep.mubr.f32.mxu0 %v678
    %1199 = vmatmul.mubr.f32.gmra.mrb[0].mxu0 %v655
    %v1200 = vpop.f32.mrb[0].mxu0
    %v1201 = vadd.f32 %v1101, %v1200
    %v1202 = vpop.f32.mrb[0].mxu0
    %1203 = vmatprep.mubr.f32.mxu0 %v680
    %1204 = vmatmul.mubr.f32.gmra.mrb[0].mxu0 %v657
    %v1205 = vpop.f32.mrb[0].mxu0
    %v1206 = vadd.f32 %v1106, %v1205
    %v1207 = vpop.f32.mrb[0].mxu0
    %1208 = vmatprep.mubr.f32.mxu0 %v682
    %1209 = vmatmul.mubr.f32.gmra.mrb[0].mxu0 %v659
    %v1210 = vpop.f32.mrb[0].mxu0
    %v1211 = vadd.f32 %v1111, %v1210
    %v1212 = vpop.f32.mrb[0].mxu0
    %1213 = vmatprep.mubr.f32.mxu0 %v684
    %1214 = vmatmul.mubr.f32.gmra.mrb[0].mxu0 %v661
    %v1215 = vpop.f32.mrb[0].mxu0
    %v1216 = vadd.f32 %v1116, %v1215
    %v1217 = vpop.f32.mrb[0].mxu0
    %1218 = vmatprep.mubr.f32.mxu0 %v686
    %1219 = vmatmul.mubr.f32.gmra.mrb[0].mxu0 %v663
    %v1220 = vpop.f32.mrb[0].mxu0
    %v1221 = vadd.f32 %v1121, %v1220
    %v1222 = vpop.f32.mrb[0].mxu0
    %1223 = vmatprep.mubr.f32.mxu0 %v688
    %1224 = vmatmul.mubr.f32.gmra.mrb[0].mxu0 %v665
    %v1225 = vpop.f32.mrb[0].mxu0
    %v1226 = vadd.f32 %v1126, %v1225
    %v1227 = vpop.f32.mrb[0].mxu0
    %1228 = vdwg.mxu0
    %v1229 = vmax.f32 %v1196, 0.0
    %v1230 = vmax.f32 %v1201, 0.0
    %v1231 = vmax.f32 %v1206, 0.0
    %v1232 = vmax.f32 %v1211, 0.0
    %v1233 = vmax.f32 %v1216, 0.0
    %v1234 = vmax.f32 %v1221, 0.0
    %v1235 = vmax.f32 %v1226, 0.0
    %v1242 = vrot.slane %v1229, 1
    %v1243 = vrot.slane %v1230, 1
    %v1244 = vsel %vm175, %v1242, %v1243
    %v1245 = vrot.slane %v1231, 1
    %v1246 = vsel %vm175, %v1243, %v1245
    %v1247 = vrot.slane %v1232, 1
    %v1248 = vsel %vm175, %v1245, %v1247
    %v1249 = vrot.slane %v1233, 1
    %v1250 = vsel %vm175, %v1247, %v1249
    %v1251 = vrot.slane %v1234, 1
    %v1252 = vsel %vm175, %v1249, %v1251
    %v1259 = vrot.slane %v1229, 2
    %v1260 = vrot.slane %v1230, 2
    %v1261 = vsel %vm199, %v1259, %v1260
    %v1262 = vrot.slane %v1231, 2
    %v1263 = vsel %vm199, %v1260, %v1262
    %v1264 = vrot.slane %v1232, 2
    %v1265 = vsel %vm199, %v1262, %v1264
    %v1266 = vrot.slane %v1233, 2
    %v1267 = vsel %vm199, %v1264, %v1266
    %v1268 = vrot.slane %v1234, 2
    %v1269 = vsel %vm199, %v1266, %v1268
    %v1276 = vrot.slane %v1229, 3
    %v1277 = vrot.slane %v1230, 3
    %v1278 = vsel %vm223, %v1276, %v1277
    %v1279 = vrot.slane %v1231, 3
    %v1280 = vsel %vm223, %v1277, %v1279
    %v1281 = vrot.slane %v1232, 3
    %v1282 = vsel %vm223, %v1279, %v1281
    %v1283 = vrot.slane %v1233, 3
    %v1284 = vsel %vm223, %v1281, %v1283
    %v1285 = vrot.slane %v1234, 3
    %v1286 = vsel %vm223, %v1283, %v1285
    %v1293 = vrot.slane %v1229, 4
    %v1294 = vrot.slane %v1230, 4
    %v1295 = vsel %vm604, %v1293, %v1294
    %v1296 = vrot.slane %v1231, 4
    %v1297 = vsel %vm604, %v1294, %v1296
    %v1298 = vrot.slane %v1232, 4
    %v1299 = vsel %vm604, %v1296, %v1298
    %v1300 = vrot.slane %v1233, 4
    %v1301 = vsel %vm604, %v1298, %v1300
    %v1302 = vrot.slane %v1234, 4
    %v1303 = vsel %vm604, %v1300, %v1302
    %v1310 = vrot.slane %v1229, 5
    %v1311 = vrot.slane %v1230, 5
    %v1312 = vsel %vm627, %v1310, %v1311
    %v1313 = vrot.slane %v1231, 5
    %v1314 = vsel %vm627, %v1311, %v1313
    %v1315 = vrot.slane %v1232, 5
    %v1316 = vsel %vm627, %v1313, %v1315
    %v1317 = vrot.slane %v1233, 5
    %v1318 = vsel %vm627, %v1315, %v1317
    %v1319 = vrot.slane %v1234, 5
    %v1320 = vsel %vm627, %v1317, %v1319
    %v1328 = vrot.slane %v1229, 6
    %v1329 = vrot.slane %v1230, 6
    %v1330 = vsel %vm650, %v1328, %v1329
    %v1331 = vrot.slane %v1231, 6
    %v1332 = vsel %vm650, %v1329, %v1331
    %v1333 = vrot.slane %v1232, 6
    %v1334 = vsel %vm650, %v1331, %v1333
    %v1335 = vrot.slane %v1233, 6
    %v1336 = vsel %vm650, %v1333, %v1335
    %v1337 = vrot.slane %v1234, 6
    %v1338 = vsel %vm650, %v1335, %v1337
    %v1339 = vrot.slane %v1235, 6
    %v1340 = vsel %vm650, %v1337, %v1339
    %v1347 = vrot.slane %v1229, 7
    %v1348 = vrot.slane %v1230, 7
    %v1349 = vsel %vm673, %v1347, %v1348
    %v1350 = vrot.slane %v1231, 7
    %v1351 = vsel %vm673, %v1348, %v1350
    %v1352 = vrot.slane %v1232, 7
    %v1353 = vsel %vm673, %v1350, %v1352
    %v1354 = vrot.slane %v1233, 7
    %v1355 = vsel %vm673, %v1352, %v1354
    %v1356 = vrot.slane %v1234, 7
    %v1357 = vsel %vm673, %v1354, %v1356
    %v1358 = vrot.slane %v1235, 7
    %v1359 = vsel %vm673, %v1356, %v1358
    %v1366 = vrot.slane %v1235, 1
    %v1367 = vsel %vm175, %v1251, %v1366
    %v1370 = vrot.slane %v1235, 2
    %v1371 = vsel %vm199, %v1268, %v1370
    %v1374 = vrot.slane %v1235, 3
    %v1375 = vsel %vm223, %v1285, %v1374
    %v1378 = vld [vmem:[#allocation2 + $0x620] sm:$0xff]
    %v1379 = vld [vmem:[#allocation2 + $0x628] sm:$0xff]
    %v1380 = vld [vmem:[#allocation2 + $0x630] sm:$0xff]
    %v1381 = vld [vmem:[#allocation2 + $0x638] sm:$0xff]
    %v1382 = vld [vmem:[#allocation2 + $0x640] sm:$0xff]
    %v1383 = vld [vmem:[#allocation2 + $0x648] sm:$0xff]
    %v1384 = vld [vmem:[#allocation2 + $0x650] sm:$0xff]
    %v1385 = vld [vmem:[#allocation2 + $0x658] sm:$0xff]
    %v1386 = vld [vmem:[#allocation2 + $0x660] sm:$0xff]
    %v1387 = vld [vmem:[#allocation2 + $0x668] sm:$0xff]
    %v1388 = vld [vmem:[#allocation2 + $0x670] sm:$0xff]
    %v1389 = vld [vmem:[#allocation2 + $0x678] sm:$0xff]
    %v1390 = vld [vmem:[#allocation2 + $0x680] sm:$0xff]
    %v1391 = vld [vmem:[#allocation2 + $0x688] sm:$0xff]
    %v1392 = vld [vmem:[#allocation2 + $0x690] sm:$0xff]
    %v1393 = vld [vmem:[#allocation2 + $0x698] sm:$0xff]
    %v1394 = vld [vmem:[#allocation2 + $0x6a0] sm:$0xff]
    %v1395 = vld [vmem:[#allocation2 + $0x6a8] sm:$0xff]
    %v1396 = vld [vmem:[#allocation2 + $0x6b0] sm:$0xff]
    %v1397 = vld [vmem:[#allocation2 + $0x6b8] sm:$0xff]
    %v1398 = vld [vmem:[#allocation2 + $0x6c0] sm:$0xff]
    %v1399 = vld [vmem:[#allocation2 + $0x6c8] sm:$0xff]
    %v1400 = vld [vmem:[#allocation2 + $0x6d0] sm:$0xff]
    %v1401 = vld [vmem:[#allocation2 + $0x6d8] sm:$0xff]
    %v1402 = vld [vmem:[#allocation2 + $0x6e0] sm:$0xff]
    %v1403 = vld [vmem:[#allocation2 + $0x6e8] sm:$0xff]
    %v1404 = vld [vmem:[#allocation2 + $0x6f0] sm:$0xff]
    %v1405 = vld [vmem:[#allocation2 + $0x6f8] sm:$0xff]
    %v1406 = vld [vmem:[#allocation2 + $0x700] sm:$0xff]
    %v1407 = vld [vmem:[#allocation2 + $0x708] sm:$0xff]
    %v1408 = vld [vmem:[#allocation2 + $0x710] sm:$0xff]
    %v1409 = vld [vmem:[#allocation2 + $0x718] sm:$0xff]
    %v1410 = vld [vmem:[#allocation2 + $0x720] sm:$0xff]
    %v1411 = vld [vmem:[#allocation2 + $0x728] sm:$0xff]
    %v1412 = vld [vmem:[#allocation2 + $0x730] sm:$0xff]
    %v1413 = vld [vmem:[#allocation2 + $0x738] sm:$0xff]
    %v1414 = vld [vmem:[#allocation2 + $0x740] sm:$0xff]
    %v1415 = vld [vmem:[#allocation2 + $0x748] sm:$0xff]
    %v1416 = vld [vmem:[#allocation2 + $0x750] sm:$0xff]
    %v1417 = vld [vmem:[#allocation2 + $0x758] sm:$0xff]
    %v1418 = vld [vmem:[#allocation2 + $0x760] sm:$0xff]
    %v1419 = vld [vmem:[#allocation2 + $0x768] sm:$0xff]
    %v1420 = vld [vmem:[#allocation2 + $0x770] sm:$0xff]
    %v1421 = vld [vmem:[#allocation2 + $0x778] sm:$0xff]
    %v1422 = vld [vmem:[#allocation2 + $0x780] sm:$0xff]
    %v1423 = vld [vmem:[#allocation2 + $0x788] sm:$0xff]
    %v1424 = vld [vmem:[#allocation2 + $0x790] sm:$0xff]
    %v1425 = vld [vmem:[#allocation2 + $0x798] sm:$0xff]
    %v1426 = vld [vmem:[#allocation2 + $0x7a0] sm:$0xff]
    %v1427 = vld [vmem:[#allocation2 + $0x7a8] sm:$0xff]
    %v1428 = vld [vmem:[#allocation2 + $0x7b0] sm:$0xff]
    %v1429 = vld [vmem:[#allocation2 + $0x7b8] sm:$0xff]
    %v1430 = vld [vmem:[#allocation2 + $0x7c0] sm:$0xff]
    %v1431 = vld [vmem:[#allocation2 + $0x7c8] sm:$0xff]
    %v1432 = vld [vmem:[#allocation2 + $0x7d0] sm:$0xff]
    %v1433 = vld [vmem:[#allocation2 + $0x7d8] sm:$0xff]
    %v1434 = vld [vmem:[#allocation2 + $0x7e0] sm:$0xff]
    %v1435 = vld [vmem:[#allocation2 + $0x7e8] sm:$0xff]
    %v1436 = vld [vmem:[#allocation2 + $0x7f0] sm:$0xff]
    %v1437 = vld [vmem:[#allocation2 + $0x7f8] sm:$0xff]
    %v1438 = vld [vmem:[#allocation2 + $0x800] sm:$0xff]
    %v1439 = vld [vmem:[#allocation2 + $0x808] sm:$0xff]
    %v1440 = vld [vmem:[#allocation2 + $0x810] sm:$0xff]
    %v1441 = vld [vmem:[#allocation2 + $0x818] sm:$0xff]
    %v1442 = vld [vmem:[#allocation2 + $0x820] sm:$0xff]
    %v1443 = vld [vmem:[#allocation2 + $0x828] sm:$0xff]
    %v1444 = vld [vmem:[#allocation2 + $0x830] sm:$0xff]
    %v1445 = vld [vmem:[#allocation2 + $0x838] sm:$0xff]
    %v1446 = vld [vmem:[#allocation2 + $0x840] sm:$0xff]
    %v1447 = vld [vmem:[#allocation2 + $0x848] sm:$0xff]
    %v1448 = vld [vmem:[#allocation2 + $0x850] sm:$0xff]
    %v1449 = vld [vmem:[#allocation2 + $0x858] sm:$0xff]
    %v1450 = vld [vmem:[#allocation2 + $0x860] sm:$0xff]
    %v1451 = vld [vmem:[#allocation2 + $0x868] sm:$0xff]
    %v1452 = vld [vmem:[#allocation2 + $0x870] sm:$0xff]
    %v1453 = vld [vmem:[#allocation2 + $0x878] sm:$0xff]
    %v1454 = vld [vmem:[#allocation2 + $0x880] sm:$0xff]
    %v1455 = vld [vmem:[#allocation2 + $0x888] sm:$0xff]
    %v1456 = vld [vmem:[#allocation2 + $0x890] sm:$0xff]
    %v1457 = vld [vmem:[#allocation2 + $0x898] sm:$0xff]
    %v1458 = vld [vmem:[#allocation2 + $0x8a0] sm:$0xff]
    %v1459 = vld [vmem:[#allocation2 + $0x8a8] sm:$0xff]
    %v1460 = vld [vmem:[#allocation2 + $0x8b0] sm:$0xff]
    %v1461 = vld [vmem:[#allocation2 + $0x8b8] sm:$0xff]
    %v1462 = vld [vmem:[#allocation2 + $0x8c0] sm:$0xff]
    %v1463 = vld [vmem:[#allocation2 + $0x8c8] sm:$0xff]
    %v1464 = vld [vmem:[#allocation2 + $0x8d0] sm:$0xff]
    %v1465 = vld [vmem:[#allocation2 + $0x8d8] sm:$0xff]
    %v1466 = vld [vmem:[#allocation2 + $0x8e0] sm:$0xff]
    %v1467 = vld [vmem:[#allocation2 + $0x8e8] sm:$0xff]
    %v1468 = vld [vmem:[#allocation2 + $0x8f0] sm:$0xff]
    %v1469 = vld [vmem:[#allocation2 + $0x8f8] sm:$0xff]
    %v1470 = vld [vmem:[#allocation2 + $0x900] sm:$0xff]
    %v1471 = vld [vmem:[#allocation2 + $0x908] sm:$0xff]
    %v1472 = vld [vmem:[#allocation2 + $0x910] sm:$0xff]
    %v1473 = vld [vmem:[#allocation2 + $0x918] sm:$0xff]
    %v1474 = vld [vmem:[#allocation2 + $0x920] sm:$0xff]
    %v1475 = vld [vmem:[#allocation2 + $0x928] sm:$0xff]
    %v1476 = vld [vmem:[#allocation2 + $0x930] sm:$0xff]
    %v1477 = vld [vmem:[#allocation2 + $0x938] sm:$0xff]
    %v1478 = vld [vmem:[#allocation2 + $0x940] sm:$0xff]
    %v1479 = vld [vmem:[#allocation2 + $0x948] sm:$0xff]
    %v1480 = vld [vmem:[#allocation2 + $0x950] sm:$0xff]
    %v1481 = vld [vmem:[#allocation2 + $0x958] sm:$0xff]
    %v1482 = vld [vmem:[#allocation2 + $0x960] sm:$0xff]
    %v1483 = vld [vmem:[#allocation2 + $0x968] sm:$0xff]
    %v1484 = vld [vmem:[#allocation2 + $0x970] sm:$0xff]
    %v1485 = vld [vmem:[#allocation2 + $0x978] sm:$0xff]
    %v1486 = vld [vmem:[#allocation2 + $0x980] sm:$0xff]
    %v1487 = vld [vmem:[#allocation2 + $0x988] sm:$0xff]
    %v1488 = vld [vmem:[#allocation2 + $0x990] sm:$0xff]
    %v1489 = vld [vmem:[#allocation2 + $0x998] sm:$0xff]
    %v1490 = vld [vmem:[#allocation2 + $0x9a0] sm:$0xff]
    %v1491 = vld [vmem:[#allocation2 + $0x9a8] sm:$0xff]
    %v1492 = vld [vmem:[#allocation2 + $0x9b0] sm:$0xff]
    %v1493 = vld [vmem:[#allocation2 + $0x9b8] sm:$0xff]
    %v1494 = vld [vmem:[#allocation2 + $0x9c0] sm:$0xff]
    %v1495 = vld [vmem:[#allocation2 + $0x9c8] sm:$0xff]
    %v1496 = vld [vmem:[#allocation2 + $0x9d0] sm:$0xff]
    %v1497 = vld [vmem:[#allocation2 + $0x9d8] sm:$0xff]
    %v1498 = vld [vmem:[#allocation2 + $0x9e0] sm:$0xff]
    %v1499 = vld [vmem:[#allocation2 + $0x9e8] sm:$0xff]
    %v1500 = vld [vmem:[#allocation2 + $0x9f0] sm:$0xff]
    %v1501 = vld [vmem:[#allocation2 + $0x9f8] sm:$0xff]
    %v1502 = vld [vmem:[#allocation2 + $0xa00] sm:$0xff]
    %v1503 = vld [vmem:[#allocation2 + $0xa08] sm:$0xff]
    %v1504 = vld [vmem:[#allocation2 + $0xa10] sm:$0xff]
    %v1505 = vld [vmem:[#allocation2 + $0xa18] sm:$0xff]
    %v1506 = vld [vmem:[#allocation2 + $0xa20] sm:$0xff]
    %v1507 = vld [vmem:[#allocation2 + $0xa28] sm:$0xff]
    %v1508 = vld [vmem:[#allocation2 + $0xa30] sm:$0xff]
    %v1509 = vld [vmem:[#allocation2 + $0xa38] sm:$0xff]
    %v1510 = vld [vmem:[#allocation2 + $0xa40] sm:$0xff]
    %v1511 = vld [vmem:[#allocation2 + $0xa48] sm:$0xff]
    %v1512 = vld [vmem:[#allocation2 + $0xa50] sm:$0xff]
    %v1513 = vld [vmem:[#allocation2 + $0xa58] sm:$0xff]
    %v1514 = vld [vmem:[#allocation2 + $0xa60] sm:$0xff]
    %v1515 = vld [vmem:[#allocation2 + $0xa68] sm:$0xff]
    %v1516 = vld [vmem:[#allocation2 + $0xa70] sm:$0xff]
    %v1517 = vld [vmem:[#allocation2 + $0xa78] sm:$0xff]
    %v1518 = vld [vmem:[#allocation2 + $0xa80] sm:$0xff]
    %v1519 = vld [vmem:[#allocation2 + $0xa88] sm:$0xff]
    %v1520 = vld [vmem:[#allocation2 + $0xa90] sm:$0xff]
    %v1521 = vld [vmem:[#allocation2 + $0xa98] sm:$0xff]
    %v1522 = vld [vmem:[#allocation2 + $0xaa0] sm:$0xff]
    %v1523 = vld [vmem:[#allocation2 + $0xaa8] sm:$0xff]
    %v1524 = vld [vmem:[#allocation2 + $0xab0] sm:$0xff]
    %v1525 = vld [vmem:[#allocation2 + $0xab8] sm:$0xff]
    %v1526 = vld [vmem:[#allocation2 + $0xac0] sm:$0xff]
    %v1527 = vld [vmem:[#allocation2 + $0xac8] sm:$0xff]
    %v1528 = vld [vmem:[#allocation2 + $0xad0] sm:$0xff]
    %v1529 = vld [vmem:[#allocation2 + $0xad8] sm:$0xff]
    %v1530 = vld [vmem:[#allocation2 + $0xae0] sm:$0xff]
    %v1531 = vld [vmem:[#allocation2 + $0xae8] sm:$0xff]
    %v1532 = vld [vmem:[#allocation2 + $0xaf0] sm:$0xff]
    %v1533 = vld [vmem:[#allocation2 + $0xaf8] sm:$0xff]
    %v1534 = vld [vmem:[#allocation2 + $0xb00] sm:$0xff]
    %v1535 = vld [vmem:[#allocation2 + $0xb08] sm:$0xff]
    %v1536 = vld [vmem:[#allocation2 + $0xb10] sm:$0xff]
    %v1537 = vld [vmem:[#allocation2 + $0xb18] sm:$0xff]
    %v1538 = vld [vmem:[#allocation2 + $0xb20] sm:$0xff]
    %v1539 = vld [vmem:[#allocation2 + $0xb28] sm:$0xff]
    %v1540 = vld [vmem:[#allocation2 + $0xb30] sm:$0xff]
    %v1541 = vld [vmem:[#allocation2 + $0xb38] sm:$0xff]
    %v1542 = vld [vmem:[#allocation2 + $0xb40] sm:$0xff]
    %v1543 = vld [vmem:[#allocation2 + $0xb48] sm:$0xff]
    %v1544 = vld [vmem:[#allocation2 + $0xb50] sm:$0xff]
    %v1545 = vld [vmem:[#allocation2 + $0xb58] sm:$0xff]
    %v1546 = vld [vmem:[#allocation2 + $0xb60] sm:$0xff]
    %v1547 = vld [vmem:[#allocation2 + $0xb68] sm:$0xff]
    %v1548 = vld [vmem:[#allocation2 + $0xb70] sm:$0xff]
    %v1549 = vld [vmem:[#allocation2 + $0xb78] sm:$0xff]
    %v1550 = vld [vmem:[#allocation2 + $0xb80] sm:$0xff]
    %v1551 = vld [vmem:[#allocation2 + $0xb88] sm:$0xff]
    %v1552 = vld [vmem:[#allocation2 + $0xb90] sm:$0xff]
    %v1553 = vld [vmem:[#allocation2 + $0xb98] sm:$0xff]
    %v1554 = vld [vmem:[#allocation2 + $0xba0] sm:$0xff]
    %v1555 = vld [vmem:[#allocation2 + $0xba8] sm:$0xff]
    %v1556 = vld [vmem:[#allocation2 + $0xbb0] sm:$0xff]
    %v1557 = vld [vmem:[#allocation2 + $0xbb8] sm:$0xff]
    %v1558 = vld [vmem:[#allocation2 + $0xbc0] sm:$0xff]
    %v1559 = vld [vmem:[#allocation2 + $0xbc8] sm:$0xff]
    %v1560 = vld [vmem:[#allocation2 + $0xbd0] sm:$0xff]
    %v1561 = vld [vmem:[#allocation2 + $0xbd8] sm:$0xff]
    %v1562 = vld [vmem:[#allocation2 + $0xbe0] sm:$0xff]
    %v1563 = vld [vmem:[#allocation2 + $0xbe8] sm:$0xff]
    %v1564 = vld [vmem:[#allocation2 + $0xbf0] sm:$0xff]
    %v1565 = vld [vmem:[#allocation2 + $0xbf8] sm:$0xff]
    %v1566 = vld [vmem:[#allocation2 + $0xc00] sm:$0xff]
    %v1567 = vld [vmem:[#allocation2 + $0xc08] sm:$0xff]
    %v1568 = vld [vmem:[#allocation2 + $0xc10] sm:$0xff]
    %v1569 = vld [vmem:[#allocation2 + $0xc18] sm:$0xff]
    %v1570 = vld [vmem:[#allocation2 + $0x11b8] sm:$0x1]
    %v1571 = vlaneseq
    %v1572 = vshrl.u32 %v1571, 7
    %v1573 = vsub.s32 0, %v1572
    %v1574 = vrot.slane %v1570, %v1573
    %1575 = vmatprep.subr.mxu0 0.0
    %1576 = vmatpush1.msra.mxu0 %v1378
    %1577 = vmatprep.subr.mxu0 0.0
    %1578 = vmatpush1.msra.mxu0 %v1379
    %1579 = vmatprep.subr.mxu0 0.0
    %1580 = vmatpush1.msra.mxu0 %v1380
    %1581 = vmatprep.subr.mxu0 0.0
    %1582 = vmatpush1.msra.mxu0 %v1381
    %1583 = vmatprep.subr.mxu0 0.0
    %1584 = vmatpush1.msra.mxu0 %v1382
    %1585 = vmatprep.subr.mxu0 0.0
    %1586 = vmatpush1.msra.mxu0 %v1383
    %1587 = vmatprep.subr.mxu0 0.0
    %1588 = vmatpush1.msra.mxu0 %v1384
    %1589 = vmatprep.subr.mxu0 0.0
    %1590 = vmatpush1.msra.mxu0 %v1385
    %1591 = vmatprep.subr.mxu0 0.0
    %1592 = vmatpush1.msra.mxu0 %v1386
    %1593 = vmatprep.subr.mxu0 0.0
    %1594 = vmatpush1.msra.mxu0 %v1387
    %1595 = vmatprep.subr.mxu0 0.0
    %1596 = vmatpush1.msra.mxu0 %v1388
    %1597 = vmatprep.subr.mxu0 0.0
    %1598 = vmatpush1.msra.mxu0 %v1389
    %1599 = vmatprep.subr.mxu0 0.0
    %1600 = vmatpush1.msra.mxu0 %v1390
    %1601 = vmatprep.subr.mxu0 0.0
    %1602 = vmatpush1.msra.mxu0 %v1391
    %1603 = vmatprep.subr.mxu0 0.0
    %1604 = vmatpush1.msra.mxu0 %v1392
    %1605 = vmatprep.subr.mxu0 0.0
    %1606 = vmatpush1.msra.mxu0 %v1393
    %1607 = vmatprep.subr.mxu0 0.0
    %1608 = vmatpush1.msra.mxu0 %v1394
    %1609 = vmatprep.subr.mxu0 0.0
    %1610 = vmatpush1.msra.mxu0 %v1395
    %1611 = vmatprep.subr.mxu0 0.0
    %1612 = vmatpush1.msra.mxu0 %v1396
    %1613 = vmatprep.subr.mxu0 0.0
    %1614 = vmatpush1.msra.mxu0 %v1397
    %1615 = vmatprep.subr.mxu0 0.0
    %1616 = vmatpush1.msra.mxu0 %v1398
    %1617 = vmatprep.subr.mxu0 0.0
    %1618 = vmatpush1.msra.mxu0 %v1399
    %1619 = vmatprep.subr.mxu0 0.0
    %1620 = vmatpush1.msra.mxu0 %v1400
    %1621 = vmatprep.subr.mxu0 0.0
    %1622 = vmatpush1.msra.mxu0 %v1401
    %1623 = vmatprep.subr.mxu0 0.0
    %1624 = vmatpush1.msra.mxu0 %v1402
    %1625 = vmatprep.subr.mxu0 0.0
    %1626 = vmatpush1.msra.mxu0 %v1403
    %1627 = vmatprep.subr.mxu0 0.0
    %1628 = vmatpush1.msra.mxu0 %v1404
    %1629 = vmatprep.subr.mxu0 0.0
    %1630 = vmatpush1.msra.mxu0 %v1405
    %1631 = vmatprep.subr.mxu0 0.0
    %1632 = vmatpush1.msra.mxu0 %v1406
    %1633 = vmatprep.subr.mxu0 0.0
    %1634 = vmatpush1.msra.mxu0 %v1407
    %1635 = vmatprep.subr.mxu0 0.0
    %1636 = vmatpush1.msra.mxu0 %v1408
    %1637 = vmatprep.subr.mxu0 0.0
    %1638 = vmatpush1.msra.mxu0 %v1409
    %1639 = vmatprep.mubr.f32.mxu0 %v1244
    %1640 = vmatmul.mubr.f32.gmra.mrb[0].mxu0 %v1229
    %v1641 = vpop.f32.mrb[0].mxu0
    %v1642 = vadd.f32 %v1574, %v1641
    %v1643 = vpop.f32.mrb[0].mxu0
    %1644 = vmatprep.mubr.f32.mxu0 %v1246
    %1645 = vmatmul.mubr.f32.gmra.mrb[0].mxu0 %v1230
    %v1646 = vpop.f32.mrb[0].mxu0
    %v1647 = vadd.f32 %v1574, %v1646
    %v1648 = vpop.f32.mrb[0].mxu0
    %1649 = vmatprep.mubr.f32.mxu0 %v1248
    %1650 = vmatmul.mubr.f32.gmra.mrb[0].mxu0 %v1231
    %v1651 = vpop.f32.mrb[0].mxu0
    %v1652 = vpop.f32.mrb[0].mxu0
    %1653 = vmatprep.mubr.f32.mxu0 %v1250
    %1654 = vmatmul.mubr.f32.gmra.mrb[0].mxu0 %v1232
    %v1655 = vpop.f32.mrb[0].mxu0
    %v1656 = vpop.f32.mrb[0].mxu0
    %1657 = vmatprep.mubr.f32.mxu0 %v1252
    %1658 = vmatmul.mubr.f32.gmra.mrb[0].mxu0 %v1233
    %v1659 = vpop.f32.mrb[0].mxu0
    %v1660 = vadd.f32 %v1574, %v1659
    %v1661 = vpop.f32.mrb[0].mxu0
    %1662 = vmatprep.mubr.f32.mxu0 %v1251
    %1663 = vmatmul.mubr.f32.gmra.mrb[0].mxu0 %v1234
    %v1664 = vpop.f32.mrb[0].mxu0
    %v1665 = vadd.f32 %v1574, %v1664
    %v1666 = vpop.f32.mrb[0].mxu0
    %1667 = vdwg.mxu0
    %1668 = vmatprep.subr.mxu0 0.0
    %1669 = vmatpush1.msra.mxu0 %v1410
    %1670 = vmatprep.subr.mxu0 0.0
    %1671 = vmatpush1.msra.mxu0 %v1411
    %1672 = vmatprep.subr.mxu0 0.0
    %1673 = vmatpush1.msra.mxu0 %v1412
    %1674 = vmatprep.subr.mxu0 0.0
    %1675 = vmatpush1.msra.mxu0 %v1413
    %1676 = vmatprep.subr.mxu0 0.0
    %1677 = vmatpush1.msra.mxu0 %v1414
    %1678 = vmatprep.subr.mxu0 0.0
    %1679 = vmatpush1.msra.mxu0 %v1415
    %1680 = vmatprep.subr.mxu0 0.0
    %1681 = vmatpush1.msra.mxu0 %v1416
    %1682 = vmatprep.subr.mxu0 0.0
    %1683 = vmatpush1.msra.mxu0 %v1417
    %1684 = vmatprep.subr.mxu0 0.0
    %1685 = vmatpush1.msra.mxu0 %v1418
    %1686 = vmatprep.subr.mxu0 0.0
    %1687 = vmatpush1.msra.mxu0 %v1419
    %1688 = vmatprep.subr.mxu0 0.0
    %1689 = vmatpush1.msra.mxu0 %v1420
    %1690 = vmatprep.subr.mxu0 0.0
    %1691 = vmatpush1.msra.mxu0 %v1421
    %1692 = vmatprep.subr.mxu0 0.0
    %1693 = vmatpush1.msra.mxu0 %v1422
    %1694 = vmatprep.subr.mxu0 0.0
    %1695 = vmatpush1.msra.mxu0 %v1423
    %1696 = vmatprep.subr.mxu0 0.0
    %1697 = vmatpush1.msra.mxu0 %v1424
    %1698 = vmatprep.subr.mxu0 0.0
    %1699 = vmatpush1.msra.mxu0 %v1425
    %1700 = vmatprep.subr.mxu0 0.0
    %1701 = vmatpush1.msra.mxu0 %v1426
    %1702 = vmatprep.subr.mxu0 0.0
    %1703 = vmatpush1.msra.mxu0 %v1427
    %1704 = vmatprep.subr.mxu0 0.0
    %1705 = vmatpush1.msra.mxu0 %v1428
    %1706 = vmatprep.subr.mxu0 0.0
    %1707 = vmatpush1.msra.mxu0 %v1429
    %1708 = vmatprep.subr.mxu0 0.0
    %1709 = vmatpush1.msra.mxu0 %v1430
    %1710 = vmatprep.subr.mxu0 0.0
    %1711 = vmatpush1.msra.mxu0 %v1431
    %1712 = vmatprep.subr.mxu0 0.0
    %1713 = vmatpush1.msra.mxu0 %v1432
    %1714 = vmatprep.subr.mxu0 0.0
    %1715 = vmatpush1.msra.mxu0 %v1433
    %1716 = vmatprep.subr.mxu0 0.0
    %1717 = vmatpush1.msra.mxu0 %v1434
    %1718 = vmatprep.subr.mxu0 0.0
    %1719 = vmatpush1.msra.mxu0 %v1435
    %1720 = vmatprep.subr.mxu0 0.0
    %1721 = vmatpush1.msra.mxu0 %v1436
    %1722 = vmatprep.subr.mxu0 0.0
    %1723 = vmatpush1.msra.mxu0 %v1437
    %1724 = vmatprep.subr.mxu0 0.0
    %1725 = vmatpush1.msra.mxu0 %v1438
    %1726 = vmatprep.subr.mxu0 0.0
    %1727 = vmatpush1.msra.mxu0 %v1439
    %1728 = vmatprep.subr.mxu0 0.0
    %1729 = vmatpush1.msra.mxu0 %v1440
    %1730 = vmatprep.subr.mxu0 0.0
    %1731 = vmatpush1.msra.mxu0 %v1441
    %1732 = vmatprep.mubr.f32.mxu0 %v1278
    %1733 = vmatmul.mubr.f32.gmra.mrb[0].mxu0 %v1261
    %v1734 = vpop.f32.mrb[0].mxu0
    %v1735 = vadd.f32 %v1642, %v1734
    %v1736 = vpop.f32.mrb[0].mxu0
    %1737 = vmatprep.mubr.f32.mxu0 %v1280
    %1738 = vmatmul.mubr.f32.gmra.mrb[0].mxu0 %v1263
    %v1739 = vpop.f32.mrb[0].mxu0
    %v1740 = vadd.f32 %v1647, %v1739
    %v1741 = vpop.f32.mrb[0].mxu0
    %1742 = vmatprep.mubr.f32.mxu0 %v1282
    %1743 = vmatmul.mubr.f32.gmra.mrb[0].mxu0 %v1265
    %v1744 = vpop.f32.mrb[0].mxu0
    %v1745 = vpop.f32.mrb[0].mxu0
    %1746 = vmatprep.mubr.f32.mxu0 %v1284
    %1747 = vmatmul.mubr.f32.gmra.mrb[0].mxu0 %v1267
    %v1748 = vpop.f32.mrb[0].mxu0
    %v1749 = vpop.f32.mrb[0].mxu0
    %1750 = vmatprep.mubr.f32.mxu0 %v1286
    %1751 = vmatmul.mubr.f32.gmra.mrb[0].mxu0 %v1269
    %v1752 = vpop.f32.mrb[0].mxu0
    %v1753 = vadd.f32 %v1660, %v1752
    %v1754 = vpop.f32.mrb[0].mxu0
    %1755 = vmatprep.mubr.f32.mxu0 %v1285
    %1756 = vmatmul.mubr.f32.gmra.mrb[0].mxu0 %v1268
    %v1757 = vpop.f32.mrb[0].mxu0
    %v1758 = vadd.f32 %v1665, %v1757
    %v1759 = vpop.f32.mrb[0].mxu0
    %1760 = vdwg.mxu0
    %1761 = vmatprep.subr.mxu0 0.0
    %1762 = vmatpush1.msra.mxu0 %v1442
    %1763 = vmatprep.subr.mxu0 0.0
    %1764 = vmatpush1.msra.mxu0 %v1443
    %1765 = vmatprep.subr.mxu0 0.0
    %1766 = vmatpush1.msra.mxu0 %v1444
    %1767 = vmatprep.subr.mxu0 0.0
    %1768 = vmatpush1.msra.mxu0 %v1445
    %1769 = vmatprep.subr.mxu0 0.0
    %1770 = vmatpush1.msra.mxu0 %v1446
    %1771 = vmatprep.subr.mxu0 0.0
    %1772 = vmatpush1.msra.mxu0 %v1447
    %1773 = vmatprep.subr.mxu0 0.0
    %1774 = vmatpush1.msra.mxu0 %v1448
    %1775 = vmatprep.subr.mxu0 0.0
    %1776 = vmatpush1.msra.mxu0 %v1449
    %1777 = vmatprep.subr.mxu0 0.0
    %1778 = vmatpush1.msra.mxu0 %v1450
    %1779 = vmatprep.subr.mxu0 0.0
    %1780 = vmatpush1.msra.mxu0 %v1451
    %1781 = vmatprep.subr.mxu0 0.0
    %1782 = vmatpush1.msra.mxu0 %v1452
    %1783 = vmatprep.subr.mxu0 0.0
    %1784 = vmatpush1.msra.mxu0 %v1453
    %1785 = vmatprep.subr.mxu0 0.0
    %1786 = vmatpush1.msra.mxu0 %v1454
    %1787 = vmatprep.subr.mxu0 0.0
    %1788 = vmatpush1.msra.mxu0 %v1455
    %1789 = vmatprep.subr.mxu0 0.0
    %1790 = vmatpush1.msra.mxu0 %v1456
    %1791 = vmatprep.subr.mxu0 0.0
    %1792 = vmatpush1.msra.mxu0 %v1457
    %1793 = vmatprep.subr.mxu0 0.0
    %1794 = vmatpush1.msra.mxu0 %v1458
    %1795 = vmatprep.subr.mxu0 0.0
    %1796 = vmatpush1.msra.mxu0 %v1459
    %1797 = vmatprep.subr.mxu0 0.0
    %1798 = vmatpush1.msra.mxu0 %v1460
    %1799 = vmatprep.subr.mxu0 0.0
    %1800 = vmatpush1.msra.mxu0 %v1461
    %1801 = vmatprep.subr.mxu0 0.0
    %1802 = vmatpush1.msra.mxu0 %v1462
    %1803 = vmatprep.subr.mxu0 0.0
    %1804 = vmatpush1.msra.mxu0 %v1463
    %1805 = vmatprep.subr.mxu0 0.0
    %1806 = vmatpush1.msra.mxu0 %v1464
    %1807 = vmatprep.subr.mxu0 0.0
    %1808 = vmatpush1.msra.mxu0 %v1465
    %1809 = vmatprep.subr.mxu0 0.0
    %1810 = vmatpush1.msra.mxu0 %v1466
    %1811 = vmatprep.subr.mxu0 0.0
    %1812 = vmatpush1.msra.mxu0 %v1467
    %1813 = vmatprep.subr.mxu0 0.0
    %1814 = vmatpush1.msra.mxu0 %v1468
    %1815 = vmatprep.subr.mxu0 0.0
    %1816 = vmatpush1.msra.mxu0 %v1469
    %1817 = vmatprep.subr.mxu0 0.0
    %1818 = vmatpush1.msra.mxu0 %v1470
    %1819 = vmatprep.subr.mxu0 0.0
    %1820 = vmatpush1.msra.mxu0 %v1471
    %1821 = vmatprep.subr.mxu0 0.0
    %1822 = vmatpush1.msra.mxu0 %v1472
    %1823 = vmatprep.subr.mxu0 0.0
    %1824 = vmatpush1.msra.mxu0 %v1473
    %1825 = vmatprep.mubr.f32.mxu0 %v1312
    %1826 = vmatmul.mubr.f32.gmra.mrb[0].mxu0 %v1295
    %v1827 = vpop.f32.mrb[0].mxu0
    %v1828 = vadd.f32 %v1735, %v1827
    %v1829 = vpop.f32.mrb[0].mxu0
    %1830 = vmatprep.mubr.f32.mxu0 %v1314
    %1831 = vmatmul.mubr.f32.gmra.mrb[0].mxu0 %v1297
    %v1832 = vpop.f32.mrb[0].mxu0
    %v1833 = vadd.f32 %v1740, %v1832
    %v1834 = vpop.f32.mrb[0].mxu0
    %1835 = vmatprep.mubr.f32.mxu0 %v1316
    %1836 = vmatmul.mubr.f32.gmra.mrb[0].mxu0 %v1299
    %v1837 = vpop.f32.mrb[0].mxu0
    %v1838 = vpop.f32.mrb[0].mxu0
    %1839 = vmatprep.mubr.f32.mxu0 %v1318
    %1840 = vmatmul.mubr.f32.gmra.mrb[0].mxu0 %v1301
    %v1841 = vpop.f32.mrb[0].mxu0
    %v1842 = vpop.f32.mrb[0].mxu0
    %1843 = vmatprep.mubr.f32.mxu0 %v1320
    %1844 = vmatmul.mubr.f32.gmra.mrb[0].mxu0 %v1303
    %v1845 = vpop.f32.mrb[0].mxu0
    %v1846 = vadd.f32 %v1753, %v1845
    %v1847 = vpop.f32.mrb[0].mxu0
    %1848 = vmatprep.mubr.f32.mxu0 %v1319
    %1849 = vmatmul.mubr.f32.gmra.mrb[0].mxu0 %v1302
    %v1850 = vpop.f32.mrb[0].mxu0
    %v1851 = vadd.f32 %v1758, %v1850
    %v1852 = vpop.f32.mrb[0].mxu0
    %1853 = vdwg.mxu0
    %1854 = vmatprep.subr.mxu0 0.0
    %1855 = vmatpush1.msra.mxu0 %v1474
    %1856 = vmatprep.subr.mxu0 0.0
    %1857 = vmatpush1.msra.mxu0 %v1475
    %1858 = vmatprep.subr.mxu0 0.0
    %1859 = vmatpush1.msra.mxu0 %v1476
    %1860 = vmatprep.subr.mxu0 0.0
    %1861 = vmatpush1.msra.mxu0 %v1477
    %1862 = vmatprep.subr.mxu0 0.0
    %1863 = vmatpush1.msra.mxu0 %v1478
    %1864 = vmatprep.subr.mxu0 0.0
    %1865 = vmatpush1.msra.mxu0 %v1479
    %1866 = vmatprep.subr.mxu0 0.0
    %1867 = vmatpush1.msra.mxu0 %v1480
    %1868 = vmatprep.subr.mxu0 0.0
    %1869 = vmatpush1.msra.mxu0 %v1481
    %1870 = vmatprep.subr.mxu0 0.0
    %1871 = vmatpush1.msra.mxu0 %v1482
    %1872 = vmatprep.subr.mxu0 0.0
    %1873 = vmatpush1.msra.mxu0 %v1483
    %1874 = vmatprep.subr.mxu0 0.0
    %1875 = vmatpush1.msra.mxu0 %v1484
    %1876 = vmatprep.subr.mxu0 0.0
    %1877 = vmatpush1.msra.mxu0 %v1485
    %1878 = vmatprep.subr.mxu0 0.0
    %1879 = vmatpush1.msra.mxu0 %v1486
    %1880 = vmatprep.subr.mxu0 0.0
    %1881 = vmatpush1.msra.mxu0 %v1487
    %1882 = vmatprep.subr.mxu0 0.0
    %1883 = vmatpush1.msra.mxu0 %v1488
    %1884 = vmatprep.subr.mxu0 0.0
    %1885 = vmatpush1.msra.mxu0 %v1489
    %1886 = vmatprep.subr.mxu0 0.0
    %1887 = vmatpush1.msra.mxu0 %v1490
    %1888 = vmatprep.subr.mxu0 0.0
    %1889 = vmatpush1.msra.mxu0 %v1491
    %1890 = vmatprep.subr.mxu0 0.0
    %1891 = vmatpush1.msra.mxu0 %v1492
    %1892 = vmatprep.subr.mxu0 0.0
    %1893 = vmatpush1.msra.mxu0 %v1493
    %1894 = vmatprep.subr.mxu0 0.0
    %1895 = vmatpush1.msra.mxu0 %v1494
    %1896 = vmatprep.subr.mxu0 0.0
    %1897 = vmatpush1.msra.mxu0 %v1495
    %1898 = vmatprep.subr.mxu0 0.0
    %1899 = vmatpush1.msra.mxu0 %v1496
    %1900 = vmatprep.subr.mxu0 0.0
    %1901 = vmatpush1.msra.mxu0 %v1497
    %1902 = vmatprep.subr.mxu0 0.0
    %1903 = vmatpush1.msra.mxu0 %v1498
    %1904 = vmatprep.subr.mxu0 0.0
    %1905 = vmatpush1.msra.mxu0 %v1499
    %1906 = vmatprep.subr.mxu0 0.0
    %1907 = vmatpush1.msra.mxu0 %v1500
    %1908 = vmatprep.subr.mxu0 0.0
    %1909 = vmatpush1.msra.mxu0 %v1501
    %1910 = vmatprep.subr.mxu0 0.0
    %1911 = vmatpush1.msra.mxu0 %v1502
    %1912 = vmatprep.subr.mxu0 0.0
    %1913 = vmatpush1.msra.mxu0 %v1503
    %1914 = vmatprep.subr.mxu0 0.0
    %1915 = vmatpush1.msra.mxu0 %v1504
    %1916 = vmatprep.subr.mxu0 0.0
    %1917 = vmatpush1.msra.mxu0 %v1505
    %1918 = vmatprep.mubr.f32.mxu0 %v1349
    %1919 = vmatmul.mubr.f32.gmra.mrb[0].mxu0 %v1330
    %v1920 = vpop.f32.mrb[0].mxu0
    %v1921 = vadd.f32 %v1828, %v1920
    %v1922 = vpop.f32.mrb[0].mxu0
    %1923 = vmatprep.mubr.f32.mxu0 %v1351
    %1924 = vmatmul.mubr.f32.gmra.mrb[0].mxu0 %v1332
    %v1925 = vpop.f32.mrb[0].mxu0
    %v1926 = vadd.f32 %v1833, %v1925
    %v1927 = vpop.f32.mrb[0].mxu0
    %1928 = vmatprep.mubr.f32.mxu0 %v1353
    %1929 = vmatmul.mubr.f32.gmra.mrb[0].mxu0 %v1334
    %v1930 = vpop.f32.mrb[0].mxu0
    %v1931 = vpop.f32.mrb[0].mxu0
    %1932 = vmatprep.mubr.f32.mxu0 %v1355
    %1933 = vmatmul.mubr.f32.gmra.mrb[0].mxu0 %v1336
    %v1934 = vpop.f32.mrb[0].mxu0
    %v1935 = vpop.f32.mrb[0].mxu0
    %1936 = vmatprep.mubr.f32.mxu0 %v1357
    %1937 = vmatmul.mubr.f32.gmra.mrb[0].mxu0 %v1338
    %v1938 = vpop.f32.mrb[0].mxu0
    %v1939 = vadd.f32 %v1846, %v1938
    %v1940 = vpop.f32.mrb[0].mxu0
    %1941 = vmatprep.mubr.f32.mxu0 %v1359
    %1942 = vmatmul.mubr.f32.gmra.mrb[0].mxu0 %v1340
    %v1943 = vpop.f32.mrb[0].mxu0
    %v1944 = vadd.f32 %v1851, %v1943
    %v1945 = vpop.f32.mrb[0].mxu0
    %1946 = vdwg.mxu0
    %1947 = vmatprep.subr.mxu0 0.0
    %1948 = vmatpush1.msra.mxu0 %v1506
    %1949 = vmatprep.subr.mxu0 0.0
    %1950 = vmatpush1.msra.mxu0 %v1507
    %1951 = vmatprep.subr.mxu0 0.0
    %1952 = vmatpush1.msra.mxu0 %v1508
    %1953 = vmatprep.subr.mxu0 0.0
    %1954 = vmatpush1.msra.mxu0 %v1509
    %1955 = vmatprep.subr.mxu0 0.0
    %1956 = vmatpush1.msra.mxu0 %v1510
    %1957 = vmatprep.subr.mxu0 0.0
    %1958 = vmatpush1.msra.mxu0 %v1511
    %1959 = vmatprep.subr.mxu0 0.0
    %1960 = vmatpush1.msra.mxu0 %v1512
    %1961 = vmatprep.subr.mxu0 0.0
    %1962 = vmatpush1.msra.mxu0 %v1513
    %1963 = vmatprep.subr.mxu0 0.0
    %1964 = vmatpush1.msra.mxu0 %v1514
    %1965 = vmatprep.subr.mxu0 0.0
    %1966 = vmatpush1.msra.mxu0 %v1515
    %1967 = vmatprep.subr.mxu0 0.0
    %1968 = vmatpush1.msra.mxu0 %v1516
    %1969 = vmatprep.subr.mxu0 0.0
    %1970 = vmatpush1.msra.mxu0 %v1517
    %1971 = vmatprep.subr.mxu0 0.0
    %1972 = vmatpush1.msra.mxu0 %v1518
    %1973 = vmatprep.subr.mxu0 0.0
    %1974 = vmatpush1.msra.mxu0 %v1519
    %1975 = vmatprep.subr.mxu0 0.0
    %1976 = vmatpush1.msra.mxu0 %v1520
    %1977 = vmatprep.subr.mxu0 0.0
    %1978 = vmatpush1.msra.mxu0 %v1521
    %1979 = vmatprep.subr.mxu0 0.0
    %1980 = vmatpush1.msra.mxu0 %v1522
    %1981 = vmatprep.subr.mxu0 0.0
    %1982 = vmatpush1.msra.mxu0 %v1523
    %1983 = vmatprep.subr.mxu0 0.0
    %1984 = vmatpush1.msra.mxu0 %v1524
    %1985 = vmatprep.subr.mxu0 0.0
    %1986 = vmatpush1.msra.mxu0 %v1525
    %1987 = vmatprep.subr.mxu0 0.0
    %1988 = vmatpush1.msra.mxu0 %v1526
    %1989 = vmatprep.subr.mxu0 0.0
    %1990 = vmatpush1.msra.mxu0 %v1527
    %1991 = vmatprep.subr.mxu0 0.0
    %1992 = vmatpush1.msra.mxu0 %v1528
    %1993 = vmatprep.subr.mxu0 0.0
    %1994 = vmatpush1.msra.mxu0 %v1529
    %1995 = vmatprep.subr.mxu0 0.0
    %1996 = vmatpush1.msra.mxu0 %v1530
    %1997 = vmatprep.subr.mxu0 0.0
    %1998 = vmatpush1.msra.mxu0 %v1531
    %1999 = vmatprep.subr.mxu0 0.0
    %2000 = vmatpush1.msra.mxu0 %v1532
    %2001 = vmatprep.subr.mxu0 0.0
    %2002 = vmatpush1.msra.mxu0 %v1533
    %2003 = vmatprep.subr.mxu0 0.0
    %2004 = vmatpush1.msra.mxu0 %v1534
    %2005 = vmatprep.subr.mxu0 0.0
    %2006 = vmatpush1.msra.mxu0 %v1535
    %2007 = vmatprep.subr.mxu0 0.0
    %2008 = vmatpush1.msra.mxu0 %v1536
    %2009 = vmatprep.subr.mxu0 0.0
    %2010 = vmatpush1.msra.mxu0 %v1537
    %2011 = vmatprep.mubr.f32.mxu0 %v1246
    %2012 = vmatmul.mubr.f32.gmra.mrb[0].mxu0 %v1230
    %v2013 = vpop.f32.mrb[0].mxu0
    %v2014 = vadd.f32 %v1921, %v2013
    %v2015 = vpop.f32.mrb[0].mxu0
    %2016 = vmatprep.mubr.f32.mxu0 %v1248
    %2017 = vmatmul.mubr.f32.gmra.mrb[0].mxu0 %v1231
    %v2018 = vpop.f32.mrb[0].mxu0
    %v2019 = vadd.f32 %v1926, %v2018
    %v2020 = vpop.f32.mrb[0].mxu0
    %2021 = vmatprep.mubr.f32.mxu0 %v1250
    %2022 = vmatmul.mubr.f32.gmra.mrb[0].mxu0 %v1232
    %v2023 = vpop.f32.mrb[0].mxu0
    %v2024 = vpop.f32.mrb[0].mxu0
    %2025 = vmatprep.mubr.f32.mxu0 %v1252
    %2026 = vmatmul.mubr.f32.gmra.mrb[0].mxu0 %v1233
    %v2027 = vpop.f32.mrb[0].mxu0
    %v2028 = vpop.f32.mrb[0].mxu0
    %2029 = vmatprep.mubr.f32.mxu0 %v1367
    %2030 = vmatmul.mubr.f32.gmra.mrb[0].mxu0 %v1234
    %v2031 = vpop.f32.mrb[0].mxu0
    %v2032 = vadd.f32 %v1939, %v2031
    %v2033 = vpop.f32.mrb[0].mxu0
    %2034 = vmatprep.mubr.f32.mxu0 %v1366
    %2035 = vmatmul.mubr.f32.gmra.mrb[0].mxu0 %v1235
    %v2036 = vpop.f32.mrb[0].mxu0
    %v2037 = vadd.f32 %v1944, %v2036
    %v2038 = vpop.f32.mrb[0].mxu0
    %2039 = vdwg.mxu0
    %2040 = vmatprep.subr.mxu0 0.0
    %2041 = vmatpush1.msra.mxu0 %v1538
    %2042 = vmatprep.subr.mxu0 0.0
    %2043 = vmatpush1.msra.mxu0 %v1539
    %2044 = vmatprep.subr.mxu0 0.0
    %2045 = vmatpush1.msra.mxu0 %v1540
    %2046 = vmatprep.subr.mxu0 0.0
    %2047 = vmatpush1.msra.mxu0 %v1541
    %2048 = vmatprep.subr.mxu0 0.0
    %2049 = vmatpush1.msra.mxu0 %v1542
    %2050 = vmatprep.subr.mxu0 0.0
    %2051 = vmatpush1.msra.mxu0 %v1543
    %2052 = vmatprep.subr.mxu0 0.0
    %2053 = vmatpush1.msra.mxu0 %v1544
    %2054 = vmatprep.subr.mxu0 0.0
    %2055 = vmatpush1.msra.mxu0 %v1545
    %2056 = vmatprep.subr.mxu0 0.0
    %2057 = vmatpush1.msra.mxu0 %v1546
    %2058 = vmatprep.subr.mxu0 0.0
    %2059 = vmatpush1.msra.mxu0 %v1547
    %2060 = vmatprep.subr.mxu0 0.0
    %2061 = vmatpush1.msra.mxu0 %v1548
    %2062 = vmatprep.subr.mxu0 0.0
    %2063 = vmatpush1.msra.mxu0 %v1549
    %2064 = vmatprep.subr.mxu0 0.0
    %2065 = vmatpush1.msra.mxu0 %v1550
    %2066 = vmatprep.subr.mxu0 0.0
    %2067 = vmatpush1.msra.mxu0 %v1551
    %2068 = vmatprep.subr.mxu0 0.0
    %2069 = vmatpush1.msra.mxu0 %v1552
    %2070 = vmatprep.subr.mxu0 0.0
    %2071 = vmatpush1.msra.mxu0 %v1553
    %2072 = vmatprep.subr.mxu0 0.0
    %2073 = vmatpush1.msra.mxu0 %v1554
    %2074 = vmatprep.subr.mxu0 0.0
    %2075 = vmatpush1.msra.mxu0 %v1555
    %2076 = vmatprep.subr.mxu0 0.0
    %2077 = vmatpush1.msra.mxu0 %v1556
    %2078 = vmatprep.subr.mxu0 0.0
    %2079 = vmatpush1.msra.mxu0 %v1557
    %2080 = vmatprep.subr.mxu0 0.0
    %2081 = vmatpush1.msra.mxu0 %v1558
    %2082 = vmatprep.subr.mxu0 0.0
    %2083 = vmatpush1.msra.mxu0 %v1559
    %2084 = vmatprep.subr.mxu0 0.0
    %2085 = vmatpush1.msra.mxu0 %v1560
    %2086 = vmatprep.subr.mxu0 0.0
    %2087 = vmatpush1.msra.mxu0 %v1561
    %2088 = vmatprep.subr.mxu0 0.0
    %2089 = vmatpush1.msra.mxu0 %v1562
    %2090 = vmatprep.subr.mxu0 0.0
    %2091 = vmatpush1.msra.mxu0 %v1563
    %2092 = vmatprep.subr.mxu0 0.0
    %2093 = vmatpush1.msra.mxu0 %v1564
    %2094 = vmatprep.subr.mxu0 0.0
    %2095 = vmatpush1.msra.mxu0 %v1565
    %2096 = vmatprep.subr.mxu0 0.0
    %2097 = vmatpush1.msra.mxu0 %v1566
    %2098 = vmatprep.subr.mxu0 0.0
    %2099 = vmatpush1.msra.mxu0 %v1567
    %2100 = vmatprep.subr.mxu0 0.0
    %2101 = vmatpush1.msra.mxu0 %v1568
    %2102 = vmatprep.subr.mxu0 0.0
    %2103 = vmatpush1.msra.mxu0 %v1569
    %2104 = vmatprep.mubr.f32.mxu0 %v1280
    %2105 = vmatmul.mubr.f32.gmra.mrb[0].mxu0 %v1263
    %v2106 = vpop.f32.mrb[0].mxu0
    %v2107 = vadd.f32 %v2014, %v2106
    %v2108 = vpop.f32.mrb[0].mxu0
    %2109 = vmatprep.mubr.f32.mxu0 %v1282
    %2110 = vmatmul.mubr.f32.gmra.mrb[0].mxu0 %v1265
    %v2111 = vpop.f32.mrb[0].mxu0
    %v2112 = vadd.f32 %v2019, %v2111
    %v2113 = vpop.f32.mrb[0].mxu0
    %2114 = vmatprep.mubr.f32.mxu0 %v1284
    %2115 = vmatmul.mubr.f32.gmra.mrb[0].mxu0 %v1267
    %v2116 = vpop.f32.mrb[0].mxu0
    %v2117 = vpop.f32.mrb[0].mxu0
    %2118 = vmatprep.mubr.f32.mxu0 %v1286
    %2119 = vmatmul.mubr.f32.gmra.mrb[0].mxu0 %v1269
    %v2120 = vpop.f32.mrb[0].mxu0
    %v2121 = vpop.f32.mrb[0].mxu0
    %2122 = vmatprep.mubr.f32.mxu0 %v1375
    %2123 = vmatmul.mubr.f32.gmra.mrb[0].mxu0 %v1371
    %v2124 = vpop.f32.mrb[0].mxu0
    %v2125 = vadd.f32 %v2032, %v2124
    %v2126 = vpop.f32.mrb[0].mxu0
    %2127 = vmatprep.mubr.f32.mxu0 %v1374
    %2128 = vmatmul.mubr.f32.gmra.mrb[0].mxu0 %v1370
    %v2129 = vpop.f32.mrb[0].mxu0
    %v2130 = vadd.f32 %v2037, %v2129
    %v2131 = vpop.f32.mrb[0].mxu0
    %2132 = vdwg.mxu0
    %v2133 = vmax.f32 %v2107, 0.0
    %v2134 = vmax.f32 %v2112, 0.0
    %v2135 = vmax.f32 %v2125, 0.0
    %v2136 = vmax.f32 %v2130, 0.0
    %v2137 = vsel %vm627, %v2134, -inf
    %v2138 = vmax.f32 %v2133, %v2137
    %v2139 = vrot.slane %v2138, 4
    %v2140 = vmax.f32 %v2138, %v2139
    %v2141 = vrot.slane %v2140, 2
    %v2142 = vmax.f32 %v2140, %v2141
    %v2143 = vrot.slane %v2142, 1
    %v2144 = vmax.f32 %v2142, %v2143
    %v2145 = vsel %vm627, %v2136, -inf
    %v2146 = vmax.f32 %v2135, %v2145
    %v2147 = vrot.slane %v2146, 4
    %v2148 = vmax.f32 %v2146, %v2147
    %v2149 = vrot.slane %v2148, 2
    %v2150 = vmax.f32 %v2148, %v2149
    %v2151 = vrot.slane %v2150, 1
    %v2152 = vmax.f32 %v2150, %v2151
    %v2153 = vsel %vm673, %v2144, %v2152
    %v2154 = vld [vmem:[%s0 + $0x40] sm:$0xff]
    %v2155 = vld [vmem:[%s0 + $0x48] sm:$0xf]
    %v2156 = vld [vmem:[%s0 + $0x50] sm:$0xff]
    %v2157 = vld [vmem:[%s0 + $0x58] sm:$0xff]
    %v2158 = vld [vmem:[%s0 + $0x60] sm:$0xf]
    %v2159 = vld [vmem:[%s0 + $0x68] sm:$0xff]
    %v2160 = vld [vmem:[%s0 + $0x70] sm:$0xff]
    %v2161 = vld [vmem:[%s0 + $0x78] sm:$0xf]
    %v2162 = vld [vmem:[%s0 + $0x80] sm:$0xff]
    %v2163 = vld [vmem:[%s0 + $0x88] sm:$0xf]
    %v2164 = vld [vmem:[#allocation2 + $0xc20] sm:$0x7]
    %v2165 = vld [vmem:[#allocation2 + $0x11c0] sm:$0x1]
    %v2166 = vlaneseq
    %v2167 = vshrl.u32 %v2166, 7
    %v2168 = vsub.s32 0, %v2167
    %v2169 = vrot.slane %v2165, %v2168
    %vm2170 = vcmask 23552
    %v2172 = vsel %vm2170, %v2156, 0
    %v2175 = vsel %vm2170, %v2157, 0
    %v2178 = vsel %vm2170, %v2158, 0
    %v2181 = vsel %vm627, %v2164, 0
    %2183 = vmatprep.subr.mxu0 0.0
    %2184 = vmatpush1.msra.mxu0 %v2181
    %2185 = vmatprep.subr.mxu0 0.0
    %2186 = vmatpush1.msra.mxu0 0.0
    %2187 = vmatprep.subr.mxu0 0.0
    %2188 = vmatpush1.msra.mxu0 0.0
    %2189 = vmatprep.subr.mxu0 0.0
    %2190 = vmatpush1.msra.mxu0 0.0
    %2191 = vmatprep.subr.mxu0 0.0
    %2192 = vmatpush1.msra.mxu0 0.0
    %2193 = vmatprep.subr.mxu0 0.0
    %2194 = vmatpush1.msra.mxu0 0.0
    %2195 = vmatprep.subr.mxu0 0.0
    %2196 = vmatpush1.msra.mxu0 0.0
    %2197 = vmatprep.subr.mxu0 0.0
    %2198 = vmatpush1.msra.mxu0 0.0
    %2199 = vmatprep.subr.mxu0 0.0
    %2200 = vmatpush1.msra.mxu0 0.0
    %2201 = vmatprep.subr.mxu0 0.0
    %2202 = vmatpush1.msra.mxu0 0.0
    %2203 = vmatprep.subr.mxu0 0.0
    %2204 = vmatpush1.msra.mxu0 0.0
    %2205 = vmatprep.subr.mxu0 0.0
    %2206 = vmatpush1.msra.mxu0 0.0
    %2207 = vmatprep.subr.mxu0 0.0
    %2208 = vmatpush1.msra.mxu0 0.0
    %2209 = vmatprep.subr.mxu0 0.0
    %2210 = vmatpush1.msra.mxu0 0.0
    %2211 = vmatprep.subr.mxu0 0.0
    %2212 = vmatpush1.msra.mxu0 0.0
    %2213 = vmatprep.subr.mxu0 0.0
    %2214 = vmatpush1.msra.mxu0 0.0
    %2215 = vmatprep.subr.mxu0 0.0
    %2216 = vmatpush1.msra.mxu0 0.0
    %2217 = vmatprep.subr.mxu0 0.0
    %2218 = vmatpush1.msra.mxu0 0.0
    %2219 = vmatprep.subr.mxu0 0.0
    %2220 = vmatpush1.msra.mxu0 0.0
    %2221 = vmatprep.subr.mxu0 0.0
    %2222 = vmatpush1.msra.mxu0 0.0
    %2223 = vmatprep.subr.mxu0 0.0
    %2224 = vmatpush1.msra.mxu0 0.0
    %2225 = vmatprep.subr.mxu0 0.0
    %2226 = vmatpush1.msra.mxu0 0.0
    %2227 = vmatprep.subr.mxu0 0.0
    %2228 = vmatpush1.msra.mxu0 0.0
    %2229 = vmatprep.subr.mxu0 0.0
    %2230 = vmatpush1.msra.mxu0 0.0
    %2231 = vmatprep.subr.mxu0 0.0
    %2232 = vmatpush1.msra.mxu0 0.0
    %2233 = vmatprep.subr.mxu0 0.0
    %2234 = vmatpush1.msra.mxu0 0.0
    %2235 = vmatprep.subr.mxu0 0.0
    %2236 = vmatpush1.msra.mxu0 0.0
    %2237 = vmatprep.subr.mxu0 0.0
    %2238 = vmatpush1.msra.mxu0 0.0
    %2239 = vmatprep.subr.mxu0 0.0
    %2240 = vmatpush1.msra.mxu0 0.0
    %2241 = vmatprep.subr.mxu0 0.0
    %2242 = vmatpush1.msra.mxu0 0.0
    %2243 = vmatprep.subr.mxu0 0.0
    %2244 = vmatpush1.msra.mxu0 0.0
    %2245 = vmatprep.subr.mxu0 0.0
    %2246 = vmatpush1.msra.mxu0 0.0
    %2247 = vmatprep.mubr.f32.mxu0 0.0
    %2248 = vmatmul.mubr.f32.gmra.mrb[0].mxu0 %v2172
    %v2249 = vpop.f32.mrb[0].mxu0
    %v2250 = vadd.f32 %v2169, %v2249
    %v2251 = vpop.f32.mrb[0].mxu0
    %2252 = vmatprep.mubr.f32.mxu0 0.0
    %2253 = vmatmul.mubr.f32.gmra.mrb[0].mxu0 %v2175
    %v2254 = vpop.f32.mrb[0].mxu0
    %v2255 = vadd.f32 %v2169, %v2254
    %v2256 = vpop.f32.mrb[0].mxu0
    %2257 = vmatprep.mubr.f32.mxu0 0.0
    %2258 = vmatmul.mubr.f32.gmra.mrb[0].mxu0 %v2178
    %v2259 = vpop.f32.mrb[0].mxu0
    %v2260 = vadd.f32 %v2169, %v2259
    %v2261 = vpop.f32.mrb[0].mxu0
    %2262 = vdwg.mxu0
    %vm2263 = vcmask 97280
    %v2265 = vsel %vm2263, %v2159, 0
    %v2268 = vsel %vm2263, %v2160, 0
    %v2271 = vsel %vm2263, %v2161, 0
    %v2274 = vsel %vm604, %v2155, 0
    %2276 = vmatprep.subr.mxu0 0.0
    %2277 = vmatpush1.msra.mxu0 %v2154
    %2278 = vmatprep.subr.mxu0 0.0
    %2279 = vmatpush1.msra.mxu0 %v2274
    %2280 = vmatprep.subr.mxu0 0.0
    %2281 = vmatpush1.msra.mxu0 0.0
    %2282 = vmatprep.subr.mxu0 0.0
    %2283 = vmatpush1.msra.mxu0 0.0
    %2284 = vmatprep.subr.mxu0 0.0
    %2285 = vmatpush1.msra.mxu0 0.0
    %2286 = vmatprep.subr.mxu0 0.0
    %2287 = vmatpush1.msra.mxu0 0.0
    %2288 = vmatprep.subr.mxu0 0.0
    %2289 = vmatpush1.msra.mxu0 0.0
    %2290 = vmatprep.subr.mxu0 0.0
    %2291 = vmatpush1.msra.mxu0 0.0
    %2292 = vmatprep.subr.mxu0 0.0
    %2293 = vmatpush1.msra.mxu0 0.0
    %2294 = vmatprep.subr.mxu0 0.0
    %2295 = vmatpush1.msra.mxu0 0.0
    %2296 = vmatprep.subr.mxu0 0.0
    %2297 = vmatpush1.msra.mxu0 0.0
    %2298 = vmatprep.subr.mxu0 0.0
    %2299 = vmatpush1.msra.mxu0 0.0
    %2300 = vmatprep.subr.mxu0 0.0
    %2301 = vmatpush1.msra.mxu0 0.0
    %2302 = vmatprep.subr.mxu0 0.0
    %2303 = vmatpush1.msra.mxu0 0.0
    %2304 = vmatprep.subr.mxu0 0.0
    %2305 = vmatpush1.msra.mxu0 0.0
    %2306 = vmatprep.subr.mxu0 0.0
    %2307 = vmatpush1.msra.mxu0 0.0
    %2308 = vmatprep.subr.mxu0 0.0
    %2309 = vmatpush1.msra.mxu0 0.0
    %2310 = vmatprep.subr.mxu0 0.0
    %2311 = vmatpush1.msra.mxu0 0.0
    %2312 = vmatprep.subr.mxu0 0.0
    %2313 = vmatpush1.msra.mxu0 0.0
    %2314 = vmatprep.subr.mxu0 0.0
    %2315 = vmatpush1.msra.mxu0 0.0
    %2316 = vmatprep.subr.mxu0 0.0
    %2317 = vmatpush1.msra.mxu0 0.0
    %2318 = vmatprep.subr.mxu0 0.0
    %2319 = vmatpush1.msra.mxu0 0.0
    %2320 = vmatprep.subr.mxu0 0.0
    %2321 = vmatpush1.msra.mxu0 0.0
    %2322 = vmatprep.subr.mxu0 0.0
    %2323 = vmatpush1.msra.mxu0 0.0
    %2324 = vmatprep.subr.mxu0 0.0
    %2325 = vmatpush1.msra.mxu0 0.0
    %2326 = vmatprep.subr.mxu0 0.0
    %2327 = vmatpush1.msra.mxu0 0.0
    %2328 = vmatprep.subr.mxu0 0.0
    %2329 = vmatpush1.msra.mxu0 0.0
    %2330 = vmatprep.subr.mxu0 0.0
    %2331 = vmatpush1.msra.mxu0 0.0
    %2332 = vmatprep.subr.mxu0 0.0
    %2333 = vmatpush1.msra.mxu0 0.0
    %2334 = vmatprep.subr.mxu0 0.0
    %2335 = vmatpush1.msra.mxu0 0.0
    %2336 = vmatprep.subr.mxu0 0.0
    %2337 = vmatpush1.msra.mxu0 0.0
    %2338 = vmatprep.subr.mxu0 0.0
    %2339 = vmatpush1.msra.mxu0 0.0
    %2340 = vmatprep.mubr.f32.mxu0 0.0
    %2341 = vmatmul.mubr.f32.gmra.mrb[0].mxu0 %v2265
    %v2342 = vpop.f32.mrb[0].mxu0
    %v2343 = vadd.f32 %v2250, %v2342
    %v2344 = vpop.f32.mrb[0].mxu0
    %2345 = vmatprep.mubr.f32.mxu0 0.0
    %2346 = vmatmul.mubr.f32.gmra.mrb[0].mxu0 %v2268
    %v2347 = vpop.f32.mrb[0].mxu0
    %v2348 = vadd.f32 %v2255, %v2347
    %v2349 = vpop.f32.mrb[0].mxu0
    %2350 = vmatprep.mubr.f32.mxu0 0.0
    %2351 = vmatmul.mubr.f32.gmra.mrb[0].mxu0 %v2271
    %v2352 = vpop.f32.mrb[0].mxu0
    %v2353 = vadd.f32 %v2260, %v2352
    %v2354 = vpop.f32.mrb[0].mxu0
    %2355 = vdwg.mxu0
    %v2356 = vmax.f32 %v2343, 0.0
    %v2357 = vmax.f32 %v2348, 0.0
    %v2358 = vmax.f32 %v2353, 0.0
    %vm2359 = vcmask 162816
    %v2361 = vsel %vm2359, %v2162, 0
    %v2364 = vsel %vm2359, %v2163, 0
    %v2367 = vsel %vm604, %v2358, 0
    %2369 = vmatprep.subr.mxu0 0.0
    %2370 = vmatpush1.msra.mxu0 %v2356
    %2371 = vmatprep.subr.mxu0 0.0
    %2372 = vmatpush1.msra.mxu0 %v2357
    %2373 = vmatprep.subr.mxu0 0.0
    %2374 = vmatpush1.msra.mxu0 %v2367
    %2375 = vmatprep.subr.mxu0 0.0
    %2376 = vmatpush1.msra.mxu0 0.0
    %2377 = vmatprep.subr.mxu0 0.0
    %2378 = vmatpush1.msra.mxu0 0.0
    %2379 = vmatprep.subr.mxu0 0.0
    %2380 = vmatpush1.msra.mxu0 0.0
    %2381 = vmatprep.subr.mxu0 0.0
    %2382 = vmatpush1.msra.mxu0 0.0
    %2383 = vmatprep.subr.mxu0 0.0
    %2384 = vmatpush1.msra.mxu0 0.0
    %2385 = vmatprep.subr.mxu0 0.0
    %2386 = vmatpush1.msra.mxu0 0.0
    %2387 = vmatprep.subr.mxu0 0.0
    %2388 = vmatpush1.msra.mxu0 0.0
    %2389 = vmatprep.subr.mxu0 0.0
    %2390 = vmatpush1.msra.mxu0 0.0
    %2391 = vmatprep.subr.mxu0 0.0
    %2392 = vmatpush1.msra.mxu0 0.0
    %2393 = vmatprep.subr.mxu0 0.0
    %2394 = vmatpush1.msra.mxu0 0.0
    %2395 = vmatprep.subr.mxu0 0.0
    %2396 = vmatpush1.msra.mxu0 0.0
    %2397 = vmatprep.subr.mxu0 0.0
    %2398 = vmatpush1.msra.mxu0 0.0
    %2399 = vmatprep.subr.mxu0 0.0
    %2400 = vmatpush1.msra.mxu0 0.0
    %2401 = vmatprep.subr.mxu0 0.0
    %2402 = vmatpush1.msra.mxu0 0.0
    %2403 = vmatprep.subr.mxu0 0.0
    %2404 = vmatpush1.msra.mxu0 0.0
    %2405 = vmatprep.subr.mxu0 0.0
    %2406 = vmatpush1.msra.mxu0 0.0
    %2407 = vmatprep.subr.mxu0 0.0
    %2408 = vmatpush1.msra.mxu0 0.0
    %2409 = vmatprep.subr.mxu0 0.0
    %2410 = vmatpush1.msra.mxu0 0.0
    %2411 = vmatprep.subr.mxu0 0.0
    %2412 = vmatpush1.msra.mxu0 0.0
    %2413 = vmatprep.subr.mxu0 0.0
    %2414 = vmatpush1.msra.mxu0 0.0
    %2415 = vmatprep.subr.mxu0 0.0
    %2416 = vmatpush1.msra.mxu0 0.0
    %2417 = vmatprep.subr.mxu0 0.0
    %2418 = vmatpush1.msra.mxu0 0.0
    %2419 = vmatprep.subr.mxu0 0.0
    %2420 = vmatpush1.msra.mxu0 0.0
    %2421 = vmatprep.subr.mxu0 0.0
    %2422 = vmatpush1.msra.mxu0 0.0
    %2423 = vmatprep.subr.mxu0 0.0
    %2424 = vmatpush1.msra.mxu0 0.0
    %2425 = vmatprep.subr.mxu0 0.0
    %2426 = vmatpush1.msra.mxu0 0.0
    %2427 = vmatprep.subr.mxu0 0.0
    %2428 = vmatpush1.msra.mxu0 0.0
    %2429 = vmatprep.subr.mxu0 0.0
    %2430 = vmatpush1.msra.mxu0 0.0
    %2431 = vmatprep.subr.mxu0 0.0
    %2432 = vmatpush1.msra.mxu0 0.0
    %2433 = vmatprep.mubr.f32.mxu0 0.0
    %2434 = vmatmul.mubr.f32.gmra.mrb[0].mxu0 %v2361
    %v2435 = vpop.f32.mrb[0].mxu0
    %v2436 = vadd.f32 0.0, %v2435
    %v2437 = vpop.f32.mrb[0].mxu0
    %2438 = vmatprep.mubr.f32.mxu0 0.0
    %2439 = vmatmul.mubr.f32.gmra.mrb[0].mxu0 %v2364
    %v2440 = vpop.f32.mrb[0].mxu0
    %v2441 = vadd.f32 0.0, %v2440
    %v2442 = vpop.f32.mrb[0].mxu0
    %2443 = vdwg.mxu0
    %v2444 = vadd.f32 %v2154, %v2436
    %v2445 = vadd.f32 %v2155, %v2441
    %v2446 = vld [vmem:[#allocation2 + $0xc28] sm:$0xf]
    %v2447 = vld [vmem:[#allocation2 + $0x11c8] sm:$0x1]
    %v2448 = vlaneseq
    %v2449 = vshrl.u32 %v2448, 7
    %v2450 = vsub.s32 0, %v2449
    %v2451 = vrot.slane %v2447, %v2450
    %vm2452 = vcmask 31744
    %v2454 = vsel %vm2452, %v2444, 0
    %v2457 = vsel %vm2452, %v2445, 0
    %v2460 = vsel %vm604, %v2446, 0
    %2462 = vmatprep.subr.mxu0 0.0
    %2463 = vmatpush1.msra.mxu0 %v2460
    %2464 = vmatprep.subr.mxu0 0.0
    %2465 = vmatpush1.msra.mxu0 0.0
    %2466 = vmatprep.subr.mxu0 0.0
    %2467 = vmatpush1.msra.mxu0 0.0
    %2468 = vmatprep.subr.mxu0 0.0
    %2469 = vmatpush1.msra.mxu0 0.0
    %2470 = vmatprep.subr.mxu0 0.0
    %2471 = vmatpush1.msra.mxu0 0.0
    %2472 = vmatprep.subr.mxu0 0.0
    %2473 = vmatpush1.msra.mxu0 0.0
    %2474 = vmatprep.subr.mxu0 0.0
    %2475 = vmatpush1.msra.mxu0 0.0
    %2476 = vmatprep.subr.mxu0 0.0
    %2477 = vmatpush1.msra.mxu0 0.0
    %2478 = vmatprep.subr.mxu0 0.0
    %2479 = vmatpush1.msra.mxu0 0.0
    %2480 = vmatprep.subr.mxu0 0.0
    %2481 = vmatpush1.msra.mxu0 0.0
    %2482 = vmatprep.subr.mxu0 0.0
    %2483 = vmatpush1.msra.mxu0 0.0
    %2484 = vmatprep.subr.mxu0 0.0
    %2485 = vmatpush1.msra.mxu0 0.0
    %2486 = vmatprep.subr.mxu0 0.0
    %2487 = vmatpush1.msra.mxu0 0.0
    %2488 = vmatprep.subr.mxu0 0.0
    %2489 = vmatpush1.msra.mxu0 0.0
    %2490 = vmatprep.subr.mxu0 0.0
    %2491 = vmatpush1.msra.mxu0 0.0
    %2492 = vmatprep.subr.mxu0 0.0
    %2493 = vmatpush1.msra.mxu0 0.0
    %2494 = vmatprep.subr.mxu0 0.0
    %2495 = vmatpush1.msra.mxu0 0.0
    %2496 = vmatprep.subr.mxu0 0.0
    %2497 = vmatpush1.msra.mxu0 0.0
    %2498 = vmatprep.subr.mxu0 0.0
    %2499 = vmatpush1.msra.mxu0 0.0
    %2500 = vmatprep.subr.mxu0 0.0
    %2501 = vmatpush1.msra.mxu0 0.0
    %2502 = vmatprep.subr.mxu0 0.0
    %2503 = vmatpush1.msra.mxu0 0.0
    %2504 = vmatprep.subr.mxu0 0.0
    %2505 = vmatpush1.msra.mxu0 0.0
    %2506 = vmatprep.subr.mxu0 0.0
    %2507 = vmatpush1.msra.mxu0 0.0
    %2508 = vmatprep.subr.mxu0 0.0
    %2509 = vmatpush1.msra.mxu0 0.0
    %2510 = vmatprep.subr.mxu0 0.0
    %2511 = vmatpush1.msra.mxu0 0.0
    %2512 = vmatprep.subr.mxu0 0.0
    %2513 = vmatpush1.msra.mxu0 0.0
    %2514 = vmatprep.subr.mxu0 0.0
    %2515 = vmatpush1.msra.mxu0 0.0
    %2516 = vmatprep.subr.mxu0 0.0
    %2517 = vmatpush1.msra.mxu0 0.0
    %2518 = vmatprep.subr.mxu0 0.0
    %2519 = vmatpush1.msra.mxu0 0.0
    %2520 = vmatprep.subr.mxu0 0.0
    %2521 = vmatpush1.msra.mxu0 0.0
    %2522 = vmatprep.subr.mxu0 0.0
    %2523 = vmatpush1.msra.mxu0 0.0
    %2524 = vmatprep.subr.mxu0 0.0
    %2525 = vmatpush1.msra.mxu0 0.0
    %2526 = vmatprep.mubr.f32.mxu0 0.0
    %2527 = vmatmul.mubr.f32.gmra.mrb[0].mxu0 %v2454
    %v2528 = vpop.f32.mrb[0].mxu0
    %v2529 = vadd.f32 %v2451, %v2528
    %v2530 = vpop.f32.mrb[0].mxu0
    %2531 = vmatprep.mubr.f32.mxu0 0.0
    %2532 = vmatmul.mubr.f32.gmra.mrb[0].mxu0 %v2457
    %v2533 = vpop.f32.mrb[0].mxu0
    %v2534 = vadd.f32 %v2451, %v2533
    %v2535 = vpop.f32.mrb[0].mxu0
    %2536 = vdwg.mxu0
    %v2537 = vmax.f32 %v2529, 0.0
    %v2538 = vmax.f32 %v2534, 0.0
    %v2539 = vld [vmem:[#allocation2 + $0xc30] sm:$0xff]
    %v2540 = vld [vmem:[#allocation2 + $0xc38] sm:$0xff]
    %v2541 = vld [vmem:[#allocation2 + $0xc40] sm:$0xff]
    %v2542 = vld [vmem:[#allocation2 + $0xc48] sm:$0xff]
    %v2543 = vld [vmem:[#allocation2 + $0x11d0] sm:$0x1]
    %v2544 = vlaneseq
    %v2545 = vshrl.u32 %v2544, 7
    %v2546 = vsub.s32 0, %v2545
    %v2547 = vrot.slane %v2543, %v2546
    %v2549 = vsel %vm37, %v2537, 0
    %v2552 = vsel %vm37, %v2538, 0
    %2554 = vmatprep.subr.mxu0 0.0
    %2555 = vmatpush1.msra.mxu0 %v2539
    %2556 = vmatprep.subr.mxu0 0.0
    %2557 = vmatpush1.msra.mxu0 %v2540
    %2558 = vmatprep.subr.mxu0 0.0
    %2559 = vmatpush1.msra.mxu0 %v2541
    %2560 = vmatprep.subr.mxu0 0.0
    %2561 = vmatpush1.msra.mxu0 %v2542
    %2562 = vmatprep.subr.mxu0 0.0
    %2563 = vmatpush1.msra.mxu0 0.0
    %2564 = vmatprep.subr.mxu0 0.0
    %2565 = vmatpush1.msra.mxu0 0.0
    %2566 = vmatprep.subr.mxu0 0.0
    %2567 = vmatpush1.msra.mxu0 0.0
    %2568 = vmatprep.subr.mxu0 0.0
    %2569 = vmatpush1.msra.mxu0 0.0
    %2570 = vmatprep.subr.mxu0 0.0
    %2571 = vmatpush1.msra.mxu0 0.0
    %2572 = vmatprep.subr.mxu0 0.0
    %2573 = vmatpush1.msra.mxu0 0.0
    %2574 = vmatprep.subr.mxu0 0.0
    %2575 = vmatpush1.msra.mxu0 0.0
    %2576 = vmatprep.subr.mxu0 0.0
    %2577 = vmatpush1.msra.mxu0 0.0
    %2578 = vmatprep.subr.mxu0 0.0
    %2579 = vmatpush1.msra.mxu0 0.0
    %2580 = vmatprep.subr.mxu0 0.0
    %2581 = vmatpush1.msra.mxu0 0.0
    %2582 = vmatprep.subr.mxu0 0.0
    %2583 = vmatpush1.msra.mxu0 0.0
    %2584 = vmatprep.subr.mxu0 0.0
    %2585 = vmatpush1.msra.mxu0 0.0
    %2586 = vmatprep.subr.mxu0 0.0
    %2587 = vmatpush1.msra.mxu0 0.0
    %2588 = vmatprep.subr.mxu0 0.0
    %2589 = vmatpush1.msra.mxu0 0.0
    %2590 = vmatprep.subr.mxu0 0.0
    %2591 = vmatpush1.msra.mxu0 0.0
    %2592 = vmatprep.subr.mxu0 0.0
    %2593 = vmatpush1.msra.mxu0 0.0
    %2594 = vmatprep.subr.mxu0 0.0
    %2595 = vmatpush1.msra.mxu0 0.0
    %2596 = vmatprep.subr.mxu0 0.0
    %2597 = vmatpush1.msra.mxu0 0.0
    %2598 = vmatprep.subr.mxu0 0.0
    %2599 = vmatpush1.msra.mxu0 0.0
    %2600 = vmatprep.subr.mxu0 0.0
    %2601 = vmatpush1.msra.mxu0 0.0
    %2602 = vmatprep.subr.mxu0 0.0
    %2603 = vmatpush1.msra.mxu0 0.0
    %2604 = vmatprep.subr.mxu0 0.0
    %2605 = vmatpush1.msra.mxu0 0.0
    %2606 = vmatprep.subr.mxu0 0.0
    %2607 = vmatpush1.msra.mxu0 0.0
    %2608 = vmatprep.subr.mxu0 0.0
    %2609 = vmatpush1.msra.mxu0 0.0
    %2610 = vmatprep.subr.mxu0 0.0
    %2611 = vmatpush1.msra.mxu0 0.0
    %2612 = vmatprep.subr.mxu0 0.0
    %2613 = vmatpush1.msra.mxu0 0.0
    %2614 = vmatprep.subr.mxu0 0.0
    %2615 = vmatpush1.msra.mxu0 0.0
    %2616 = vmatprep.subr.mxu0 0.0
    %2617 = vmatpush1.msra.mxu0 0.0
    %2618 = vmatprep.mubr.f32.mxu0 0.0
    %2619 = vmatmul.mubr.f32.gmra.mrb[0].mxu0 %v2549
    %v2620 = vpop.f32.mrb[0].mxu0
    %v2621 = vadd.f32 %v2547, %v2620
    %v2622 = vpop.f32.mrb[0].mxu0
    %2623 = vmatprep.mubr.f32.mxu0 0.0
    %2624 = vmatmul.mubr.f32.gmra.mrb[0].mxu0 %v2552
    %v2625 = vpop.f32.mrb[0].mxu0
    %v2626 = vadd.f32 %v2547, %v2625
    %v2627 = vpop.f32.mrb[0].mxu0
    %2628 = vdwg.mxu0
    %v2629 = vmax.f32 %v2621, 0.0
    %v2630 = vmax.f32 %v2626, 0.0
    %v2631 = vld [vmem:[#allocation2 + $0xc50] sm:$0x7]
    %v2632 = vld [vmem:[#allocation2 + $0x11d8] sm:$0x1]
    %v2633 = vlaneseq
    %v2634 = vshrl.u32 %v2633, 7
    %v2635 = vsub.s32 0, %v2634
    %v2636 = vrot.slane %v2632, %v2635
    %v2638 = vsel %vm627, %v2631, 0
    %2640 = vmatprep.subr.mxu0 0.0
    %2641 = vmatpush1.msra.mxu0 %v2638
    %2642 = vmatprep.subr.mxu0 0.0
    %2643 = vmatpush1.msra.mxu0 0.0
    %2644 = vmatprep.subr.mxu0 0.0
    %2645 = vmatpush1.msra.mxu0 0.0
    %2646 = vmatprep.subr.mxu0 0.0
    %2647 = vmatpush1.msra.mxu0 0.0
    %2648 = vmatprep.subr.mxu0 0.0
    %2649 = vmatpush1.msra.mxu0 0.0
    %2650 = vmatprep.subr.mxu0 0.0
    %2651 = vmatpush1.msra.mxu0 0.0
    %2652 = vmatprep.subr.mxu0 0.0
    %2653 = vmatpush1.msra.mxu0 0.0
    %2654 = vmatprep.subr.mxu0 0.0
    %2655 = vmatpush1.msra.mxu0 0.0
    %2656 = vmatprep.subr.mxu0 0.0
    %2657 = vmatpush1.msra.mxu0 0.0
    %2658 = vmatprep.subr.mxu0 0.0
    %2659 = vmatpush1.msra.mxu0 0.0
    %2660 = vmatprep.subr.mxu0 0.0
    %2661 = vmatpush1.msra.mxu0 0.0
    %2662 = vmatprep.subr.mxu0 0.0
    %2663 = vmatpush1.msra.mxu0 0.0
    %2664 = vmatprep.subr.mxu0 0.0
    %2665 = vmatpush1.msra.mxu0 0.0
    %2666 = vmatprep.subr.mxu0 0.0
    %2667 = vmatpush1.msra.mxu0 0.0
    %2668 = vmatprep.subr.mxu0 0.0
    %2669 = vmatpush1.msra.mxu0 0.0
    %2670 = vmatprep.subr.mxu0 0.0
    %2671 = vmatpush1.msra.mxu0 0.0
    %2672 = vmatprep.subr.mxu0 0.0
    %2673 = vmatpush1.msra.mxu0 0.0
    %2674 = vmatprep.subr.mxu0 0.0
    %2675 = vmatpush1.msra.mxu0 0.0
    %2676 = vmatprep.subr.mxu0 0.0
    %2677 = vmatpush1.msra.mxu0 0.0
    %2678 = vmatprep.subr.mxu0 0.0
    %2679 = vmatpush1.msra.mxu0 0.0
    %2680 = vmatprep.subr.mxu0 0.0
    %2681 = vmatpush1.msra.mxu0 0.0
    %2682 = vmatprep.subr.mxu0 0.0
    %2683 = vmatpush1.msra.mxu0 0.0
    %2684 = vmatprep.subr.mxu0 0.0
    %2685 = vmatpush1.msra.mxu0 0.0
    %2686 = vmatprep.subr.mxu0 0.0
    %2687 = vmatpush1.msra.mxu0 0.0
    %2688 = vmatprep.subr.mxu0 0.0
    %2689 = vmatpush1.msra.mxu0 0.0
    %2690 = vmatprep.subr.mxu0 0.0
    %2691 = vmatpush1.msra.mxu0 0.0
    %2692 = vmatprep.subr.mxu0 0.0
    %2693 = vmatpush1.msra.mxu0 0.0
    %2694 = vmatprep.subr.mxu0 0.0
    %2695 = vmatpush1.msra.mxu0 0.0
    %2696 = vmatprep.subr.mxu0 0.0
    %2697 = vmatpush1.msra.mxu0 0.0
    %2698 = vmatprep.subr.mxu0 0.0
    %2699 = vmatpush1.msra.mxu0 0.0
    %2700 = vmatprep.subr.mxu0 0.0
    %2701 = vmatpush1.msra.mxu0 0.0
    %2702 = vmatprep.subr.mxu0 0.0
    %2703 = vmatpush1.msra.mxu0 0.0
    %2704 = vmatprep.mubr.f32.mxu0 0.0
    %2705 = vmatmul.mubr.f32.gmra.mrb[0].mxu0 %v2172
    %v2706 = vpop.f32.mrb[0].mxu0
    %v2707 = vadd.f32 %v2636, %v2706
    %v2708 = vpop.f32.mrb[0].mxu0
    %2709 = vmatprep.mubr.f32.mxu0 0.0
    %2710 = vmatmul.mubr.f32.gmra.mrb[0].mxu0 %v2175
    %v2711 = vpop.f32.mrb[0].mxu0
    %v2712 = vadd.f32 %v2636, %v2711
    %v2713 = vpop.f32.mrb[0].mxu0
    %2714 = vmatprep.mubr.f32.mxu0 0.0
    %2715 = vmatmul.mubr.f32.gmra.mrb[0].mxu0 %v2178
    %v2716 = vpop.f32.mrb[0].mxu0
    %v2717 = vadd.f32 %v2636, %v2716
    %v2718 = vpop.f32.mrb[0].mxu0
    %2719 = vdwg.mxu0
    %v2721 = vsel %vm604, %v2630, 0
    %2723 = vmatprep.subr.mxu0 0.0
    %2724 = vmatpush1.msra.mxu0 %v2629
    %2725 = vmatprep.subr.mxu0 0.0
    %2726 = vmatpush1.msra.mxu0 %v2721
    %2727 = vmatprep.subr.mxu0 0.0
    %2728 = vmatpush1.msra.mxu0 0.0
    %2729 = vmatprep.subr.mxu0 0.0
    %2730 = vmatpush1.msra.mxu0 0.0
    %2731 = vmatprep.subr.mxu0 0.0
    %2732 = vmatpush1.msra.mxu0 0.0
    %2733 = vmatprep.subr.mxu0 0.0
    %2734 = vmatpush1.msra.mxu0 0.0
    %2735 = vmatprep.subr.mxu0 0.0
    %2736 = vmatpush1.msra.mxu0 0.0
    %2737 = vmatprep.subr.mxu0 0.0
    %2738 = vmatpush1.msra.mxu0 0.0
    %2739 = vmatprep.subr.mxu0 0.0
    %2740 = vmatpush1.msra.mxu0 0.0
    %2741 = vmatprep.subr.mxu0 0.0
    %2742 = vmatpush1.msra.mxu0 0.0
    %2743 = vmatprep.subr.mxu0 0.0
    %2744 = vmatpush1.msra.mxu0 0.0
    %2745 = vmatprep.subr.mxu0 0.0
    %2746 = vmatpush1.msra.mxu0 0.0
    %2747 = vmatprep.subr.mxu0 0.0
    %2748 = vmatpush1.msra.mxu0 0.0
    %2749 = vmatprep.subr.mxu0 0.0
    %2750 = vmatpush1.msra.mxu0 0.0
    %2751 = vmatprep.subr.mxu0 0.0
    %2752 = vmatpush1.msra.mxu0 0.0
    %2753 = vmatprep.subr.mxu0 0.0
    %2754 = vmatpush1.msra.mxu0 0.0
    %2755 = vmatprep.subr.mxu0 0.0
    %2756 = vmatpush1.msra.mxu0 0.0
    %2757 = vmatprep.subr.mxu0 0.0
    %2758 = vmatpush1.msra.mxu0 0.0
    %2759 = vmatprep.subr.mxu0 0.0
    %2760 = vmatpush1.msra.mxu0 0.0
    %2761 = vmatprep.subr.mxu0 0.0
    %2762 = vmatpush1.msra.mxu0 0.0
    %2763 = vmatprep.subr.mxu0 0.0
    %2764 = vmatpush1.msra.mxu0 0.0
    %2765 = vmatprep.subr.mxu0 0.0
    %2766 = vmatpush1.msra.mxu0 0.0
    %2767 = vmatprep.subr.mxu0 0.0
    %2768 = vmatpush1.msra.mxu0 0.0
    %2769 = vmatprep.subr.mxu0 0.0
    %2770 = vmatpush1.msra.mxu0 0.0
    %2771 = vmatprep.subr.mxu0 0.0
    %2772 = vmatpush1.msra.mxu0 0.0
    %2773 = vmatprep.subr.mxu0 0.0
    %2774 = vmatpush1.msra.mxu0 0.0
    %2775 = vmatprep.subr.mxu0 0.0
    %2776 = vmatpush1.msra.mxu0 0.0
    %2777 = vmatprep.subr.mxu0 0.0
    %2778 = vmatpush1.msra.mxu0 0.0
    %2779 = vmatprep.subr.mxu0 0.0
    %2780 = vmatpush1.msra.mxu0 0.0
    %2781 = vmatprep.subr.mxu0 0.0
    %2782 = vmatpush1.msra.mxu0 0.0
    %2783 = vmatprep.subr.mxu0 0.0
    %2784 = vmatpush1.msra.mxu0 0.0
    %2785 = vmatprep.subr.mxu0 0.0
    %2786 = vmatpush1.msra.mxu0 0.0
    %2787 = vmatprep.mubr.f32.mxu0 0.0
    %2788 = vmatmul.mubr.f32.gmra.mrb[0].mxu0 %v2265
    %v2789 = vpop.f32.mrb[0].mxu0
    %v2790 = vadd.f32 %v2707, %v2789
    %v2791 = vpop.f32.mrb[0].mxu0
    %2792 = vmatprep.mubr.f32.mxu0 0.0
    %2793 = vmatmul.mubr.f32.gmra.mrb[0].mxu0 %v2268
    %v2794 = vpop.f32.mrb[0].mxu0
    %v2795 = vadd.f32 %v2712, %v2794
    %v2796 = vpop.f32.mrb[0].mxu0
    %2797 = vmatprep.mubr.f32.mxu0 0.0
    %2798 = vmatmul.mubr.f32.gmra.mrb[0].mxu0 %v2271
    %v2799 = vpop.f32.mrb[0].mxu0
    %v2800 = vadd.f32 %v2717, %v2799
    %v2801 = vpop.f32.mrb[0].mxu0
    %2802 = vdwg.mxu0
    %v2803 = vmax.f32 %v2790, 0.0
    %v2804 = vmax.f32 %v2795, 0.0
    %v2805 = vmax.f32 %v2800, 0.0
    %v2807 = vsel %vm604, %v2805, 0
    %2809 = vmatprep.subr.mxu0 0.0
    %2810 = vmatpush1.msra.mxu0 %v2803
    %2811 = vmatprep.subr.mxu0 0.0
    %2812 = vmatpush1.msra.mxu0 %v2804
    %2813 = vmatprep.subr.mxu0 0.0
    %2814 = vmatpush1.msra.mxu0 %v2807
    %2815 = vmatprep.subr.mxu0 0.0
    %2816 = vmatpush1.msra.mxu0 0.0
    %2817 = vmatprep.subr.mxu0 0.0
    %2818 = vmatpush1.msra.mxu0 0.0
    %2819 = vmatprep.subr.mxu0 0.0
    %2820 = vmatpush1.msra.mxu0 0.0
    %2821 = vmatprep.subr.mxu0 0.0
    %2822 = vmatpush1.msra.mxu0 0.0
    %2823 = vmatprep.subr.mxu0 0.0
    %2824 = vmatpush1.msra.mxu0 0.0
    %2825 = vmatprep.subr.mxu0 0.0
    %2826 = vmatpush1.msra.mxu0 0.0
    %2827 = vmatprep.subr.mxu0 0.0
    %2828 = vmatpush1.msra.mxu0 0.0
    %2829 = vmatprep.subr.mxu0 0.0
    %2830 = vmatpush1.msra.mxu0 0.0
    %2831 = vmatprep.subr.mxu0 0.0
    %2832 = vmatpush1.msra.mxu0 0.0
    %2833 = vmatprep.subr.mxu0 0.0
    %2834 = vmatpush1.msra.mxu0 0.0
    %2835 = vmatprep.subr.mxu0 0.0
    %2836 = vmatpush1.msra.mxu0 0.0
    %2837 = vmatprep.subr.mxu0 0.0
    %2838 = vmatpush1.msra.mxu0 0.0
    %2839 = vmatprep.subr.mxu0 0.0
    %2840 = vmatpush1.msra.mxu0 0.0
    %2841 = vmatprep.subr.mxu0 0.0
    %2842 = vmatpush1.msra.mxu0 0.0
    %2843 = vmatprep.subr.mxu0 0.0
    %2844 = vmatpush1.msra.mxu0 0.0
    %2845 = vmatprep.subr.mxu0 0.0
    %2846 = vmatpush1.msra.mxu0 0.0
    %2847 = vmatprep.subr.mxu0 0.0
    %2848 = vmatpush1.msra.mxu0 0.0
    %2849 = vmatprep.subr.mxu0 0.0
    %2850 = vmatpush1.msra.mxu0 0.0
    %2851 = vmatprep.subr.mxu0 0.0
    %2852 = vmatpush1.msra.mxu0 0.0
    %2853 = vmatprep.subr.mxu0 0.0
    %2854 = vmatpush1.msra.mxu0 0.0
    %2855 = vmatprep.subr.mxu0 0.0
    %2856 = vmatpush1.msra.mxu0 0.0
    %2857 = vmatprep.subr.mxu0 0.0
    %2858 = vmatpush1.msra.mxu0 0.0
    %2859 = vmatprep.subr.mxu0 0.0
    %2860 = vmatpush1.msra.mxu0 0.0
    %2861 = vmatprep.subr.mxu0 0.0
    %2862 = vmatpush1.msra.mxu0 0.0
    %2863 = vmatprep.subr.mxu0 0.0
    %2864 = vmatpush1.msra.mxu0 0.0
    %2865 = vmatprep.subr.mxu0 0.0
    %2866 = vmatpush1.msra.mxu0 0.0
    %2867 = vmatprep.subr.mxu0 0.0
    %2868 = vmatpush1.msra.mxu0 0.0
    %2869 = vmatprep.subr.mxu0 0.0
    %2870 = vmatpush1.msra.mxu0 0.0
    %2871 = vmatprep.subr.mxu0 0.0
    %2872 = vmatpush1.msra.mxu0 0.0
    %2873 = vmatprep.mubr.f32.mxu0 0.0
    %2874 = vmatmul.mubr.f32.gmra.mrb[0].mxu0 %v2361
    %v2875 = vpop.f32.mrb[0].mxu0
    %v2876 = vadd.f32 0.0, %v2875
    %v2877 = vpop.f32.mrb[0].mxu0
    %2878 = vmatprep.mubr.f32.mxu0 0.0
    %2879 = vmatmul.mubr.f32.gmra.mrb[0].mxu0 %v2364
    %v2880 = vpop.f32.mrb[0].mxu0
    %v2881 = vadd.f32 0.0, %v2880
    %v2882 = vpop.f32.mrb[0].mxu0
    %2883 = vdwg.mxu0
    %v2884 = vadd.f32 %v2629, %v2876
    %v2885 = vadd.f32 %v2630, %v2881
    %v2886 = vld [vmem:[#allocation2 + $0xc58] sm:$0xff]
    %v2887 = vld [vmem:[#allocation2 + $0xc60] sm:$0xff]
    %v2888 = vld [vmem:[#allocation2 + $0xc68] sm:$0xff]
    %v2889 = vld [vmem:[#allocation2 + $0xc70] sm:$0xff]
    %v2890 = vld [vmem:[#allocation2 + $0x11e0] sm:$0x1]
    %v2891 = vlaneseq
    %v2892 = vshrl.u32 %v2891, 7
    %v2893 = vsub.s32 0, %v2892
    %v2894 = vrot.slane %v2890, %v2893
    %v2896 = vsel %vm37, %v2884, 0
    %v2899 = vsel %vm37, %v2885, 0
    %2901 = vmatprep.subr.mxu0 0.0
    %2902 = vmatpush1.msra.mxu0 %v2886
    %2903 = vmatprep.subr.mxu0 0.0
    %2904 = vmatpush1.msra.mxu0 %v2887
    %2905 = vmatprep.subr.mxu0 0.0
    %2906 = vmatpush1.msra.mxu0 %v2888
    %2907 = vmatprep.subr.mxu0 0.0
    %2908 = vmatpush1.msra.mxu0 %v2889
    %2909 = vmatprep.subr.mxu0 0.0
    %2910 = vmatpush1.msra.mxu0 0.0
    %2911 = vmatprep.subr.mxu0 0.0
    %2912 = vmatpush1.msra.mxu0 0.0
    %2913 = vmatprep.subr.mxu0 0.0
    %2914 = vmatpush1.msra.mxu0 0.0
    %2915 = vmatprep.subr.mxu0 0.0
    %2916 = vmatpush1.msra.mxu0 0.0
    %2917 = vmatprep.subr.mxu0 0.0
    %2918 = vmatpush1.msra.mxu0 0.0
    %2919 = vmatprep.subr.mxu0 0.0
    %2920 = vmatpush1.msra.mxu0 0.0
    %2921 = vmatprep.subr.mxu0 0.0
    %2922 = vmatpush1.msra.mxu0 0.0
    %2923 = vmatprep.subr.mxu0 0.0
    %2924 = vmatpush1.msra.mxu0 0.0
    %2925 = vmatprep.subr.mxu0 0.0
    %2926 = vmatpush1.msra.mxu0 0.0
    %2927 = vmatprep.subr.mxu0 0.0
    %2928 = vmatpush1.msra.mxu0 0.0
    %2929 = vmatprep.subr.mxu0 0.0
    %2930 = vmatpush1.msra.mxu0 0.0
    %2931 = vmatprep.subr.mxu0 0.0
    %2932 = vmatpush1.msra.mxu0 0.0
    %2933 = vmatprep.subr.mxu0 0.0
    %2934 = vmatpush1.msra.mxu0 0.0
    %2935 = vmatprep.subr.mxu0 0.0
    %2936 = vmatpush1.msra.mxu0 0.0
    %2937 = vmatprep.subr.mxu0 0.0
    %2938 = vmatpush1.msra.mxu0 0.0
    %2939 = vmatprep.subr.mxu0 0.0
    %2940 = vmatpush1.msra.mxu0 0.0
    %2941 = vmatprep.subr.mxu0 0.0
    %2942 = vmatpush1.msra.mxu0 0.0
    %2943 = vmatprep.subr.mxu0 0.0
    %2944 = vmatpush1.msra.mxu0 0.0
    %2945 = vmatprep.subr.mxu0 0.0
    %2946 = vmatpush1.msra.mxu0 0.0
    %2947 = vmatprep.subr.mxu0 0.0
    %2948 = vmatpush1.msra.mxu0 0.0
    %2949 = vmatprep.subr.mxu0 0.0
    %2950 = vmatpush1.msra.mxu0 0.0
    %2951 = vmatprep.subr.mxu0 0.0
    %2952 = vmatpush1.msra.mxu0 0.0
    %2953 = vmatprep.subr.mxu0 0.0
    %2954 = vmatpush1.msra.mxu0 0.0
    %2955 = vmatprep.subr.mxu0 0.0
    %2956 = vmatpush1.msra.mxu0 0.0
    %2957 = vmatprep.subr.mxu0 0.0
    %2958 = vmatpush1.msra.mxu0 0.0
    %2959 = vmatprep.subr.mxu0 0.0
    %2960 = vmatpush1.msra.mxu0 0.0
    %2961 = vmatprep.subr.mxu0 0.0
    %2962 = vmatpush1.msra.mxu0 0.0
    %2963 = vmatprep.subr.mxu0 0.0
    %2964 = vmatpush1.msra.mxu0 0.0
    %2965 = vmatprep.mubr.f32.mxu0 0.0
    %2966 = vmatmul.mubr.f32.gmra.mrb[0].mxu0 %v2896
    %v2967 = vpop.f32.mrb[0].mxu0
    %v2968 = vadd.f32 %v2894, %v2967
    %v2969 = vpop.f32.mrb[0].mxu0
    %2970 = vmatprep.mubr.f32.mxu0 0.0
    %2971 = vmatmul.mubr.f32.gmra.mrb[0].mxu0 %v2899
    %v2972 = vpop.f32.mrb[0].mxu0
    %v2973 = vadd.f32 %v2894, %v2972
    %v2974 = vpop.f32.mrb[0].mxu0
    %2975 = vdwg.mxu0
    %v2976 = vmax.f32 %v2968, 0.0
    %v2977 = vmax.f32 %v2973, 0.0
    %v2978 = vld [vmem:[#allocation2 + $0xc78] sm:$0xff]
    %v2979 = vld [vmem:[#allocation2 + $0xc80] sm:$0xff]
    %v2980 = vld [vmem:[#allocation2 + $0xc88] sm:$0xff]
    %v2981 = vld [vmem:[#allocation2 + $0xc90] sm:$0xff]
    %v2982 = vld [vmem:[#allocation2 + $0x11e8] sm:$0x1]
    %v2983 = vlaneseq
    %v2984 = vshrl.u32 %v2983, 7
    %v2985 = vsub.s32 0, %v2984
    %v2986 = vrot.slane %v2982, %v2985
    %v2988 = vsel %vm37, %v2976, 0
    %v2991 = vsel %vm37, %v2977, 0
    %2993 = vmatprep.subr.mxu0 0.0
    %2994 = vmatpush1.msra.mxu0 %v2978
    %2995 = vmatprep.subr.mxu0 0.0
    %2996 = vmatpush1.msra.mxu0 %v2979
    %2997 = vmatprep.subr.mxu0 0.0
    %2998 = vmatpush1.msra.mxu0 %v2980
    %2999 = vmatprep.subr.mxu0 0.0
    %3000 = vmatpush1.msra.mxu0 %v2981
    %3001 = vmatprep.subr.mxu0 0.0
    %3002 = vmatpush1.msra.mxu0 0.0
    %3003 = vmatprep.subr.mxu0 0.0
    %3004 = vmatpush1.msra.mxu0 0.0
    %3005 = vmatprep.subr.mxu0 0.0
    %3006 = vmatpush1.msra.mxu0 0.0
    %3007 = vmatprep.subr.mxu0 0.0
    %3008 = vmatpush1.msra.mxu0 0.0
    %3009 = vmatprep.subr.mxu0 0.0
    %3010 = vmatpush1.msra.mxu0 0.0
    %3011 = vmatprep.subr.mxu0 0.0
    %3012 = vmatpush1.msra.mxu0 0.0
    %3013 = vmatprep.subr.mxu0 0.0
    %3014 = vmatpush1.msra.mxu0 0.0
    %3015 = vmatprep.subr.mxu0 0.0
    %3016 = vmatpush1.msra.mxu0 0.0
    %3017 = vmatprep.subr.mxu0 0.0
    %3018 = vmatpush1.msra.mxu0 0.0
    %3019 = vmatprep.subr.mxu0 0.0
    %3020 = vmatpush1.msra.mxu0 0.0
    %3021 = vmatprep.subr.mxu0 0.0
    %3022 = vmatpush1.msra.mxu0 0.0
    %3023 = vmatprep.subr.mxu0 0.0
    %3024 = vmatpush1.msra.mxu0 0.0
    %3025 = vmatprep.subr.mxu0 0.0
    %3026 = vmatpush1.msra.mxu0 0.0
    %3027 = vmatprep.subr.mxu0 0.0
    %3028 = vmatpush1.msra.mxu0 0.0
    %3029 = vmatprep.subr.mxu0 0.0
    %3030 = vmatpush1.msra.mxu0 0.0
    %3031 = vmatprep.subr.mxu0 0.0
    %3032 = vmatpush1.msra.mxu0 0.0
    %3033 = vmatprep.subr.mxu0 0.0
    %3034 = vmatpush1.msra.mxu0 0.0
    %3035 = vmatprep.subr.mxu0 0.0
    %3036 = vmatpush1.msra.mxu0 0.0
    %3037 = vmatprep.subr.mxu0 0.0
    %3038 = vmatpush1.msra.mxu0 0.0
    %3039 = vmatprep.subr.mxu0 0.0
    %3040 = vmatpush1.msra.mxu0 0.0
    %3041 = vmatprep.subr.mxu0 0.0
    %3042 = vmatpush1.msra.mxu0 0.0
    %3043 = vmatprep.subr.mxu0 0.0
    %3044 = vmatpush1.msra.mxu0 0.0
    %3045 = vmatprep.subr.mxu0 0.0
    %3046 = vmatpush1.msra.mxu0 0.0
    %3047 = vmatprep.subr.mxu0 0.0
    %3048 = vmatpush1.msra.mxu0 0.0
    %3049 = vmatprep.subr.mxu0 0.0
    %3050 = vmatpush1.msra.mxu0 0.0
    %3051 = vmatprep.subr.mxu0 0.0
    %3052 = vmatpush1.msra.mxu0 0.0
    %3053 = vmatprep.subr.mxu0 0.0
    %3054 = vmatpush1.msra.mxu0 0.0
    %3055 = vmatprep.subr.mxu0 0.0
    %3056 = vmatpush1.msra.mxu0 0.0
    %3057 = vmatprep.mubr.f32.mxu0 0.0
    %3058 = vmatmul.mubr.f32.gmra.mrb[0].mxu0 %v2988
    %v3059 = vpop.f32.mrb[0].mxu0
    %v3060 = vadd.f32 %v2986, %v3059
    %v3061 = vpop.f32.mrb[0].mxu0
    %3062 = vmatprep.mubr.f32.mxu0 0.0
    %3063 = vmatmul.mubr.f32.gmra.mrb[0].mxu0 %v2991
    %v3064 = vpop.f32.mrb[0].mxu0
    %v3065 = vadd.f32 %v2986, %v3064
    %v3066 = vpop.f32.mrb[0].mxu0
    %3067 = vdwg.mxu0
    %v3068 = vmax.f32 %v3060, 0.0
    %v3069 = vmax.f32 %v3065, 0.0
    %v3070 = vld [vmem:[%s0 + $0x90] sm:$0x3]
    %v3072 = vsel %vm2263, %v3070, 0
    %v3075 = vsel %vm604, %v3069, 0
    %3077 = vmatprep.subr.mxu0 0.0
    %3078 = vmatpush1.msra.mxu0 %v3068
    %3079 = vmatprep.subr.mxu0 0.0
    %3080 = vmatpush1.msra.mxu0 %v3075
    %3081 = vmatprep.subr.mxu0 0.0
    %3082 = vmatpush1.msra.mxu0 0.0
    %3083 = vmatprep.subr.mxu0 0.0
    %3084 = vmatpush1.msra.mxu0 0.0
    %3085 = vmatprep.subr.mxu0 0.0
    %3086 = vmatpush1.msra.mxu0 0.0
    %3087 = vmatprep.subr.mxu0 0.0
    %3088 = vmatpush1.msra.mxu0 0.0
    %3089 = vmatprep.subr.mxu0 0.0
    %3090 = vmatpush1.msra.mxu0 0.0
    %3091 = vmatprep.subr.mxu0 0.0
    %3092 = vmatpush1.msra.mxu0 0.0
    %3093 = vmatprep.subr.mxu0 0.0
    %3094 = vmatpush1.msra.mxu0 0.0
    %3095 = vmatprep.subr.mxu0 0.0
    %3096 = vmatpush1.msra.mxu0 0.0
    %3097 = vmatprep.subr.mxu0 0.0
    %3098 = vmatpush1.msra.mxu0 0.0
    %3099 = vmatprep.subr.mxu0 0.0
    %3100 = vmatpush1.msra.mxu0 0.0
    %3101 = vmatprep.subr.mxu0 0.0
    %3102 = vmatpush1.msra.mxu0 0.0
    %3103 = vmatprep.subr.mxu0 0.0
    %3104 = vmatpush1.msra.mxu0 0.0
    %3105 = vmatprep.subr.mxu0 0.0
    %3106 = vmatpush1.msra.mxu0 0.0
    %3107 = vmatprep.subr.mxu0 0.0
    %3108 = vmatpush1.msra.mxu0 0.0
    %3109 = vmatprep.subr.mxu0 0.0
    %3110 = vmatpush1.msra.mxu0 0.0
    %3111 = vmatprep.subr.mxu0 0.0
    %3112 = vmatpush1.msra.mxu0 0.0
    %3113 = vmatprep.subr.mxu0 0.0
    %3114 = vmatpush1.msra.mxu0 0.0
    %3115 = vmatprep.subr.mxu0 0.0
    %3116 = vmatpush1.msra.mxu0 0.0
    %3117 = vmatprep.subr.mxu0 0.0
    %3118 = vmatpush1.msra.mxu0 0.0
    %3119 = vmatprep.subr.mxu0 0.0
    %3120 = vmatpush1.msra.mxu0 0.0
    %3121 = vmatprep.subr.mxu0 0.0
    %3122 = vmatpush1.msra.mxu0 0.0
    %3123 = vmatprep.subr.mxu0 0.0
    %3124 = vmatpush1.msra.mxu0 0.0
    %3125 = vmatprep.subr.mxu0 0.0
    %3126 = vmatpush1.msra.mxu0 0.0
    %3127 = vmatprep.subr.mxu0 0.0
    %3128 = vmatpush1.msra.mxu0 0.0
    %3129 = vmatprep.subr.mxu0 0.0
    %3130 = vmatpush1.msra.mxu0 0.0
    %3131 = vmatprep.subr.mxu0 0.0
    %3132 = vmatpush1.msra.mxu0 0.0
    %3133 = vmatprep.subr.mxu0 0.0
    %3134 = vmatpush1.msra.mxu0 0.0
    %3135 = vmatprep.subr.mxu0 0.0
    %3136 = vmatpush1.msra.mxu0 0.0
    %3137 = vmatprep.subr.mxu0 0.0
    %3138 = vmatpush1.msra.mxu0 0.0
    %3139 = vmatprep.subr.mxu0 0.0
    %3140 = vmatpush1.msra.mxu0 0.0
    %3141 = vmatprep.mubr.f32.mxu0 0.0
    %3142 = vmatmul.mubr.f32.gmra.mrb[0].mxu0 %v3072
    %v3143 = vpop.f32.mrb[0].mxu0
    %v3144 = vadd.f32 0.0, %v3143
    %v3145 = vpop.f32.mrb[0].mxu0
    %3146 = vdwg.mxu0
    %v3147 = vmul.f32 %v2153, %v3144
    %v3148 = vld [vmem:[#allocation2 + $0xc98] sm:$0xff]
    %v3149 = vld [vmem:[#allocation2 + $0xca0] sm:$0xff]
    %v3150 = vld [vmem:[#allocation2 + $0xca8] sm:$0xff]
    %v3151 = vld [vmem:[#allocation2 + $0xcb0] sm:$0xff]
    %v3152 = vld [vmem:[#allocation2 + $0xcb8] sm:$0xff]
    %v3153 = vld [vmem:[#allocation2 + $0xcc0] sm:$0xff]
    %v3154 = vld [vmem:[#allocation2 + $0xcc8] sm:$0xff]
    %v3155 = vld [vmem:[#allocation2 + $0xcd0] sm:$0xff]
    %v3156 = vld [vmem:[#allocation2 + $0xcd8] sm:$0xff]
    %v3157 = vld [vmem:[#allocation2 + $0xce0] sm:$0xff]
    %v3158 = vld [vmem:[#allocation2 + $0xce8] sm:$0xff]
    %v3159 = vld [vmem:[#allocation2 + $0xcf0] sm:$0xff]
    %v3160 = vld [vmem:[#allocation2 + $0xcf8] sm:$0xff]
    %v3161 = vld [vmem:[#allocation2 + $0xd00] sm:$0xff]
    %v3162 = vld [vmem:[#allocation2 + $0xd08] sm:$0xff]
    %v3163 = vld [vmem:[#allocation2 + $0xd10] sm:$0xff]
    %v3164 = vld [vmem:[#allocation2 + $0xd18] sm:$0xff]
    %v3165 = vld [vmem:[#allocation2 + $0xd20] sm:$0xff]
    %v3166 = vld [vmem:[#allocation2 + $0xd28] sm:$0xff]
    %v3167 = vld [vmem:[#allocation2 + $0xd30] sm:$0xff]
    %v3168 = vld [vmem:[#allocation2 + $0xd38] sm:$0xff]
    %v3169 = vld [vmem:[#allocation2 + $0xd40] sm:$0xff]
    %v3170 = vld [vmem:[#allocation2 + $0xd48] sm:$0xff]
    %v3171 = vld [vmem:[#allocation2 + $0xd50] sm:$0xff]
    %v3172 = vld [vmem:[#allocation2 + $0xd58] sm:$0xff]
    %v3173 = vld [vmem:[#allocation2 + $0xd60] sm:$0xff]
    %v3174 = vld [vmem:[#allocation2 + $0xd68] sm:$0xff]
    %v3175 = vld [vmem:[#allocation2 + $0xd70] sm:$0xff]
    %v3176 = vld [vmem:[#allocation2 + $0xd78] sm:$0xff]
    %v3177 = vld [vmem:[#allocation2 + $0xd80] sm:$0xff]
    %v3178 = vld [vmem:[#allocation2 + $0xd88] sm:$0xff]
    %v3179 = vld [vmem:[#allocation2 + $0xd90] sm:$0xff]
    %v3180 = vld [vmem:[#allocation2 + $0xd98] sm:$0xff]
    %v3181 = vld [vmem:[#allocation2 + $0xda0] sm:$0xff]
    %v3182 = vld [vmem:[#allocation2 + $0xda8] sm:$0xff]
    %v3183 = vld [vmem:[#allocation2 + $0xdb0] sm:$0xff]
    %v3184 = vld [vmem:[#allocation2 + $0xdb8] sm:$0xff]
    %v3185 = vld [vmem:[#allocation2 + $0xdc0] sm:$0xff]
    %v3186 = vld [vmem:[#allocation2 + $0xdc8] sm:$0xff]
    %v3187 = vld [vmem:[#allocation2 + $0xdd0] sm:$0xff]
    %v3188 = vld [vmem:[#allocation2 + $0xdd8] sm:$0xff]
    %v3189 = vld [vmem:[#allocation2 + $0xde0] sm:$0xff]
    %v3190 = vld [vmem:[#allocation2 + $0xde8] sm:$0xff]
    %v3191 = vld [vmem:[#allocation2 + $0xdf0] sm:$0xff]
    %v3192 = vld [vmem:[#allocation2 + $0xdf8] sm:$0xff]
    %v3193 = vld [vmem:[#allocation2 + $0xe00] sm:$0xff]
    %v3194 = vld [vmem:[#allocation2 + $0xe08] sm:$0xff]
    %v3195 = vld [vmem:[#allocation2 + $0xe10] sm:$0xff]
    %v3196 = vld [vmem:[#allocation2 + $0x11f0] sm:$0x1]
    %v3197 = vlaneseq
    %v3198 = vshrl.u32 %v3197, 7
    %v3199 = vsub.s32 0, %v3198
    %v3200 = vrot.slane %v3196, %v3199
    %3201 = vmatprep.subr.mxu0 0.0
    %3202 = vmatpush1.msra.mxu0 %v3148
    %3203 = vmatprep.subr.mxu0 0.0
    %3204 = vmatpush1.msra.mxu0 %v3149
    %3205 = vmatprep.subr.mxu0 0.0
    %3206 = vmatpush1.msra.mxu0 %v3150
    %3207 = vmatprep.subr.mxu0 0.0
    %3208 = vmatpush1.msra.mxu0 %v3151
    %3209 = vmatprep.subr.mxu0 0.0
    %3210 = vmatpush1.msra.mxu0 %v3152
    %3211 = vmatprep.subr.mxu0 0.0
    %3212 = vmatpush1.msra.mxu0 %v3153
    %3213 = vmatprep.subr.mxu0 0.0
    %3214 = vmatpush1.msra.mxu0 %v3154
    %3215 = vmatprep.subr.mxu0 0.0
    %3216 = vmatpush1.msra.mxu0 %v3155
    %3217 = vmatprep.subr.mxu0 0.0
    %3218 = vmatpush1.msra.mxu0 %v3156
    %3219 = vmatprep.subr.mxu0 0.0
    %3220 = vmatpush1.msra.mxu0 %v3157
    %3221 = vmatprep.subr.mxu0 0.0
    %3222 = vmatpush1.msra.mxu0 %v3158
    %3223 = vmatprep.subr.mxu0 0.0
    %3224 = vmatpush1.msra.mxu0 %v3159
    %3225 = vmatprep.subr.mxu0 0.0
    %3226 = vmatpush1.msra.mxu0 %v3160
    %3227 = vmatprep.subr.mxu0 0.0
    %3228 = vmatpush1.msra.mxu0 %v3161
    %3229 = vmatprep.subr.mxu0 0.0
    %3230 = vmatpush1.msra.mxu0 %v3162
    %3231 = vmatprep.subr.mxu0 0.0
    %3232 = vmatpush1.msra.mxu0 %v3163
    %3233 = vmatprep.subr.mxu0 0.0
    %3234 = vmatpush1.msra.mxu0 %v3164
    %3235 = vmatprep.subr.mxu0 0.0
    %3236 = vmatpush1.msra.mxu0 %v3165
    %3237 = vmatprep.subr.mxu0 0.0
    %3238 = vmatpush1.msra.mxu0 %v3166
    %3239 = vmatprep.subr.mxu0 0.0
    %3240 = vmatpush1.msra.mxu0 %v3167
    %3241 = vmatprep.subr.mxu0 0.0
    %3242 = vmatpush1.msra.mxu0 %v3168
    %3243 = vmatprep.subr.mxu0 0.0
    %3244 = vmatpush1.msra.mxu0 %v3169
    %3245 = vmatprep.subr.mxu0 0.0
    %3246 = vmatpush1.msra.mxu0 %v3170
    %3247 = vmatprep.subr.mxu0 0.0
    %3248 = vmatpush1.msra.mxu0 %v3171
    %3249 = vmatprep.subr.mxu0 0.0
    %3250 = vmatpush1.msra.mxu0 %v3172
    %3251 = vmatprep.subr.mxu0 0.0
    %3252 = vmatpush1.msra.mxu0 %v3173
    %3253 = vmatprep.subr.mxu0 0.0
    %3254 = vmatpush1.msra.mxu0 %v3174
    %3255 = vmatprep.subr.mxu0 0.0
    %3256 = vmatpush1.msra.mxu0 %v3175
    %3257 = vmatprep.subr.mxu0 0.0
    %3258 = vmatpush1.msra.mxu0 %v3176
    %3259 = vmatprep.subr.mxu0 0.0
    %3260 = vmatpush1.msra.mxu0 %v3177
    %3261 = vmatprep.subr.mxu0 0.0
    %3262 = vmatpush1.msra.mxu0 %v3178
    %3263 = vmatprep.subr.mxu0 0.0
    %3264 = vmatpush1.msra.mxu0 %v3179
    %3265 = vmatprep.mubr.f32.mxu0 %v3144
    %3266 = vmatmul.mubr.f32.gmra.mrb[0].mxu0 %v2153
    %v3267 = vpop.f32.mrb[0].mxu0
    %v3268 = vadd.f32 %v3200, %v3267
    %v3269 = vpop.f32.mrb[0].mxu0
    %3270 = vdwg.mxu0
    %3271 = vmatprep.subr.mxu0 0.0
    %3272 = vmatpush1.msra.mxu0 %v3180
    %3273 = vmatprep.subr.mxu0 0.0
    %3274 = vmatpush1.msra.mxu0 %v3181
    %3275 = vmatprep.subr.mxu0 0.0
    %3276 = vmatpush1.msra.mxu0 %v3182
    %3277 = vmatprep.subr.mxu0 0.0
    %3278 = vmatpush1.msra.mxu0 %v3183
    %3279 = vmatprep.subr.mxu0 0.0
    %3280 = vmatpush1.msra.mxu0 %v3184
    %3281 = vmatprep.subr.mxu0 0.0
    %3282 = vmatpush1.msra.mxu0 %v3185
    %3283 = vmatprep.subr.mxu0 0.0
    %3284 = vmatpush1.msra.mxu0 %v3186
    %3285 = vmatprep.subr.mxu0 0.0
    %3286 = vmatpush1.msra.mxu0 %v3187
    %3287 = vmatprep.subr.mxu0 0.0
    %3288 = vmatpush1.msra.mxu0 %v3188
    %3289 = vmatprep.subr.mxu0 0.0
    %3290 = vmatpush1.msra.mxu0 %v3189
    %3291 = vmatprep.subr.mxu0 0.0
    %3292 = vmatpush1.msra.mxu0 %v3190
    %3293 = vmatprep.subr.mxu0 0.0
    %3294 = vmatpush1.msra.mxu0 %v3191
    %3295 = vmatprep.subr.mxu0 0.0
    %3296 = vmatpush1.msra.mxu0 %v3192
    %3297 = vmatprep.subr.mxu0 0.0
    %3298 = vmatpush1.msra.mxu0 %v3193
    %3299 = vmatprep.subr.mxu0 0.0
    %3300 = vmatpush1.msra.mxu0 %v3194
    %3301 = vmatprep.subr.mxu0 0.0
    %3302 = vmatpush1.msra.mxu0 %v3195
    %3303 = vmatprep.subr.mxu0 0.0
    %3304 = vmatpush1.msra.mxu0 0.0
    %3305 = vmatprep.subr.mxu0 0.0
    %3306 = vmatpush1.msra.mxu0 0.0
    %3307 = vmatprep.subr.mxu0 0.0
    %3308 = vmatpush1.msra.mxu0 0.0
    %3309 = vmatprep.subr.mxu0 0.0
    %3310 = vmatpush1.msra.mxu0 0.0
    %3311 = vmatprep.subr.mxu0 0.0
    %3312 = vmatpush1.msra.mxu0 0.0
    %3313 = vmatprep.subr.mxu0 0.0
    %3314 = vmatpush1.msra.mxu0 0.0
    %3315 = vmatprep.subr.mxu0 0.0
    %3316 = vmatpush1.msra.mxu0 0.0
    %3317 = vmatprep.subr.mxu0 0.0
    %3318 = vmatpush1.msra.mxu0 0.0
    %3319 = vmatprep.subr.mxu0 0.0
    %3320 = vmatpush1.msra.mxu0 0.0
    %3321 = vmatprep.subr.mxu0 0.0
    %3322 = vmatpush1.msra.mxu0 0.0
    %3323 = vmatprep.subr.mxu0 0.0
    %3324 = vmatpush1.msra.mxu0 0.0
    %3325 = vmatprep.subr.mxu0 0.0
    %3326 = vmatpush1.msra.mxu0 0.0
    %3327 = vmatprep.subr.mxu0 0.0
    %3328 = vmatpush1.msra.mxu0 0.0
    %3329 = vmatprep.subr.mxu0 0.0
    %3330 = vmatpush1.msra.mxu0 0.0
    %3331 = vmatprep.subr.mxu0 0.0
    %3332 = vmatpush1.msra.mxu0 0.0
    %3333 = vmatprep.subr.mxu0 0.0
    %3334 = vmatpush1.msra.mxu0 0.0
    %3335 = vmatprep.mubr.f32.mxu0 0.0
    %3336 = vmatmul.mubr.f32.gmra.mrb[0].mxu0 %v3147
    %v3337 = vpop.f32.mrb[0].mxu0
    %v3338 = vadd.f32 %v3268, %v3337
    %v3339 = vpop.f32.mrb[0].mxu0
    %3340 = vdwg.mxu0
    %v3341 = vmax.f32 %v3338, 0.0
    %v3342 = vld [vmem:[#allocation2 + $0xe18] sm:$0xff]
    %v3343 = vld [vmem:[#allocation2 + $0xe20] sm:$0xff]
    %v3344 = vld [vmem:[#allocation2 + $0xe28] sm:$0xff]
    %v3345 = vld [vmem:[#allocation2 + $0xe30] sm:$0xff]
    %v3346 = vld [vmem:[#allocation2 + $0x11f8] sm:$0x1]
    %v3347 = vlaneseq
    %v3348 = vshrl.u32 %v3347, 7
    %v3349 = vsub.s32 0, %v3348
    %v3350 = vrot.slane %v3346, %v3349
    %v3352 = vsel %vm37, %v3341, 0
    %3354 = vmatprep.subr.mxu0 0.0
    %3355 = vmatpush1.msra.mxu0 %v3342
    %3356 = vmatprep.subr.mxu0 0.0
    %3357 = vmatpush1.msra.mxu0 %v3343
    %3358 = vmatprep.subr.mxu0 0.0
    %3359 = vmatpush1.msra.mxu0 %v3344
    %3360 = vmatprep.subr.mxu0 0.0
    %3361 = vmatpush1.msra.mxu0 %v3345
    %3362 = vmatprep.subr.mxu0 0.0
    %3363 = vmatpush1.msra.mxu0 0.0
    %3364 = vmatprep.subr.mxu0 0.0
    %3365 = vmatpush1.msra.mxu0 0.0
    %3366 = vmatprep.subr.mxu0 0.0
    %3367 = vmatpush1.msra.mxu0 0.0
    %3368 = vmatprep.subr.mxu0 0.0
    %3369 = vmatpush1.msra.mxu0 0.0
    %3370 = vmatprep.subr.mxu0 0.0
    %3371 = vmatpush1.msra.mxu0 0.0
    %3372 = vmatprep.subr.mxu0 0.0
    %3373 = vmatpush1.msra.mxu0 0.0
    %3374 = vmatprep.subr.mxu0 0.0
    %3375 = vmatpush1.msra.mxu0 0.0
    %3376 = vmatprep.subr.mxu0 0.0
    %3377 = vmatpush1.msra.mxu0 0.0
    %3378 = vmatprep.subr.mxu0 0.0
    %3379 = vmatpush1.msra.mxu0 0.0
    %3380 = vmatprep.subr.mxu0 0.0
    %3381 = vmatpush1.msra.mxu0 0.0
    %3382 = vmatprep.subr.mxu0 0.0
    %3383 = vmatpush1.msra.mxu0 0.0
    %3384 = vmatprep.subr.mxu0 0.0
    %3385 = vmatpush1.msra.mxu0 0.0
    %3386 = vmatprep.subr.mxu0 0.0
    %3387 = vmatpush1.msra.mxu0 0.0
    %3388 = vmatprep.subr.mxu0 0.0
    %3389 = vmatpush1.msra.mxu0 0.0
    %3390 = vmatprep.subr.mxu0 0.0
    %3391 = vmatpush1.msra.mxu0 0.0
    %3392 = vmatprep.subr.mxu0 0.0
    %3393 = vmatpush1.msra.mxu0 0.0
    %3394 = vmatprep.subr.mxu0 0.0
    %3395 = vmatpush1.msra.mxu0 0.0
    %3396 = vmatprep.subr.mxu0 0.0
    %3397 = vmatpush1.msra.mxu0 0.0
    %3398 = vmatprep.subr.mxu0 0.0
    %3399 = vmatpush1.msra.mxu0 0.0
    %3400 = vmatprep.subr.mxu0 0.0
    %3401 = vmatpush1.msra.mxu0 0.0
    %3402 = vmatprep.subr.mxu0 0.0
    %3403 = vmatpush1.msra.mxu0 0.0
    %3404 = vmatprep.subr.mxu0 0.0
    %3405 = vmatpush1.msra.mxu0 0.0
    %3406 = vmatprep.subr.mxu0 0.0
    %3407 = vmatpush1.msra.mxu0 0.0
    %3408 = vmatprep.subr.mxu0 0.0
    %3409 = vmatpush1.msra.mxu0 0.0
    %3410 = vmatprep.subr.mxu0 0.0
    %3411 = vmatpush1.msra.mxu0 0.0
    %3412 = vmatprep.subr.mxu0 0.0
    %3413 = vmatpush1.msra.mxu0 0.0
    %3414 = vmatprep.subr.mxu0 0.0
    %3415 = vmatpush1.msra.mxu0 0.0
    %3416 = vmatprep.subr.mxu0 0.0
    %3417 = vmatpush1.msra.mxu0 0.0
    %3418 = vmatprep.mubr.f32.mxu0 0.0
    %3419 = vmatmul.mubr.f32.gmra.mrb[0].mxu0 %v3352
    %v3420 = vpop.f32.mrb[0].mxu0
    %v3421 = vadd.f32 %v3350, %v3420
    %v3422 = vpop.f32.mrb[0].mxu0
    %3423 = vdwg.mxu0
    %v3424 = vmax.f32 %v3421, 0.0
    %v3425 = vld [vmem:[#allocation2 + $0xe38] sm:$0xff]
    %v3426 = vld [vmem:[#allocation2 + $0xe40] sm:$0xff]
    %v3427 = vld [vmem:[#allocation2 + $0xe48] sm:$0xff]
    %v3428 = vld [vmem:[#allocation2 + $0xe50] sm:$0xff]
    %v3429 = vld [vmem:[#allocation2 + $0x1200] sm:$0x1]
    %v3430 = vlaneseq
    %v3431 = vshrl.u32 %v3430, 7
    %v3432 = vsub.s32 0, %v3431
    %v3433 = vrot.slane %v3429, %v3432
    %v3435 = vsel %vm37, %v3424, 0
    %3437 = vmatprep.subr.mxu0 0.0
    %3438 = vmatpush1.msra.mxu0 %v3425
    %3439 = vmatprep.subr.mxu0 0.0
    %3440 = vmatpush1.msra.mxu0 %v3426
    %3441 = vmatprep.subr.mxu0 0.0
    %3442 = vmatpush1.msra.mxu0 %v3427
    %3443 = vmatprep.subr.mxu0 0.0
    %3444 = vmatpush1.msra.mxu0 %v3428
    %3445 = vmatprep.subr.mxu0 0.0
    %3446 = vmatpush1.msra.mxu0 0.0
    %3447 = vmatprep.subr.mxu0 0.0
    %3448 = vmatpush1.msra.mxu0 0.0
    %3449 = vmatprep.subr.mxu0 0.0
    %3450 = vmatpush1.msra.mxu0 0.0
    %3451 = vmatprep.subr.mxu0 0.0
    %3452 = vmatpush1.msra.mxu0 0.0
    %3453 = vmatprep.subr.mxu0 0.0
    %3454 = vmatpush1.msra.mxu0 0.0
    %3455 = vmatprep.subr.mxu0 0.0
    %3456 = vmatpush1.msra.mxu0 0.0
    %3457 = vmatprep.subr.mxu0 0.0
    %3458 = vmatpush1.msra.mxu0 0.0
    %3459 = vmatprep.subr.mxu0 0.0
    %3460 = vmatpush1.msra.mxu0 0.0
    %3461 = vmatprep.subr.mxu0 0.0
    %3462 = vmatpush1.msra.mxu0 0.0
    %3463 = vmatprep.subr.mxu0 0.0
    %3464 = vmatpush1.msra.mxu0 0.0
    %3465 = vmatprep.subr.mxu0 0.0
    %3466 = vmatpush1.msra.mxu0 0.0
    %3467 = vmatprep.subr.mxu0 0.0
    %3468 = vmatpush1.msra.mxu0 0.0
    %3469 = vmatprep.subr.mxu0 0.0
    %3470 = vmatpush1.msra.mxu0 0.0
    %3471 = vmatprep.subr.mxu0 0.0
    %3472 = vmatpush1.msra.mxu0 0.0
    %3473 = vmatprep.subr.mxu0 0.0
    %3474 = vmatpush1.msra.mxu0 0.0
    %3475 = vmatprep.subr.mxu0 0.0
    %3476 = vmatpush1.msra.mxu0 0.0
    %3477 = vmatprep.subr.mxu0 0.0
    %3478 = vmatpush1.msra.mxu0 0.0
    %3479 = vmatprep.subr.mxu0 0.0
    %3480 = vmatpush1.msra.mxu0 0.0
    %3481 = vmatprep.subr.mxu0 0.0
    %3482 = vmatpush1.msra.mxu0 0.0
    %3483 = vmatprep.subr.mxu0 0.0
    %3484 = vmatpush1.msra.mxu0 0.0
    %3485 = vmatprep.subr.mxu0 0.0
    %3486 = vmatpush1.msra.mxu0 0.0
    %3487 = vmatprep.subr.mxu0 0.0
    %3488 = vmatpush1.msra.mxu0 0.0
    %3489 = vmatprep.subr.mxu0 0.0
    %3490 = vmatpush1.msra.mxu0 0.0
    %3491 = vmatprep.subr.mxu0 0.0
    %3492 = vmatpush1.msra.mxu0 0.0
    %3493 = vmatprep.subr.mxu0 0.0
    %3494 = vmatpush1.msra.mxu0 0.0
    %3495 = vmatprep.subr.mxu0 0.0
    %3496 = vmatpush1.msra.mxu0 0.0
    %3497 = vmatprep.subr.mxu0 0.0
    %3498 = vmatpush1.msra.mxu0 0.0
    %3499 = vmatprep.subr.mxu0 0.0
    %3500 = vmatpush1.msra.mxu0 0.0
    %3501 = vmatprep.mubr.f32.mxu0 0.0
    %3502 = vmatmul.mubr.f32.gmra.mrb[0].mxu0 %v3435
    %v3503 = vpop.f32.mrb[0].mxu0
    %v3504 = vadd.f32 %v3433, %v3503
    %v3505 = vpop.f32.mrb[0].mxu0
    %3506 = vdwg.mxu0
    %v3507 = vld [vmem:[#allocation2 + $0xe58] sm:$0xff]
    %v3508 = vld [vmem:[#allocation2 + $0xe60] sm:$0xff]
    %v3509 = vld [vmem:[#allocation2 + $0xe68] sm:$0xff]
    %v3510 = vld [vmem:[#allocation2 + $0xe70] sm:$0xff]
    %v3511 = vld [vmem:[#allocation2 + $0xe78] sm:$0xff]
    %v3512 = vld [vmem:[#allocation2 + $0xe80] sm:$0xff]
    %v3513 = vld [vmem:[#allocation2 + $0xe88] sm:$0xff]
    %v3514 = vld [vmem:[#allocation2 + $0xe90] sm:$0xff]
    %v3515 = vld [vmem:[#allocation2 + $0xe98] sm:$0xff]
    %v3516 = vld [vmem:[#allocation2 + $0xea0] sm:$0xff]
    %v3517 = vld [vmem:[#allocation2 + $0xea8] sm:$0xff]
    %v3518 = vld [vmem:[#allocation2 + $0xeb0] sm:$0xff]
    %v3519 = vld [vmem:[#allocation2 + $0xeb8] sm:$0xff]
    %v3520 = vld [vmem:[#allocation2 + $0xec0] sm:$0xff]
    %v3521 = vld [vmem:[#allocation2 + $0xec8] sm:$0xff]
    %v3522 = vld [vmem:[#allocation2 + $0xed0] sm:$0xff]
    %v3523 = vld [vmem:[#allocation2 + $0x1208] sm:$0x1]
    %v3524 = vlaneseq
    %v3525 = vshrl.u32 %v3524, 7
    %v3526 = vsub.s32 0, %v3525
    %v3527 = vrot.slane %v3523, %v3526
    %3528 = vmatprep.subr.mxu0 0.0
    %3529 = vmatpush1.msra.mxu0 %v3507
    %3530 = vmatprep.subr.mxu0 0.0
    %3531 = vmatpush1.msra.mxu0 %v3508
    %3532 = vmatprep.subr.mxu0 0.0
    %3533 = vmatpush1.msra.mxu0 %v3509
    %3534 = vmatprep.subr.mxu0 0.0
    %3535 = vmatpush1.msra.mxu0 %v3510
    %3536 = vmatprep.subr.mxu0 0.0
    %3537 = vmatpush1.msra.mxu0 %v3511
    %3538 = vmatprep.subr.mxu0 0.0
    %3539 = vmatpush1.msra.mxu0 %v3512
    %3540 = vmatprep.subr.mxu0 0.0
    %3541 = vmatpush1.msra.mxu0 %v3513
    %3542 = vmatprep.subr.mxu0 0.0
    %3543 = vmatpush1.msra.mxu0 %v3514
    %3544 = vmatprep.subr.mxu0 0.0
    %3545 = vmatpush1.msra.mxu0 %v3515
    %3546 = vmatprep.subr.mxu0 0.0
    %3547 = vmatpush1.msra.mxu0 %v3516
    %3548 = vmatprep.subr.mxu0 0.0
    %3549 = vmatpush1.msra.mxu0 %v3517
    %3550 = vmatprep.subr.mxu0 0.0
    %3551 = vmatpush1.msra.mxu0 %v3518
    %3552 = vmatprep.subr.mxu0 0.0
    %3553 = vmatpush1.msra.mxu0 %v3519
    %3554 = vmatprep.subr.mxu0 0.0
    %3555 = vmatpush1.msra.mxu0 %v3520
    %3556 = vmatprep.subr.mxu0 0.0
    %3557 = vmatpush1.msra.mxu0 %v3521
    %3558 = vmatprep.subr.mxu0 0.0
    %3559 = vmatpush1.msra.mxu0 %v3522
    %3560 = vmatprep.subr.mxu0 0.0
    %3561 = vmatpush1.msra.mxu0 0.0
    %3562 = vmatprep.subr.mxu0 0.0
    %3563 = vmatpush1.msra.mxu0 0.0
    %3564 = vmatprep.subr.mxu0 0.0
    %3565 = vmatpush1.msra.mxu0 0.0
    %3566 = vmatprep.subr.mxu0 0.0
    %3567 = vmatpush1.msra.mxu0 0.0
    %3568 = vmatprep.subr.mxu0 0.0
    %3569 = vmatpush1.msra.mxu0 0.0
    %3570 = vmatprep.subr.mxu0 0.0
    %3571 = vmatpush1.msra.mxu0 0.0
    %3572 = vmatprep.subr.mxu0 0.0
    %3573 = vmatpush1.msra.mxu0 0.0
    %3574 = vmatprep.subr.mxu0 0.0
    %3575 = vmatpush1.msra.mxu0 0.0
    %3576 = vmatprep.subr.mxu0 0.0
    %3577 = vmatpush1.msra.mxu0 0.0
    %3578 = vmatprep.subr.mxu0 0.0
    %3579 = vmatpush1.msra.mxu0 0.0
    %3580 = vmatprep.subr.mxu0 0.0
    %3581 = vmatpush1.msra.mxu0 0.0
    %3582 = vmatprep.subr.mxu0 0.0
    %3583 = vmatpush1.msra.mxu0 0.0
    %3584 = vmatprep.subr.mxu0 0.0
    %3585 = vmatpush1.msra.mxu0 0.0
    %3586 = vmatprep.subr.mxu0 0.0
    %3587 = vmatpush1.msra.mxu0 0.0
    %3588 = vmatprep.subr.mxu0 0.0
    %3589 = vmatpush1.msra.mxu0 0.0
    %3590 = vmatprep.subr.mxu0 0.0
    %3591 = vmatpush1.msra.mxu0 0.0
    %3592 = vmatprep.mubr.f32.mxu0 0.0
    %3593 = vmatmul.mubr.f32.gmra.mrb[0].mxu0 %v3144
    %v3594 = vpop.f32.mrb[0].mxu0
    %v3595 = vadd.f32 %v3527, %v3594
    %v3596 = vpop.f32.mrb[0].mxu0
    %3597 = vdwg.mxu0
    %v3598 = vld [vmem:[#allocation2 + $0xed8] sm:$0xff]
    %v3599 = vld [vmem:[#allocation2 + $0xee0] sm:$0xff]
    %v3600 = vld [vmem:[#allocation2 + $0xee8] sm:$0xff]
    %v3601 = vld [vmem:[#allocation2 + $0xef0] sm:$0xff]
    %v3602 = vld [vmem:[#allocation2 + $0x1210] sm:$0x1]
    %v3603 = vlaneseq
    %v3604 = vshrl.u32 %v3603, 7
    %v3605 = vsub.s32 0, %v3604
    %v3606 = vrot.slane %v3602, %v3605
    %v3608 = vsel %vm37, %v3595, 0
    %3610 = vmatprep.subr.mxu0 0.0
    %3611 = vmatpush1.msra.mxu0 %v3598
    %3612 = vmatprep.subr.mxu0 0.0
    %3613 = vmatpush1.msra.mxu0 %v3599
    %3614 = vmatprep.subr.mxu0 0.0
    %3615 = vmatpush1.msra.mxu0 %v3600
    %3616 = vmatprep.subr.mxu0 0.0
    %3617 = vmatpush1.msra.mxu0 %v3601
    %3618 = vmatprep.subr.mxu0 0.0
    %3619 = vmatpush1.msra.mxu0 0.0
    %3620 = vmatprep.subr.mxu0 0.0
    %3621 = vmatpush1.msra.mxu0 0.0
    %3622 = vmatprep.subr.mxu0 0.0
    %3623 = vmatpush1.msra.mxu0 0.0
    %3624 = vmatprep.subr.mxu0 0.0
    %3625 = vmatpush1.msra.mxu0 0.0
    %3626 = vmatprep.subr.mxu0 0.0
    %3627 = vmatpush1.msra.mxu0 0.0
    %3628 = vmatprep.subr.mxu0 0.0
    %3629 = vmatpush1.msra.mxu0 0.0
    %3630 = vmatprep.subr.mxu0 0.0
    %3631 = vmatpush1.msra.mxu0 0.0
    %3632 = vmatprep.subr.mxu0 0.0
    %3633 = vmatpush1.msra.mxu0 0.0
    %3634 = vmatprep.subr.mxu0 0.0
    %3635 = vmatpush1.msra.mxu0 0.0
    %3636 = vmatprep.subr.mxu0 0.0
    %3637 = vmatpush1.msra.mxu0 0.0
    %3638 = vmatprep.subr.mxu0 0.0
    %3639 = vmatpush1.msra.mxu0 0.0
    %3640 = vmatprep.subr.mxu0 0.0
    %3641 = vmatpush1.msra.mxu0 0.0
    %3642 = vmatprep.subr.mxu0 0.0
    %3643 = vmatpush1.msra.mxu0 0.0
    %3644 = vmatprep.subr.mxu0 0.0
    %3645 = vmatpush1.msra.mxu0 0.0
    %3646 = vmatprep.subr.mxu0 0.0
    %3647 = vmatpush1.msra.mxu0 0.0
    %3648 = vmatprep.subr.mxu0 0.0
    %3649 = vmatpush1.msra.mxu0 0.0
    %3650 = vmatprep.subr.mxu0 0.0
    %3651 = vmatpush1.msra.mxu0 0.0
    %3652 = vmatprep.subr.mxu0 0.0
    %3653 = vmatpush1.msra.mxu0 0.0
    %3654 = vmatprep.subr.mxu0 0.0
    %3655 = vmatpush1.msra.mxu0 0.0
    %3656 = vmatprep.subr.mxu0 0.0
    %3657 = vmatpush1.msra.mxu0 0.0
    %3658 = vmatprep.subr.mxu0 0.0
    %3659 = vmatpush1.msra.mxu0 0.0
    %3660 = vmatprep.subr.mxu0 0.0
    %3661 = vmatpush1.msra.mxu0 0.0
    %3662 = vmatprep.subr.mxu0 0.0
    %3663 = vmatpush1.msra.mxu0 0.0
    %3664 = vmatprep.subr.mxu0 0.0
    %3665 = vmatpush1.msra.mxu0 0.0
    %3666 = vmatprep.subr.mxu0 0.0
    %3667 = vmatpush1.msra.mxu0 0.0
    %3668 = vmatprep.subr.mxu0 0.0
    %3669 = vmatpush1.msra.mxu0 0.0
    %3670 = vmatprep.subr.mxu0 0.0
    %3671 = vmatpush1.msra.mxu0 0.0
    %3672 = vmatprep.subr.mxu0 0.0
    %3673 = vmatpush1.msra.mxu0 0.0
    %3674 = vmatprep.mubr.f32.mxu0 0.0
    %3675 = vmatmul.mubr.f32.gmra.mrb[0].mxu0 %v3608
    %v3676 = vpop.f32.mrb[0].mxu0
    %v3677 = vadd.f32 %v3606, %v3676
    %v3678 = vpop.f32.mrb[0].mxu0
    %3679 = vdwg.mxu0
    %v3680 = vld [vmem:[#allocation2 + $0xef8] sm:$0xff]
    %v3681 = vld [vmem:[#allocation2 + $0xf00] sm:$0xff]
    %v3682 = vld [vmem:[#allocation2 + $0xf08] sm:$0xff]
    %v3683 = vld [vmem:[#allocation2 + $0xf10] sm:$0xff]
    %v3684 = vld [vmem:[#allocation2 + $0x1218] sm:$0x1]
    %v3685 = vlaneseq
    %v3686 = vshrl.u32 %v3685, 7
    %v3687 = vsub.s32 0, %v3686
    %v3688 = vrot.slane %v3684, %v3687
    %v3690 = vsel %vm37, %v3677, 0
    %3692 = vmatprep.subr.mxu0 0.0
    %3693 = vmatpush1.msra.mxu0 %v3680
    %3694 = vmatprep.subr.mxu0 0.0
    %3695 = vmatpush1.msra.mxu0 %v3681
    %3696 = vmatprep.subr.mxu0 0.0
    %3697 = vmatpush1.msra.mxu0 %v3682
    %3698 = vmatprep.subr.mxu0 0.0
    %3699 = vmatpush1.msra.mxu0 %v3683
    %3700 = vmatprep.subr.mxu0 0.0
    %3701 = vmatpush1.msra.mxu0 0.0
    %3702 = vmatprep.subr.mxu0 0.0
    %3703 = vmatpush1.msra.mxu0 0.0
    %3704 = vmatprep.subr.mxu0 0.0
    %3705 = vmatpush1.msra.mxu0 0.0
    %3706 = vmatprep.subr.mxu0 0.0
    %3707 = vmatpush1.msra.mxu0 0.0
    %3708 = vmatprep.subr.mxu0 0.0
    %3709 = vmatpush1.msra.mxu0 0.0
    %3710 = vmatprep.subr.mxu0 0.0
    %3711 = vmatpush1.msra.mxu0 0.0
    %3712 = vmatprep.subr.mxu0 0.0
    %3713 = vmatpush1.msra.mxu0 0.0
    %3714 = vmatprep.subr.mxu0 0.0
    %3715 = vmatpush1.msra.mxu0 0.0
    %3716 = vmatprep.subr.mxu0 0.0
    %3717 = vmatpush1.msra.mxu0 0.0
    %3718 = vmatprep.subr.mxu0 0.0
    %3719 = vmatpush1.msra.mxu0 0.0
    %3720 = vmatprep.subr.mxu0 0.0
    %3721 = vmatpush1.msra.mxu0 0.0
    %3722 = vmatprep.subr.mxu0 0.0
    %3723 = vmatpush1.msra.mxu0 0.0
    %3724 = vmatprep.subr.mxu0 0.0
    %3725 = vmatpush1.msra.mxu0 0.0
    %3726 = vmatprep.subr.mxu0 0.0
    %3727 = vmatpush1.msra.mxu0 0.0
    %3728 = vmatprep.subr.mxu0 0.0
    %3729 = vmatpush1.msra.mxu0 0.0
    %3730 = vmatprep.subr.mxu0 0.0
    %3731 = vmatpush1.msra.mxu0 0.0
    %3732 = vmatprep.subr.mxu0 0.0
    %3733 = vmatpush1.msra.mxu0 0.0
    %3734 = vmatprep.subr.mxu0 0.0
    %3735 = vmatpush1.msra.mxu0 0.0
    %3736 = vmatprep.subr.mxu0 0.0
    %3737 = vmatpush1.msra.mxu0 0.0
    %3738 = vmatprep.subr.mxu0 0.0
    %3739 = vmatpush1.msra.mxu0 0.0
    %3740 = vmatprep.subr.mxu0 0.0
    %3741 = vmatpush1.msra.mxu0 0.0
    %3742 = vmatprep.subr.mxu0 0.0
    %3743 = vmatpush1.msra.mxu0 0.0
    %3744 = vmatprep.subr.mxu0 0.0
    %3745 = vmatpush1.msra.mxu0 0.0
    %3746 = vmatprep.subr.mxu0 0.0
    %3747 = vmatpush1.msra.mxu0 0.0
    %3748 = vmatprep.subr.mxu0 0.0
    %3749 = vmatpush1.msra.mxu0 0.0
    %3750 = vmatprep.subr.mxu0 0.0
    %3751 = vmatpush1.msra.mxu0 0.0
    %3752 = vmatprep.subr.mxu0 0.0
    %3753 = vmatpush1.msra.mxu0 0.0
    %3754 = vmatprep.subr.mxu0 0.0
    %3755 = vmatpush1.msra.mxu0 0.0
    %3756 = vmatprep.mubr.f32.mxu0 0.0
    %3757 = vmatmul.mubr.f32.gmra.mrb[0].mxu0 %v3690
    %v3758 = vpop.f32.mrb[0].mxu0
    %v3759 = vadd.f32 %v3688, %v3758
    %v3760 = vpop.f32.mrb[0].mxu0
    %3761 = vdwg.mxu0
    %v3762 = vld [vmem:[#allocation2 + $0xf18] sm:$0xff]
    %v3763 = vld [vmem:[#allocation2 + $0xf20] sm:$0xff]
    %v3764 = vld [vmem:[#allocation2 + $0xf28] sm:$0xff]
    %v3765 = vld [vmem:[#allocation2 + $0xf30] sm:$0xff]
    %v3766 = vld [vmem:[#allocation2 + $0xf38] sm:$0xff]
    %v3767 = vld [vmem:[#allocation2 + $0xf40] sm:$0xff]
    %v3768 = vld [vmem:[#allocation2 + $0xf48] sm:$0xff]
    %v3769 = vld [vmem:[#allocation2 + $0xf50] sm:$0xff]
    %v3770 = vld [vmem:[#allocation2 + $0xf58] sm:$0xff]
    %v3771 = vld [vmem:[#allocation2 + $0xf60] sm:$0xff]
    %v3772 = vld [vmem:[#allocation2 + $0xf68] sm:$0xff]
    %v3773 = vld [vmem:[#allocation2 + $0xf70] sm:$0xff]
    %v3774 = vld [vmem:[#allocation2 + $0xf78] sm:$0xff]
    %v3775 = vld [vmem:[#allocation2 + $0xf80] sm:$0xff]
    %v3776 = vld [vmem:[#allocation2 + $0xf88] sm:$0xff]
    %v3777 = vld [vmem:[#allocation2 + $0xf90] sm:$0xff]
    %v3778 = vld [vmem:[#allocation2 + $0xf98] sm:$0xff]
    %v3779 = vld [vmem:[#allocation2 + $0xfa0] sm:$0xff]
    %v3780 = vld [vmem:[#allocation2 + $0xfa8] sm:$0xff]
    %v3781 = vld [vmem:[#allocation2 + $0xfb0] sm:$0xff]
    %v3782 = vld [vmem:[#allocation2 + $0xfb8] sm:$0xff]
    %v3783 = vld [vmem:[#allocation2 + $0xfc0] sm:$0xff]
    %v3784 = vld [vmem:[#allocation2 + $0xfc8] sm:$0xff]
    %v3785 = vld [vmem:[#allocation2 + $0xfd0] sm:$0xff]
    %v3786 = vld [vmem:[#allocation2 + $0xfd8] sm:$0xff]
    %v3787 = vld [vmem:[#allocation2 + $0xfe0] sm:$0xff]
    %v3788 = vld [vmem:[#allocation2 + $0xfe8] sm:$0xff]
    %v3789 = vld [vmem:[#allocation2 + $0xff0] sm:$0xff]
    %v3790 = vld [vmem:[#allocation2 + $0xff8] sm:$0xff]
    %v3791 = vld [vmem:[#allocation2 + $0x1000] sm:$0xff]
    %v3792 = vld [vmem:[#allocation2 + $0x1008] sm:$0xff]
    %v3793 = vld [vmem:[#allocation2 + $0x1010] sm:$0xff]
    %v3794 = vld [vmem:[#allocation2 + $0x1018] sm:$0xff]
    %v3795 = vld [vmem:[#allocation2 + $0x1020] sm:$0xff]
    %v3796 = vld [vmem:[#allocation2 + $0x1028] sm:$0xff]
    %v3797 = vld [vmem:[#allocation2 + $0x1030] sm:$0xff]
    %v3798 = vld [vmem:[#allocation2 + $0x1038] sm:$0xff]
    %v3799 = vld [vmem:[#allocation2 + $0x1040] sm:$0xff]
    %v3800 = vld [vmem:[#allocation2 + $0x1048] sm:$0xff]
    %v3801 = vld [vmem:[#allocation2 + $0x1050] sm:$0xff]
    %v3802 = vld [vmem:[#allocation2 + $0x1058] sm:$0xff]
    %v3803 = vld [vmem:[#allocation2 + $0x1060] sm:$0xff]
    %v3804 = vld [vmem:[#allocation2 + $0x1068] sm:$0xff]
    %v3805 = vld [vmem:[#allocation2 + $0x1070] sm:$0xff]
    %v3806 = vld [vmem:[#allocation2 + $0x1078] sm:$0xff]
    %v3807 = vld [vmem:[#allocation2 + $0x1080] sm:$0xff]
    %v3808 = vld [vmem:[#allocation2 + $0x1088] sm:$0xff]
    %v3809 = vld [vmem:[#allocation2 + $0x1090] sm:$0xff]
    %v3810 = vld [vmem:[#allocation2 + $0x1098] sm:$0xff]
    %v3811 = vld [vmem:[#allocation2 + $0x10a0] sm:$0xff]
    %v3812 = vld [vmem:[#allocation2 + $0x10a8] sm:$0xff]
    %v3813 = vld [vmem:[#allocation2 + $0x10b0] sm:$0xff]
    %v3814 = vld [vmem:[#allocation2 + $0x10b8] sm:$0xff]
    %v3815 = vld [vmem:[#allocation2 + $0x10c0] sm:$0xff]
    %v3816 = vld [vmem:[#allocation2 + $0x10c8] sm:$0xff]
    %v3817 = vld [vmem:[#allocation2 + $0x10d0] sm:$0xff]
    %v3818 = vld [vmem:[#allocation2 + $0x10d8] sm:$0xff]
    %v3819 = vld [vmem:[#allocation2 + $0x10e0] sm:$0xff]
    %v3820 = vld [vmem:[#allocation2 + $0x10e8] sm:$0xff]
    %v3821 = vld [vmem:[#allocation2 + $0x10f0] sm:$0xff]
    %v3822 = vld [vmem:[#allocation2 + $0x10f8] sm:$0xff]
    %v3823 = vld [vmem:[#allocation2 + $0x1100] sm:$0xff]
    %v3824 = vld [vmem:[#allocation2 + $0x1108] sm:$0xff]
    %v3825 = vld [vmem:[#allocation2 + $0x1110] sm:$0xff]
    %v3826 = vld [vmem:[#allocation2 + $0x1220] sm:$0x1]
    %v3827 = vlaneseq
    %v3828 = vshrl.u32 %v3827, 7
    %v3829 = vsub.s32 0, %v3828
    %v3830 = vrot.slane %v3826, %v3829
    %3831 = vmatprep.subr.mxu0 0.0
    %3832 = vmatpush1.msra.mxu0 %v3762
    %3833 = vmatprep.subr.mxu0 0.0
    %3834 = vmatpush1.msra.mxu0 %v3763
    %3835 = vmatprep.subr.mxu0 0.0
    %3836 = vmatpush1.msra.mxu0 %v3764
    %3837 = vmatprep.subr.mxu0 0.0
    %3838 = vmatpush1.msra.mxu0 %v3765
    %3839 = vmatprep.subr.mxu0 0.0
    %3840 = vmatpush1.msra.mxu0 %v3766
    %3841 = vmatprep.subr.mxu0 0.0
    %3842 = vmatpush1.msra.mxu0 %v3767
    %3843 = vmatprep.subr.mxu0 0.0
    %3844 = vmatpush1.msra.mxu0 %v3768
    %3845 = vmatprep.subr.mxu0 0.0
    %3846 = vmatpush1.msra.mxu0 %v3769
    %3847 = vmatprep.subr.mxu0 0.0
    %3848 = vmatpush1.msra.mxu0 %v3770
    %3849 = vmatprep.subr.mxu0 0.0
    %3850 = vmatpush1.msra.mxu0 %v3771
    %3851 = vmatprep.subr.mxu0 0.0
    %3852 = vmatpush1.msra.mxu0 %v3772
    %3853 = vmatprep.subr.mxu0 0.0
    %3854 = vmatpush1.msra.mxu0 %v3773
    %3855 = vmatprep.subr.mxu0 0.0
    %3856 = vmatpush1.msra.mxu0 %v3774
    %3857 = vmatprep.subr.mxu0 0.0
    %3858 = vmatpush1.msra.mxu0 %v3775
    %3859 = vmatprep.subr.mxu0 0.0
    %3860 = vmatpush1.msra.mxu0 %v3776
    %3861 = vmatprep.subr.mxu0 0.0
    %3862 = vmatpush1.msra.mxu0 %v3777
    %3863 = vmatprep.subr.mxu0 0.0
    %3864 = vmatpush1.msra.mxu0 %v3778
    %3865 = vmatprep.subr.mxu0 0.0
    %3866 = vmatpush1.msra.mxu0 %v3779
    %3867 = vmatprep.subr.mxu0 0.0
    %3868 = vmatpush1.msra.mxu0 %v3780
    %3869 = vmatprep.subr.mxu0 0.0
    %3870 = vmatpush1.msra.mxu0 %v3781
    %3871 = vmatprep.subr.mxu0 0.0
    %3872 = vmatpush1.msra.mxu0 %v3782
    %3873 = vmatprep.subr.mxu0 0.0
    %3874 = vmatpush1.msra.mxu0 %v3783
    %3875 = vmatprep.subr.mxu0 0.0
    %3876 = vmatpush1.msra.mxu0 %v3784
    %3877 = vmatprep.subr.mxu0 0.0
    %3878 = vmatpush1.msra.mxu0 %v3785
    %3879 = vmatprep.subr.mxu0 0.0
    %3880 = vmatpush1.msra.mxu0 %v3786
    %3881 = vmatprep.subr.mxu0 0.0
    %3882 = vmatpush1.msra.mxu0 %v3787
    %3883 = vmatprep.subr.mxu0 0.0
    %3884 = vmatpush1.msra.mxu0 %v3788
    %3885 = vmatprep.subr.mxu0 0.0
    %3886 = vmatpush1.msra.mxu0 %v3789
    %3887 = vmatprep.subr.mxu0 0.0
    %3888 = vmatpush1.msra.mxu0 %v3790
    %3889 = vmatprep.subr.mxu0 0.0
    %3890 = vmatpush1.msra.mxu0 %v3791
    %3891 = vmatprep.subr.mxu0 0.0
    %3892 = vmatpush1.msra.mxu0 %v3792
    %3893 = vmatprep.subr.mxu0 0.0
    %3894 = vmatpush1.msra.mxu0 %v3793
    %3895 = vmatprep.mubr.f32.mxu0 %v3144
    %3896 = vmatmul.mubr.f32.gmra.mrb[0].mxu0 %v2153
    %v3897 = vpop.f32.mrb[0].mxu0
    %v3898 = vadd.f32 %v3830, %v3897
    %v3899 = vpop.f32.mrb[0].mxu0
    %3900 = vdwg.mxu0
    %3901 = vmatprep.subr.mxu0 0.0
    %3902 = vmatpush1.msra.mxu0 %v3794
    %3903 = vmatprep.subr.mxu0 0.0
    %3904 = vmatpush1.msra.mxu0 %v3795
    %3905 = vmatprep.subr.mxu0 0.0
    %3906 = vmatpush1.msra.mxu0 %v3796
    %3907 = vmatprep.subr.mxu0 0.0
    %3908 = vmatpush1.msra.mxu0 %v3797
    %3909 = vmatprep.subr.mxu0 0.0
    %3910 = vmatpush1.msra.mxu0 %v3798
    %3911 = vmatprep.subr.mxu0 0.0
    %3912 = vmatpush1.msra.mxu0 %v3799
    %3913 = vmatprep.subr.mxu0 0.0
    %3914 = vmatpush1.msra.mxu0 %v3800
    %3915 = vmatprep.subr.mxu0 0.0
    %3916 = vmatpush1.msra.mxu0 %v3801
    %3917 = vmatprep.subr.mxu0 0.0
    %3918 = vmatpush1.msra.mxu0 %v3802
    %3919 = vmatprep.subr.mxu0 0.0
    %3920 = vmatpush1.msra.mxu0 %v3803
    %3921 = vmatprep.subr.mxu0 0.0
    %3922 = vmatpush1.msra.mxu0 %v3804
    %3923 = vmatprep.subr.mxu0 0.0
    %3924 = vmatpush1.msra.mxu0 %v3805
    %3925 = vmatprep.subr.mxu0 0.0
    %3926 = vmatpush1.msra.mxu0 %v3806
    %3927 = vmatprep.subr.mxu0 0.0
    %3928 = vmatpush1.msra.mxu0 %v3807
    %3929 = vmatprep.subr.mxu0 0.0
    %3930 = vmatpush1.msra.mxu0 %v3808
    %3931 = vmatprep.subr.mxu0 0.0
    %3932 = vmatpush1.msra.mxu0 %v3809
    %3933 = vmatprep.subr.mxu0 0.0
    %3934 = vmatpush1.msra.mxu0 %v3810
    %3935 = vmatprep.subr.mxu0 0.0
    %3936 = vmatpush1.msra.mxu0 %v3811
    %3937 = vmatprep.subr.mxu0 0.0
    %3938 = vmatpush1.msra.mxu0 %v3812
    %3939 = vmatprep.subr.mxu0 0.0
    %3940 = vmatpush1.msra.mxu0 %v3813
    %3941 = vmatprep.subr.mxu0 0.0
    %3942 = vmatpush1.msra.mxu0 %v3814
    %3943 = vmatprep.subr.mxu0 0.0
    %3944 = vmatpush1.msra.mxu0 %v3815
    %3945 = vmatprep.subr.mxu0 0.0
    %3946 = vmatpush1.msra.mxu0 %v3816
    %3947 = vmatprep.subr.mxu0 0.0
    %3948 = vmatpush1.msra.mxu0 %v3817
    %3949 = vmatprep.subr.mxu0 0.0
    %3950 = vmatpush1.msra.mxu0 %v3818
    %3951 = vmatprep.subr.mxu0 0.0
    %3952 = vmatpush1.msra.mxu0 %v3819
    %3953 = vmatprep.subr.mxu0 0.0
    %3954 = vmatpush1.msra.mxu0 %v3820
    %3955 = vmatprep.subr.mxu0 0.0
    %3956 = vmatpush1.msra.mxu0 %v3821
    %3957 = vmatprep.subr.mxu0 0.0
    %3958 = vmatpush1.msra.mxu0 %v3822
    %3959 = vmatprep.subr.mxu0 0.0
    %3960 = vmatpush1.msra.mxu0 %v3823
    %3961 = vmatprep.subr.mxu0 0.0
    %3962 = vmatpush1.msra.mxu0 %v3824
    %3963 = vmatprep.subr.mxu0 0.0
    %3964 = vmatpush1.msra.mxu0 %v3825
    %3965 = vmatprep.mubr.f32.mxu0 %v3759
    %3966 = vmatmul.mubr.f32.gmra.mrb[0].mxu0 %v3504
    %v3967 = vpop.f32.mrb[0].mxu0
    %v3968 = vadd.f32 %v3898, %v3967
    %v3969 = vpop.f32.mrb[0].mxu0
    %3970 = vdwg.mxu0
    %v3971 = vmax.f32 %v3968, 0.0
    %v3972 = vld [vmem:[#allocation2 + $0x1118] sm:$0xff]
    %v3973 = vld [vmem:[#allocation2 + $0x1120] sm:$0xff]
    %v3974 = vld [vmem:[#allocation2 + $0x1128] sm:$0xff]
    %v3975 = vld [vmem:[#allocation2 + $0x1130] sm:$0xff]
    %v3976 = vld [vmem:[#allocation2 + $0x1138] sm:$0xff]
    %v3977 = vld [vmem:[#allocation2 + $0x1140] sm:$0xff]
    %v3978 = vld [vmem:[#allocation2 + $0x1148] sm:$0xff]
    %v3979 = vld [vmem:[#allocation2 + $0x1150] sm:$0xff]
    %v3980 = vld [vmem:[#allocation2 + $0x1158] sm:$0xff]
    %v3981 = vld [vmem:[#allocation2 + $0x1160] sm:$0xff]
    %v3982 = vld [vmem:[#allocation2 + $0x1168] sm:$0xff]
    %v3983 = vld [vmem:[#allocation2 + $0x1170] sm:$0xff]
    %v3984 = vld [vmem:[#allocation2 + $0x1228] sm:$0x1]
    %v3985 = vlaneseq
    %v3986 = vshrl.u32 %v3985, 7
    %v3987 = vsub.s32 0, %v3986
    %v3988 = vrot.slane %v3984, %v3987
    %vm3989 = vcmask 785408
    %v3991 = vsel %vm3989, %v3971, 0
    %3993 = vmatprep.subr.mxu0 0.0
    %3994 = vmatpush1.msra.mxu0 %v3972
    %3995 = vmatprep.subr.mxu0 0.0
    %3996 = vmatpush1.msra.mxu0 %v3973
    %3997 = vmatprep.subr.mxu0 0.0
    %3998 = vmatpush1.msra.mxu0 %v3974
    %3999 = vmatprep.subr.mxu0 0.0
    %4000 = vmatpush1.msra.mxu0 %v3975
    %4001 = vmatprep.subr.mxu0 0.0
    %4002 = vmatpush1.msra.mxu0 %v3976
    %4003 = vmatprep.subr.mxu0 0.0
    %4004 = vmatpush1.msra.mxu0 %v3977
    %4005 = vmatprep.subr.mxu0 0.0
    %4006 = vmatpush1.msra.mxu0 %v3978
    %4007 = vmatprep.subr.mxu0 0.0
    %4008 = vmatpush1.msra.mxu0 %v3979
    %4009 = vmatprep.subr.mxu0 0.0
    %4010 = vmatpush1.msra.mxu0 %v3980
    %4011 = vmatprep.subr.mxu0 0.0
    %4012 = vmatpush1.msra.mxu0 %v3981
    %4013 = vmatprep.subr.mxu0 0.0
    %4014 = vmatpush1.msra.mxu0 %v3982
    %4015 = vmatprep.subr.mxu0 0.0
    %4016 = vmatpush1.msra.mxu0 %v3983
    %4017 = vmatprep.subr.mxu0 0.0
    %4018 = vmatpush1.msra.mxu0 0.0
    %4019 = vmatprep.subr.mxu0 0.0
    %4020 = vmatpush1.msra.mxu0 0.0
    %4021 = vmatprep.subr.mxu0 0.0
    %4022 = vmatpush1.msra.mxu0 0.0
    %4023 = vmatprep.subr.mxu0 0.0
    %4024 = vmatpush1.msra.mxu0 0.0
    %4025 = vmatprep.subr.mxu0 0.0
    %4026 = vmatpush1.msra.mxu0 0.0
    %4027 = vmatprep.subr.mxu0 0.0
    %4028 = vmatpush1.msra.mxu0 0.0
    %4029 = vmatprep.subr.mxu0 0.0
    %4030 = vmatpush1.msra.mxu0 0.0
    %4031 = vmatprep.subr.mxu0 0.0
    %4032 = vmatpush1.msra.mxu0 0.0
    %4033 = vmatprep.subr.mxu0 0.0
    %4034 = vmatpush1.msra.mxu0 0.0
    %4035 = vmatprep.subr.mxu0 0.0
    %4036 = vmatpush1.msra.mxu0 0.0
    %4037 = vmatprep.subr.mxu0 0.0
    %4038 = vmatpush1.msra.mxu0 0.0
    %4039 = vmatprep.subr.mxu0 0.0
    %4040 = vmatpush1.msra.mxu0 0.0
    %4041 = vmatprep.subr.mxu0 0.0
    %4042 = vmatpush1.msra.mxu0 0.0
    %4043 = vmatprep.subr.mxu0 0.0
    %4044 = vmatpush1.msra.mxu0 0.0
    %4045 = vmatprep.subr.mxu0 0.0
    %4046 = vmatpush1.msra.mxu0 0.0
    %4047 = vmatprep.subr.mxu0 0.0
    %4048 = vmatpush1.msra.mxu0 0.0
    %4049 = vmatprep.subr.mxu0 0.0
    %4050 = vmatpush1.msra.mxu0 0.0
    %4051 = vmatprep.subr.mxu0 0.0
    %4052 = vmatpush1.msra.mxu0 0.0
    %4053 = vmatprep.subr.mxu0 0.0
    %4054 = vmatpush1.msra.mxu0 0.0
    %4055 = vmatprep.subr.mxu0 0.0
    %4056 = vmatpush1.msra.mxu0 0.0
    %4057 = vmatprep.mubr.f32.mxu0 0.0
    %4058 = vmatmul.mubr.f32.gmra.mrb[0].mxu0 %v3991
    %v4059 = vpop.f32.mrb[0].mxu0
    %v4060 = vadd.f32 %v3988, %v4059
    %v4061 = vpop.f32.mrb[0].mxu0
    %4062 = vdwg.mxu0
    %v4063 = vmax.f32 %v4060, 0.0
    %v4064 = vld [vmem:[#allocation2 + $0x1178] sm:$0xff]
    %v4065 = vld [vmem:[#allocation2 + $0x1180] sm:$0xff]
    %v4066 = vld [vmem:[#allocation2 + $0x1188] sm:$0xff]
    %v4067 = vld [vmem:[#allocation2 + $0x1190] sm:$0xff]
    %v4068 = vld [vmem:[#allocation2 + $0x1198] sm:$0xff]
    %v4069 = vld [vmem:[#allocation2 + $0x11a0] sm:$0xff]
    %v4070 = vld [vmem:[#allocation2 + $0x1230] sm:$0x1]
    %v4071 = vlaneseq
    %v4072 = vshrl.u32 %v4071, 7
    %v4073 = vsub.s32 0, %v4072
    %v4074 = vrot.slane %v4070, %v4073
    %vm4075 = vcmask 392192
    %v4077 = vsel %vm4075, %v4063, 0
    %4079 = vmatprep.subr.mxu0 0.0
    %4080 = vmatpush1.msra.mxu0 %v4064
    %4081 = vmatprep.subr.mxu0 0.0
    %4082 = vmatpush1.msra.mxu0 %v4065
    %4083 = vmatprep.subr.mxu0 0.0
    %4084 = vmatpush1.msra.mxu0 %v4066
    %4085 = vmatprep.subr.mxu0 0.0
    %4086 = vmatpush1.msra.mxu0 %v4067
    %4087 = vmatprep.subr.mxu0 0.0
    %4088 = vmatpush1.msra.mxu0 %v4068
    %4089 = vmatprep.subr.mxu0 0.0
    %4090 = vmatpush1.msra.mxu0 %v4069
    %4091 = vmatprep.subr.mxu0 0.0
    %4092 = vmatpush1.msra.mxu0 0.0
    %4093 = vmatprep.subr.mxu0 0.0
    %4094 = vmatpush1.msra.mxu0 0.0
    %4095 = vmatprep.subr.mxu0 0.0
    %4096 = vmatpush1.msra.mxu0 0.0
    %4097 = vmatprep.subr.mxu0 0.0
    %4098 = vmatpush1.msra.mxu0 0.0
    %4099 = vmatprep.subr.mxu0 0.0
    %4100 = vmatpush1.msra.mxu0 0.0
    %4101 = vmatprep.subr.mxu0 0.0
    %4102 = vmatpush1.msra.mxu0 0.0
    %4103 = vmatprep.subr.mxu0 0.0
    %4104 = vmatpush1.msra.mxu0 0.0
    %4105 = vmatprep.subr.mxu0 0.0
    %4106 = vmatpush1.msra.mxu0 0.0
    %4107 = vmatprep.subr.mxu0 0.0
    %4108 = vmatpush1.msra.mxu0 0.0
    %4109 = vmatprep.subr.mxu0 0.0
    %4110 = vmatpush1.msra.mxu0 0.0
    %4111 = vmatprep.subr.mxu0 0.0
    %4112 = vmatpush1.msra.mxu0 0.0
    %4113 = vmatprep.subr.mxu0 0.0
    %4114 = vmatpush1.msra.mxu0 0.0
    %4115 = vmatprep.subr.mxu0 0.0
    %4116 = vmatpush1.msra.mxu0 0.0
    %4117 = vmatprep.subr.mxu0 0.0
    %4118 = vmatpush1.msra.mxu0 0.0
    %4119 = vmatprep.subr.mxu0 0.0
    %4120 = vmatpush1.msra.mxu0 0.0
    %4121 = vmatprep.subr.mxu0 0.0
    %4122 = vmatpush1.msra.mxu0 0.0
    %4123 = vmatprep.subr.mxu0 0.0
    %4124 = vmatpush1.msra.mxu0 0.0
    %4125 = vmatprep.subr.mxu0 0.0
    %4126 = vmatpush1.msra.mxu0 0.0
    %4127 = vmatprep.subr.mxu0 0.0
    %4128 = vmatpush1.msra.mxu0 0.0
    %4129 = vmatprep.subr.mxu0 0.0
    %4130 = vmatpush1.msra.mxu0 0.0
    %4131 = vmatprep.subr.mxu0 0.0
    %4132 = vmatpush1.msra.mxu0 0.0
    %4133 = vmatprep.subr.mxu0 0.0
    %4134 = vmatpush1.msra.mxu0 0.0
    %4135 = vmatprep.subr.mxu0 0.0
    %4136 = vmatpush1.msra.mxu0 0.0
    %4137 = vmatprep.subr.mxu0 0.0
    %4138 = vmatpush1.msra.mxu0 0.0
    %4139 = vmatprep.subr.mxu0 0.0
    %4140 = vmatpush1.msra.mxu0 0.0
    %4141 = vmatprep.subr.mxu0 0.0
    %4142 = vmatpush1.msra.mxu0 0.0
    %4143 = vmatprep.mubr.f32.mxu0 0.0
    %4144 = vmatmul.mubr.f32.gmra.mrb[0].mxu0 %v4077
    %v4145 = vpop.f32.mrb[0].mxu0
    %v4146 = vadd.f32 %v4074, %v4145
    %v4147 = vpop.f32.mrb[0].mxu0
    %4148 = vdwg.mxu0
    %v4149 = vsel %vm650, %v4146, 0.0
    %4150 = vst [vmem:[%s2] sm:$0xff] %v4149
    // Predicated region
    $region14: #{affinity_forward.1} parent=1 // pred_check
      _
    $region15: #{affinity_forward.1} parent=1 // pred_check_branch
      %4152 = sbr.rel (0) target = $region17
    $region16: #{affinity_forward.1} parent=1 // pred_region
      _
    $region17: #{affinity_forward.1} parent=1 // pred_fallthru
      _
    // Predicated region
    $region18: #{affinity_forward.1} parent=1 // pred_check
      _
    $region19: #{affinity_forward.1} parent=1 // pred_check_branch
      %4154 = sbr.rel (0) target = $region21
    $region20: #{affinity_forward.1} parent=1 // pred_region
      _
    $region21: #{affinity_forward.1} parent=1 // pred_fallthru
      _
    %4155 = vsyncpa [#allocation3], 1

</llo_original>
